<compile_context>
chip_gen: v7x
topology: tpu7x:2x2x1
jax: 0.10.0
libtpu: 0.0.40
codegen_flags: <defaults>
</compile_context>

<pallas_src>
import functools
import math
from typing import NamedTuple

import jax
import jax.numpy as jnp
from jax import lax
from jax.experimental import pallas as pl
from jax.experimental.pallas import tpu as pltpu

EPS = 1e-5
_LANE = 128
_SUBLANE = 8


def _round_up(x: int, m: int) -> int:
    return ((x + m - 1) // m) * m


def _pad2(a, rows, cols):
    pr, pc = rows - a.shape[0], cols - a.shape[1]
    if pr == 0 and pc == 0:
        return a
    return jnp.pad(a, ((0, pr), (0, pc)))


def _vmem_budget_bytes() -> int:
    """Generation-aware VMEM budget (85% of capacity, headroom for compiler)."""
    try:
        cap = int(pltpu.get_tpu_info().vmem_capacity_bytes)
    except Exception:                      # query unavailable -> assume v7x per-TC
        cap = 64 * 1024 * 1024
    return int(cap * 0.85)


# --------------------------------------------------------------------------- #
# Kernel
# --------------------------------------------------------------------------- #
def _projection_kernel(x_ref, w1_ref, w2_ref, gamma_ref, beta_ref, o_ref,
                       e1_acc, *, d_out_true: int, approximate_gelu: bool):
    k = pl.program_id(1)

    @pl.when(k == 0)
    def _():
        e1_acc[...] = jnp.zeros_like(e1_acc)

    # Partial product of embed1 = x @ W1^T for this K slab.
    # Native-dtype (bf16) MXU path, f32 accumulation.
    e1_acc[...] += jnp.dot(x_ref[...], w1_ref[...],
                           preferred_element_type=jnp.float32)

    @pl.when(k == pl.num_programs(1) - 1)
    def _():
        e1 = e1_acc[...]                                   # [bb, d_out_p] f32

        if approximate_gelu:
            # tanh approximation -> transcendental on the EUP slot.
            g = jax.nn.gelu(e1, approximate=True)
        else:
            # erf-based GELU matches torch.nn.functional.gelu default numerics.
            g = 0.5 * e1 * (1.0 + lax.erf(e1 * (1.0 / math.sqrt(2.0))))

        # embed2 = gelu(embed1) @ W2^T ; dropout is identity in eval mode.
        # TODO(synk): training-mode dropout (p=0.5) needs pltpu.prng_* masking.
        e2 = jnp.dot(g.astype(w2_ref.dtype), w2_ref[...],
                     preferred_element_type=jnp.float32)

        s = e1 + e2            # padded feature columns are exactly 0

        # LayerNorm over the TRUE feature width.  Centered (two-pass) variance;
        # each zero-padded column contributes exactly (-mu)^2 to the centered
        # sum, removed with a scalar per-row correction (no full-tile mask).
        d_out_p = s.shape[-1]
        inv_n = 1.0 / float(d_out_true)
        n_pad = float(d_out_p - d_out_true)
        mu = jnp.sum(s, axis=-1, keepdims=True) * inv_n
        c = s - mu
        var = (jnp.sum(c * c, axis=-1, keepdims=True) - n_pad * (mu * mu)) * inv_n
        var = jnp.maximum(var, 0.0)
        normed = c * lax.rsqrt(var + EPS)

        # gamma/beta are pre-padded with zeros and pre-cast to f32, so padded
        # output columns come out exactly 0.
        o_ref[...] = (normed * gamma_ref[...] + beta_ref[...]).astype(o_ref.dtype)


# --------------------------------------------------------------------------- #
# Parameter preparation (hoisted out of the per-call path)
# --------------------------------------------------------------------------- #
class ProjectionParams(NamedTuple):
    w1_p: jax.Array     # [d_in_p,  d_out_p]  zero-padded
    w2_p: jax.Array     # [d_out_p, d_out_p]  zero-padded
    gamma_p: jax.Array  # [1, d_out_p] float32, zero-padded
    beta_p: jax.Array   # [1, d_out_p] float32, zero-padded
    d_in: int
    d_out: int


def prepare_projection_params(w1_t, w2_t, gamma, beta) -> ProjectionParams:
    """Pad weights once (zero padding keeps LayerNorm stats over d_out exact)
    and cast the affine params to f32 once."""
    d_in, d_out = w1_t.shape
    d_in_p = _round_up(d_in, _LANE)
    d_out_p = _round_up(d_out, _LANE)
    return ProjectionParams(
        w1_p=_pad2(w1_t, d_in_p, d_out_p),
        w2_p=_pad2(w2_t, d_out_p, d_out_p),
        gamma_p=_pad2(gamma, 1, d_out_p).astype(jnp.float32),
        beta_p=_pad2(beta, 1, d_out_p).astype(jnp.float32),
        d_in=d_in, d_out=d_out)


# --------------------------------------------------------------------------- #
# Forward wrapper
# --------------------------------------------------------------------------- #
def projection_forward(x, params: ProjectionParams, *, block_b=None,
                       approximate_gelu: bool = False):
    """x: [B, d_in]; params from prepare_projection_params. Returns [B, d_out]."""
    B, d_in = x.shape
    assert d_in == params.d_in, (d_in, params.d_in)
    d_out = params.d_out
    d_in_p, d_out_p = params.w1_p.shape
    itemsize = jnp.dtype(x.dtype).itemsize

    # x feature padding only when d_in is not lane-aligned (no copy otherwise);
    # the batch dimension is never padded (ragged last block handled by Pallas).
    x_p = x if d_in == d_in_p else jnp.pad(x, ((0, 0), (0, d_in_p - d_in)))

    # ---------------- VMEM planning (fails loudly, no silent clamp) ----------
    budget = _vmem_budget_bytes()
    # Grid-invariant residents, counted double-buffered so the plan stays valid
    # even if the single-buffer hint is unavailable.
    fixed = 2 * d_out_p * d_out_p * itemsize + 2 * 2 * d_out_p * 4
    if fixed >= budget:
        raise ValueError(
            f"Projection: w2 ({d_out}x{d_out}, padded {d_out_p}) does not fit the "
            f"VMEM budget ({budget} bytes). "
            "TODO(synk): stream w2 in (tk, d_out) slabs for very large d_out.")
    avail = budget - fixed

    # K slab for w1: largest 128-multiple divisor of d_in_p whose double-buffered
    # slab uses at most ~60% of what is left (rest for batch tiles/accumulator).
    block_k = _LANE
    n128 = d_in_p // _LANE
    for div in range(1, n128 + 1):
        if n128 % div:
            continue
        bk = d_in_p // div
        if 2 * bk * d_out_p * itemsize <= 0.6 * avail:
            block_k = bk
            break
    w1_bytes = 2 * block_k * d_out_p * itemsize

    # Per-batch-row footprint: x/out tiles (double-buffered), f32 accumulator,
    # slack for the f32 temporaries of the finalize step.
    per_row = (2 * block_k * itemsize + 2 * d_out_p * itemsize
               + d_out_p * 4 + 5 * d_out_p * 4)
    max_b = int((avail - w1_bytes) // per_row) // _SUBLANE * _SUBLANE
    if max_b < _SUBLANE:
        raise ValueError(
            f"Projection: no batch tile fits VMEM (budget={budget} bytes, "
            f"d_in={d_in}, d_out={d_out}); w2 N-tiling would be required.")

    # Batch tile: 256-row MXU passes on v6e/v7x; keep the batch grid >= 2 for
    # modest B so both v7x TensorCores have work.
    if block_b is None:
        if B >= 512:
            block_b = 256
        else:
            block_b = min(256, max(_SUBLANE, _round_up(pl.cdiv(B, 2), _SUBLANE)))
    block_b = max(_SUBLANE, _round_up(block_b, _SUBLANE))
    block_b = min(block_b, max_b, _round_up(B, _SUBLANE))

    grid = (pl.cdiv(B, block_b), d_in_p // block_k)
    k_tiled = grid[1] > 1

    est = fixed + w1_bytes + block_b * per_row
    vmem_limit = int(min(max(int(est * 1.5), 32 * 1024 * 1024), budget))

    flops = 2 * B * d_in * d_out + 2 * B * d_out * d_out + 10 * B * d_out
    bytes_accessed = ((B * d_in_p + B * d_out_p) * itemsize
                      + (d_in_p * d_out_p + d_out_p * d_out_p) * itemsize
                      + 2 * d_out_p * 4)
    cost = pl.CostEstimate(flops=flops, transcendentals=B * d_out,
                           bytes_accessed=bytes_accessed)

    kernel = functools.partial(_projection_kernel, d_out_true=d_out,
                               approximate_gelu=approximate_gelu)

    def build(single_buffer_invariants: bool):
        def spec(shape, index_map, invariant):
            if invariant and single_buffer_invariants:
                return pl.BlockSpec(shape, index_map,
                                    pipeline_mode=pl.Buffered(1))
            return pl.BlockSpec(shape, index_map)

        return pl.pallas_call(
            kernel,
            out_shape=jax.ShapeDtypeStruct((B, d_out_p), x.dtype),
            grid_spec=pltpu.PrefetchScalarGridSpec(
                num_scalar_prefetch=0,
                grid=grid,
                in_specs=[
                    spec((block_b, block_k), lambda i, k: (i, k), False),
                    spec((block_k, d_out_p), lambda i, k: (k, 0), not k_tiled),
                    spec((d_out_p, d_out_p), lambda i, k: (0, 0), True),
                    spec((1, d_out_p), lambda i, k: (0, 0), True),
                    spec((1, d_out_p), lambda i, k: (0, 0), True),
                ],
                out_specs=pl.BlockSpec((block_b, d_out_p), lambda i, k: (i, 0)),
                scratch_shapes=[pltpu.VMEM((block_b, d_out_p), jnp.float32)]),
            compiler_params=pltpu.CompilerParams(
                dimension_semantics=("parallel", "arbitrary"),
                vmem_limit_bytes=vmem_limit),
            cost_estimate=cost,
        )

    args = (x_p, params.w1_p, params.w2_p, params.gamma_p, params.beta_p)
    try:
        out_p = build(True)(*args)
    except Exception:  # Buffered(1) hint unsupported -> default double-buffering
        out_p = build(False)(*args)

    return out_p if d_out == d_out_p else out_p[:, :d_out]


# --------------------------------------------------------------------------- #
# Demo / correctness check
# --------------------------------------------------------------------------- #
def init_projection_params(key, d_in, d_out, dtype=jnp.float32):
    """Deterministic synthetic params mimicking nn.Linear / nn.LayerNorm shapes."""
    k1, k2 = jax.random.split(key)
    bound1 = 1.0 / math.sqrt(d_in)
    bound2 = 1.0 / math.sqrt(d_out)
    # Stored pre-transposed: torch weight is [d_out, d_in]; we keep [d_in, d_out].
    w1_t = jax.random.uniform(k1, (d_in, d_out), jnp.float32,
                              -bound1, bound1).astype(dtype)
    w2_t = jax.random.uniform(k2, (d_out, d_out), jnp.float32,
                              -bound2, bound2).astype(dtype)
    gamma = jnp.ones((1, d_out), dtype)   # LayerNorm weight
    beta = jnp.zeros((1, d_out), dtype)   # LayerNorm bias
    return w1_t, w2_t, gamma, beta


def _reference(x, w1_t, w2_t, gamma, beta):
    e1 = x @ w1_t
    g = 0.5 * e1 * (1.0 + lax.erf(e1 / jnp.sqrt(2.0)))
    e2 = g @ w2_t
    s = e1 + e2
    mu = jnp.mean(s, -1, keepdims=True)
    var = jnp.mean((s - mu) ** 2, -1, keepdims=True)
    return (s - mu) * lax.rsqrt(var + EPS) * gamma + beta


if __name__ == "__main__":
    B, d_in, d_out = 256, 128, 256
    dtype = jnp.bfloat16  # native MXU fast path; f32 accumulation in-kernel

    key = jax.random.PRNGKey(0)
    kx, kp = jax.random.split(key)
    x = jax.random.normal(kx, (B, d_in), jnp.float32).astype(dtype)
    w1_t, w2_t, gamma, beta = init_projection_params(kp, d_in, d_out, dtype)

    # Padding / f32 casts hoisted out of the forward path: runs exactly once.
    params = prepare_projection_params(w1_t, w2_t, gamma, beta)

    out = projection_forward(x, params)
    out = jax.block_until_ready(out)

    # f32 reference on the same (bf16-valued) inputs; tolerance covers the bf16
    # re-cast of the GELU activations and the bf16 output rounding.
    ref = _reference(x.astype(jnp.float32), w1_t.astype(jnp.float32),
                     w2_t.astype(jnp.float32), gamma.astype(jnp.float32),
                     beta.astype(jnp.float32))
    assert out.shape == (B, d_out)
    err = float(jnp.max(jnp.abs(out.astype(jnp.float32) - ref)))
    assert jnp.allclose(out.astype(jnp.float32), ref, atol=5e-2, rtol=5e-2), err
    print("KERNEL_OK")
</pallas_src>

<mosaic_0001>
module attributes {stable_mosaic.version = 11 : i64} {
  func.func @_projection_kernel(%arg0: i32, %arg1: i32, %arg2: memref<128x128xbf16, #tpu.memory_space<vmem>>, %arg3: memref<128x256xbf16, #tpu.memory_space<vmem>>, %arg4: memref<256x256xbf16, #tpu.memory_space<vmem>>, %arg5: memref<1x256xf32, #tpu.memory_space<vmem>>, %arg6: memref<1x256xf32, #tpu.memory_space<vmem>>, %arg7: memref<128x256xbf16, #tpu.memory_space<vmem>>, %arg8: memref<128x256xf32, #tpu.memory_space<vmem>>) attributes {dimension_semantics = [#tpu.dimension_semantics<parallel>, #tpu.dimension_semantics<arbitrary>], iteration_bounds = array<i64: 2, 1>, scalar_prefetch = 0 : i64, scratch_operands = 1 : i64, tpu.core_type = #tpu.core_type<tc>, window_params = [{transform_indices = @transform_0, window_bounds = array<i64: 128, 128>}, {pipeline_mode = #tpu.pipeline_mode<synchronous>, transform_indices = @transform_1, window_bounds = array<i64: 128, 256>}, {pipeline_mode = #tpu.pipeline_mode<synchronous>, transform_indices = @transform_2, window_bounds = array<i64: 256, 256>}, {pipeline_mode = #tpu.pipeline_mode<synchronous>, transform_indices = @transform_3, window_bounds = array<i64: 1, 256>}, {pipeline_mode = #tpu.pipeline_mode<synchronous>, transform_indices = @transform_4, window_bounds = array<i64: 1, 256>}, {transform_indices = @transform_5, window_bounds = array<i64: 128, 256>}]} {
    %c0_i32 = arith.constant 0 : i32
    %0 = arith.cmpi eq, %arg1, %c0_i32 : i32
    %1 = arith.extui %0 : i1 to i32
    %c0_i32_0 = arith.constant 0 : i32
    %2 = arith.cmpi ne, %1, %c0_i32_0 : i32
    scf.if %2 {
      %cst_10 = arith.constant 0.000000e+00 : f32
      %12 = vector.broadcast %cst_10 : f32 to vector<128x256xf32>
      %c0_11 = arith.constant 0 : index
      %c0_12 = arith.constant 0 : index
      %13 = vector.load %arg8[%c0_11, %c0_12] : memref<128x256xf32, #tpu.memory_space<vmem>>, vector<128x256xf32>
      tpu.vector_store %arg8[%c0_11, %c0_12], %12 {strides = array<i32>} : memref<128x256xf32, #tpu.memory_space<vmem>>, vector<128x256xf32>,
    } else {
    }
    %c0 = arith.constant 0 : index
    %c0_1 = arith.constant 0 : index
    %3 = vector.load %arg8[%c0, %c0_1] : memref<128x256xf32, #tpu.memory_space<vmem>>, vector<128x256xf32>
    %c0_2 = arith.constant 0 : index
    %c0_3 = arith.constant 0 : index
    %4 = vector.load %arg2[%c0_2, %c0_3] : memref<128x128xbf16, #tpu.memory_space<vmem>>, vector<128x128xbf16>
    %c0_4 = arith.constant 0 : index
    %c0_5 = arith.constant 0 : index
    %5 = vector.load %arg3[%c0_4, %c0_5] : memref<128x256xbf16, #tpu.memory_space<vmem>>, vector<128x256xbf16>
    %cst = arith.constant dense<0.000000e+00> : vector<128x256xf32>
    %6 = tpu.matmul %4, %5, %cst {dimension_numbers = #tpu.dot_dimension_numbers<[1], [0], [0], [1], [0, 0, 1, 1], [], []>} : vector<128x128xbf16>, vector<128x256xbf16>, vector<128x256xf32> -> vector<128x256xf32>
    %7 = arith.addf %3, %6 : vector<128x256xf32>
    %c0_6 = arith.constant 0 : index
    %c0_7 = arith.constant 0 : index
    %8 = vector.load %arg8[%c0_6, %c0_7] : memref<128x256xf32, #tpu.memory_space<vmem>>, vector<128x256xf32>
    tpu.vector_store %arg8[%c0_6, %c0_7], %7 {strides = array<i32>} : memref<128x256xf32, #tpu.memory_space<vmem>>, vector<128x256xf32>,
    %c0_i32_8 = arith.constant 0 : i32
    %9 = arith.cmpi eq, %arg1, %c0_i32_8 : i32
    %10 = arith.extui %9 : i1 to i32
    %c0_i32_9 = arith.constant 0 : i32
    %11 = arith.cmpi ne, %10, %c0_i32_9 : i32
    scf.if %11 {
      %c0_10 = arith.constant 0 : index
      %c0_11 = arith.constant 0 : index
      %12 = vector.load %arg8[%c0_10, %c0_11] : memref<128x256xf32, #tpu.memory_space<vmem>>, vector<128x256xf32>
      %cst_12 = arith.constant 5.000000e-01 : f32
      %13 = vector.broadcast %cst_12 : f32 to vector<128x256xf32>
      %14 = arith.mulf %13, %12 : vector<128x256xf32>
      %cst_13 = arith.constant 0.707106769 : f32
      %15 = vector.broadcast %cst_13 : f32 to vector<128x256xf32>
      %16 = arith.mulf %12, %15 : vector<128x256xf32>
      %17 = math.erf %16 : vector<128x256xf32>
      %cst_14 = arith.constant 1.000000e+00 : f32
      %18 = vector.broadcast %cst_14 : f32 to vector<128x256xf32>
      %19 = arith.addf %18, %17 : vector<128x256xf32>
      %20 = arith.mulf %14, %19 : vector<128x256xf32>
      %21 = arith.truncf %20 : vector<128x256xf32> to vector<128x256xbf16>
      %c0_15 = arith.constant 0 : index
      %c0_16 = arith.constant 0 : index
      %22 = vector.load %arg4[%c0_15, %c0_16] : memref<256x256xbf16, #tpu.memory_space<vmem>>, vector<256x256xbf16>
      %cst_17 = arith.constant dense<0.000000e+00> : vector<128x256xf32>
      %23 = tpu.matmul %21, %22, %cst_17 {dimension_numbers = #tpu.dot_dimension_numbers<[1], [0], [0], [1], [0, 0, 1, 1], [], []>} : vector<128x256xbf16>, vector<256x256xbf16>, vector<128x256xf32> -> vector<128x256xf32>
      %24 = arith.addf %12, %23 : vector<128x256xf32>
      %cst_18 = arith.constant dense<0.000000e+00> : vector<128xf32>
      %25 = vector.multi_reduction <add>, %24, %cst_18 [1] : vector<128x256xf32> to vector<128xf32>
      %26 = vector.shape_cast %25 : vector<128xf32> to vector<128x1xf32>
      %cst_19 = arith.constant 3.906250e-03 : f32
      %27 = vector.broadcast %cst_19 : f32 to vector<128x1xf32>
      %28 = arith.mulf %26, %27 : vector<128x1xf32>
      %29 = vector.broadcast %28 : vector<128x1xf32> to vector<128x256xf32>
      %30 = arith.subf %24, %29 : vector<128x256xf32>
      %31 = arith.mulf %30, %30 : vector<128x256xf32>
      %cst_20 = arith.constant dense<0.000000e+00> : vector<128xf32>
      %32 = vector.multi_reduction <add>, %31, %cst_20 [1] : vector<128x256xf32> to vector<128xf32>
      %33 = vector.shape_cast %32 : vector<128xf32> to vector<128x1xf32>
      %34 = arith.mulf %28, %28 : vector<128x1xf32>
      %cst_21 = arith.constant 0.000000e+00 : f32
      %35 = vector.broadcast %cst_21 : f32 to vector<128x1xf32>
      %36 = arith.mulf %35, %34 : vector<128x1xf32>
      %37 = arith.subf %33, %36 : vector<128x1xf32>
      %cst_22 = arith.constant 3.906250e-03 : f32
      %38 = vector.broadcast %cst_22 : f32 to vector<128x1xf32>
      %39 = arith.mulf %37, %38 : vector<128x1xf32>
      %cst_23 = arith.constant 0.000000e+00 : f32
      %40 = vector.broadcast %cst_23 : f32 to vector<128x1xf32>
      %41 = arith.maximumf %39, %40 : vector<128x1xf32>
      %cst_24 = arith.constant 9.99999974E-6 : f32
      %42 = vector.broadcast %cst_24 : f32 to vector<128x1xf32>
      %43 = arith.addf %41, %42 : vector<128x1xf32>
      %44 = math.rsqrt %43 : vector<128x1xf32>
      %45 = vector.broadcast %44 : vector<128x1xf32> to vector<128x256xf32>
      %46 = arith.mulf %30, %45 : vector<128x256xf32>
      %c0_25 = arith.constant 0 : index
      %c0_26 = arith.constant 0 : index
      %47 = vector.load %arg5[%c0_25, %c0_26] : memref<1x256xf32, #tpu.memory_space<vmem>>, vector<1x256xf32>
      %48 = vector.broadcast %47 : vector<1x256xf32> to vector<128x256xf32>
      %49 = arith.mulf %46, %48 : vector<128x256xf32>
      %c0_27 = arith.constant 0 : index
      %c0_28 = arith.constant 0 : index
      %50 = vector.load %arg6[%c0_27, %c0_28] : memref<1x256xf32, #tpu.memory_space<vmem>>, vector<1x256xf32>
      %51 = vector.broadcast %50 : vector<1x256xf32> to vector<128x256xf32>
      %52 = arith.addf %49, %51 : vector<128x256xf32>
      %53 = arith.truncf %52 : vector<128x256xf32> to vector<128x256xbf16>
      %c0_29 = arith.constant 0 : index
      %c0_30 = arith.constant 0 : index
      %54 = vector.load %arg7[%c0_29, %c0_30] : memref<128x256xbf16, #tpu.memory_space<vmem>>, vector<128x256xbf16>
      tpu.vector_store %arg7[%c0_29, %c0_30], %53 {strides = array<i32>} : memref<128x256xbf16, #tpu.memory_space<vmem>>, vector<128x256xbf16>,
    } else {
    }
    return
  }
  func.func @transform_0(%arg0: i32, %arg1: i32) -> (i32, i32) {
    %c0_i32 = arith.constant 0 : i32
    return %arg0, %arg1 : i32, i32
  }
  func.func @transform_1(%arg0: i32, %arg1: i32) -> (i32, i32) {
    %c0_i32 = arith.constant 0 : i32
    %c0_i32_0 = arith.constant 0 : i32
    return %arg1, %c0_i32 : i32, i32
  }
  func.func @transform_2(%arg0: i32, %arg1: i32) -> (i32, i32) {
    %c0_i32 = arith.constant 0 : i32
    %c0_i32_0 = arith.constant 0 : i32
    %c0_i32_1 = arith.constant 0 : i32
    return %c0_i32, %c0_i32_0 : i32, i32
  }
  func.func @transform_3(%arg0: i32, %arg1: i32) -> (i32, i32) {
    %c0_i32 = arith.constant 0 : i32
    %c0_i32_0 = arith.constant 0 : i32
    %c0_i32_1 = arith.constant 0 : i32
    return %c0_i32, %c0_i32_0 : i32, i32
  }
  func.func @transform_4(%arg0: i32, %arg1: i32) -> (i32, i32) {
    %c0_i32 = arith.constant 0 : i32
    %c0_i32_0 = arith.constant 0 : i32
    %c0_i32_1 = arith.constant 0 : i32
    return %c0_i32, %c0_i32_0 : i32, i32
  }
  func.func @transform_5(%arg0: i32, %arg1: i32) -> (i32, i32) {
    %c0_i32 = arith.constant 0 : i32
    %c0_i32_0 = arith.constant 0 : i32
    return %arg0, %c0_i32 : i32, i32
  }
}

module attributes {stable_mosaic.version = 11 : i64} {
  func.func @_projection_kernel(%arg0: i32, %arg1: i32, %arg2: memref<128x128xbf16, #tpu.memory_space<vmem>>, %arg3: memref<128x256xbf16, #tpu.memory_space<vmem>>, %arg4: memref<256x256xbf16, #tpu.memory_space<vmem>>, %arg5: memref<1x256xf32, #tpu.memory_space<vmem>>, %arg6: memref<1x256xf32, #tpu.memory_space<vmem>>, %arg7: memref<128x256xbf16, #tpu.memory_space<vmem>>, %arg8: memref<128x256xf32, #tpu.memory_space<vmem>>) attributes {dimension_semantics = [#tpu.dimension_semantics<parallel>, #tpu.dimension_semantics<arbitrary>], iteration_bounds = array<i64: 2, 1>, scalar_prefetch = 0 : i64, scratch_operands = 1 : i64, tpu.core_type = #tpu.core_type<tc>, window_params = [{transform_indices = @transform_0, window_bounds = array<i64: 128, 128>}, {transform_indices = @transform_1, window_bounds = array<i64: 128, 256>}, {pipeline_mode = #tpu.pipeline_mode<synchronous>, transform_indices = @transform_2, window_bounds = array<i64: 256, 256>}, {pipeline_mode = #tpu.pipeline_mode<synchronous>, transform_indices = @transform_3, window_bounds = array<i64: 1, 256>}, {pipeline_mode = #tpu.pipeline_mode<synchronous>, transform_indices = @transform_4, window_bounds = array<i64: 1, 256>}, {transform_indices = @transform_5, window_bounds = array<i64: 128, 256>}]} {
    %c0_i32 = arith.constant 0 : i32
    %0 = arith.cmpi eq, %arg1, %c0_i32 : i32
    %1 = arith.extui %0 : i1 to i32
    %c0_i32_0 = arith.constant 0 : i32
    %2 = arith.cmpi ne, %1, %c0_i32_0 : i32
    scf.if %2 {
      %cst_10 = arith.constant 0.000000e+00 : f32
      %12 = vector.broadcast %cst_10 : f32 to vector<128x256xf32>
      %c0_11 = arith.constant 0 : index
      %c0_12 = arith.constant 0 : index
      %13 = vector.load %arg8[%c0_11, %c0_12] : memref<128x256xf32, #tpu.memory_space<vmem>>, vector<128x256xf32>
      tpu.vector_store %arg8[%c0_11, %c0_12], %12 {strides = array<i32>} : memref<128x256xf32, #tpu.memory_space<vmem>>, vector<128x256xf32>,
    } else {
    }
    %c0 = arith.constant 0 : index
    %c0_1 = arith.constant 0 : index
    %3 = vector.load %arg8[%c0, %c0_1] : memref<128x256xf32, #tpu.memory_space<vmem>>, vector<128x256xf32>
    %c0_2 = arith.constant 0 : index
    %c0_3 = arith.constant 0 : index
    %4 = vector.load %arg2[%c0_2, %c0_3] : memref<128x128xbf16, #tpu.memory_space<vmem>>, vector<128x128xbf16>
    %c0_4 = arith.constant 0 : index
    %c0_5 = arith.constant 0 : index
    %5 = vector.load %arg3[%c0_4, %c0_5] : memref<128x256xbf16, #tpu.memory_space<vmem>>, vector<128x256xbf16>
    %cst = arith.constant dense<0.000000e+00> : vector<128x256xf32>
    %6 = tpu.matmul %4, %5, %cst {dimension_numbers = #tpu.dot_dimension_numbers<[1], [0], [0], [1], [0, 0, 1, 1], [], []>} : vector<128x128xbf16>, vector<128x256xbf16>, vector<128x256xf32> -> vector<128x256xf32>
    %7 = arith.addf %3, %6 : vector<128x256xf32>
    %c0_6 = arith.constant 0 : index
    %c0_7 = arith.constant 0 : index
    %8 = vector.load %arg8[%c0_6, %c0_7] : memref<128x256xf32, #tpu.memory_space<vmem>>, vector<128x256xf32>
    tpu.vector_store %arg8[%c0_6, %c0_7], %7 {strides = array<i32>} : memref<128x256xf32, #tpu.memory_space<vmem>>, vector<128x256xf32>,
    %c0_i32_8 = arith.constant 0 : i32
    %9 = arith.cmpi eq, %arg1, %c0_i32_8 : i32
    %10 = arith.extui %9 : i1 to i32
    %c0_i32_9 = arith.constant 0 : i32
    %11 = arith.cmpi ne, %10, %c0_i32_9 : i32
    scf.if %11 {
      %c0_10 = arith.constant 0 : index
      %c0_11 = arith.constant 0 : index
      %12 = vector.load %arg8[%c0_10, %c0_11] : memref<128x256xf32, #tpu.memory_space<vmem>>, vector<128x256xf32>
      %cst_12 = arith.constant 5.000000e-01 : f32
      %13 = vector.broadcast %cst_12 : f32 to vector<128x256xf32>
      %14 = arith.mulf %13, %12 : vector<128x256xf32>
      %cst_13 = arith.constant 0.707106769 : f32
      %15 = vector.broadcast %cst_13 : f32 to vector<128x256xf32>
      %16 = arith.mulf %12, %15 : vector<128x256xf32>
      %17 = math.erf %16 : vector<128x256xf32>
      %cst_14 = arith.constant 1.000000e+00 : f32
      %18 = vector.broadcast %cst_14 : f32 to vector<128x256xf32>
      %19 = arith.addf %18, %17 : vector<128x256xf32>
      %20 = arith.mulf %14, %19 : vector<128x256xf32>
      %21 = arith.truncf %20 : vector<128x256xf32> to vector<128x256xbf16>
      %c0_15 = arith.constant 0 : index
      %c0_16 = arith.constant 0 : index
      %22 = vector.load %arg4[%c0_15, %c0_16] : memref<256x256xbf16, #tpu.memory_space<vmem>>, vector<256x256xbf16>
      %cst_17 = arith.constant dense<0.000000e+00> : vector<128x256xf32>
      %23 = tpu.matmul %21, %22, %cst_17 {dimension_numbers = #tpu.dot_dimension_numbers<[1], [0], [0], [1], [0, 0, 1, 1], [], []>} : vector<128x256xbf16>, vector<256x256xbf16>, vector<128x256xf32> -> vector<128x256xf32>
      %24 = arith.addf %12, %23 : vector<128x256xf32>
      %cst_18 = arith.constant dense<0.000000e+00> : vector<128xf32>
      %25 = vector.multi_reduction <add>, %24, %cst_18 [1] : vector<128x256xf32> to vector<128xf32>
      %26 = vector.shape_cast %25 : vector<128xf32> to vector<128x1xf32>
      %cst_19 = arith.constant 3.906250e-03 : f32
      %27 = vector.broadcast %cst_19 : f32 to vector<128x1xf32>
      %28 = arith.mulf %26, %27 : vector<128x1xf32>
      %29 = vector.broadcast %28 : vector<128x1xf32> to vector<128x256xf32>
      %30 = arith.subf %24, %29 : vector<128x256xf32>
      %31 = arith.mulf %30, %30 : vector<128x256xf32>
      %cst_20 = arith.constant dense<0.000000e+00> : vector<128xf32>
      %32 = vector.multi_reduction <add>, %31, %cst_20 [1] : vector<128x256xf32> to vector<128xf32>
      %33 = vector.shape_cast %32 : vector<128xf32> to vector<128x1xf32>
      %34 = arith.mulf %28, %28 : vector<128x1xf32>
      %cst_21 = arith.constant 0.000000e+00 : f32
      %35 = vector.broadcast %cst_21 : f32 to vector<128x1xf32>
      %36 = arith.mulf %35, %34 : vector<128x1xf32>
      %37 = arith.subf %33, %36 : vector<128x1xf32>
      %cst_22 = arith.constant 3.906250e-03 : f32
      %38 = vector.broadcast %cst_22 : f32 to vector<128x1xf32>
      %39 = arith.mulf %37, %38 : vector<128x1xf32>
      %cst_23 = arith.constant 0.000000e+00 : f32
      %40 = vector.broadcast %cst_23 : f32 to vector<128x1xf32>
      %41 = arith.maximumf %39, %40 : vector<128x1xf32>
      %cst_24 = arith.constant 9.99999974E-6 : f32
      %42 = vector.broadcast %cst_24 : f32 to vector<128x1xf32>
      %43 = arith.addf %41, %42 : vector<128x1xf32>
      %44 = math.rsqrt %43 : vector<128x1xf32>
      %45 = vector.broadcast %44 : vector<128x1xf32> to vector<128x256xf32>
      %46 = arith.mulf %30, %45 : vector<128x256xf32>
      %c0_25 = arith.constant 0 : index
      %c0_26 = arith.constant 0 : index
      %47 = vector.load %arg5[%c0_25, %c0_26] : memref<1x256xf32, #tpu.memory_space<vmem>>, vector<1x256xf32>
      %48 = vector.broadcast %47 : vector<1x256xf32> to vector<128x256xf32>
      %49 = arith.mulf %46, %48 : vector<128x256xf32>
      %c0_27 = arith.constant 0 : index
      %c0_28 = arith.constant 0 : index
      %50 = vector.load %arg6[%c0_27, %c0_28] : memref<1x256xf32, #tpu.memory_space<vmem>>, vector<1x256xf32>
      %51 = vector.broadcast %50 : vector<1x256xf32> to vector<128x256xf32>
      %52 = arith.addf %49, %51 : vector<128x256xf32>
      %53 = arith.truncf %52 : vector<128x256xf32> to vector<128x256xbf16>
      %c0_29 = arith.constant 0 : index
      %c0_30 = arith.constant 0 : index
      %54 = vector.load %arg7[%c0_29, %c0_30] : memref<128x256xbf16, #tpu.memory_space<vmem>>, vector<128x256xbf16>
      tpu.vector_store %arg7[%c0_29, %c0_30], %53 {strides = array<i32>} : memref<128x256xbf16, #tpu.memory_space<vmem>>, vector<128x256xbf16>,
    } else {
    }
    return
  }
  func.func @transform_0(%arg0: i32, %arg1: i32) -> (i32, i32) {
    %c0_i32 = arith.constant 0 : i32
    return %arg0, %arg1 : i32, i32
  }
  func.func @transform_1(%arg0: i32, %arg1: i32) -> (i32, i32) {
    %c0_i32 = arith.constant 0 : i32
    %c0_i32_0 = arith.constant 0 : i32
    return %arg1, %c0_i32 : i32, i32
  }
  func.func @transform_2(%arg0: i32, %arg1: i32) -> (i32, i32) {
    %c0_i32 = arith.constant 0 : i32
    %c0_i32_0 = arith.constant 0 : i32
    %c0_i32_1 = arith.constant 0 : i32
    return %c0_i32, %c0_i32_0 : i32, i32
  }
  func.func @transform_3(%arg0: i32, %arg1: i32) -> (i32, i32) {
    %c0_i32 = arith.constant 0 : i32
    %c0_i32_0 = arith.constant 0 : i32
    %c0_i32_1 = arith.constant 0 : i32
    return %c0_i32, %c0_i32_0 : i32, i32
  }
  func.func @transform_4(%arg0: i32, %arg1: i32) -> (i32, i32) {
    %c0_i32 = arith.constant 0 : i32
    %c0_i32_0 = arith.constant 0 : i32
    %c0_i32_1 = arith.constant 0 : i32
    return %c0_i32, %c0_i32_0 : i32, i32
  }
  func.func @transform_5(%arg0: i32, %arg1: i32) -> (i32, i32) {
    %c0_i32 = arith.constant 0 : i32
    %c0_i32_0 = arith.constant 0 : i32
    return %arg0, %c0_i32 : i32, i32
  }
}

</mosaic_0001>

<llo_original>
// kernel: tpu_custom_call.1
$region0: #{tpu_custom_call.1}
  #allocation0 [shape = 'u32[]', space=smem, size = 0x4, offset = 0x4, fixed_abs, tag = 'smem constant byte address 0x4 - core index']
  #allocation1 [shape = 'u32[144,128]{1,0:T(1,128)}', space=vmem, size = 0x12000, scoped, tag = 'internal scratch']
  #allocation2 [shape = 'f32[128,256]{1,0:T(8,128)}', space=vmem, size = 0x20000, scoped, tag = 'scratch operand']
  %s0 = inlined_call_operand.hbm [shape: bf16[256,128], index: 0, kind: input, shape index: {}]
  %s1 = inlined_call_operand.hbm [shape: bf16[128,256], index: 1, kind: input, shape index: {}]
  %s2 = inlined_call_operand.hbm [shape: bf16[256,256], index: 2, kind: input, shape index: {}]
  %s3 = inlined_call_operand.vmem [shape: f32[1,256], index: 3, kind: input, shape index: {}]
  %s4 = inlined_call_operand.vmem [shape: f32[1,256], index: 4, kind: input, shape index: {}]
  %s5 = inlined_call_operand.hbm [shape: bf16[256,256], index: 5, kind: output, shape index: {}]
  %s6 = sld [smem:[#allocation0]]
  $region73: #{tpu_custom_call.1} parent=0
    _
  %s8 = ssub.s32 1, %s6
  %s9 = scalar_select 0, %s8, %s6
  $region1: #{tpu_custom_call.1} parent=0
    #allocation3 [shape = 'u8[65536]{0}', space=vmem, size = 0x10000, scoped, tag = 'input window, operand 0']
    #allocation4 [shape = 's32[2]{0}', space=sflag, size = 0x8, scoped, tag = 'scoped memory for tpu_custom_call.1']
    #allocation5 [shape = 's32[2]{0}', space=sflag, size = 0x8, scoped, tag = 'scoped memory for tpu_custom_call.1']
    #allocation6 [shape = 'u8[65536]{0}', space=vmem, size = 0x10000, scoped, tag = 'input window, operand 1, single buffered']
    #allocation7 [shape = 's32[1]{0}', space=sflag, size = 0x4, scoped, tag = 'scoped memory for tpu_custom_call.1']
    #allocation8 [shape = 'u8[131072]{0}', space=vmem, size = 0x20000, scoped, tag = 'input window, operand 2, single buffered']
    #allocation9 [shape = 'u8[131072]{0}', space=vmem, size = 0x20000, scoped, tag = 'output window, operand 0']
    %10 = vsyncpa [#allocation4], 0
    %s11 = scalar_lea.sflag [#allocation4], 1
    %12 = vsyncpa %s11, 0
    %13 = vsyncpa [#allocation7], 0
    %14 = vsyncpa [#allocation5], 0
    %s15 = scalar_lea.sflag [#allocation5], 1
    %16 = vsyncpa %s15, 0
    loop: start=0, step=1, limit=4
    $region2: #{tpu_custom_call.1} parent=1 // loop_pre_header
      _
    $region3: #{tpu_custom_call.1} parent=1 // loop_header
      %s18 = sphi 0, %s22
      %p19 = scmp.ge.s32.totalorder %s18, 4
      %s25 = sphi 0, %s37
      %s26 = sphi 0, %s33
      %s27 = sphi 0, %s25
      %s28 = sphi 0, %s26
      %s29 = sphi 0, %s27
      %s30 = sphi 0, %s28
      %s42 = sphi 0, %s44
      %s45 = sphi 0, %s42
      %s46 = sphi 0, %s45
      %s62 = sphi 0, %s46
      %s68 = sphi 0, %s70
      %s71 = sphi 0, %s68
      %s72 = sphi 0, %s71
      %s88 = sphi 0, %s72
      %s92 = sphi 0, %s92
      %s94 = sphi 0, %s92
      %s95 = sphi 0, %s94
      %s109 = sphi 0, %s95
      %s113 = sphi 0, %s113
      %s115 = sphi 0, %s113
      %s116 = sphi 0, %s115
      %s130 = sphi 0, %s116
      %s134 = sphi 0, %s134
      %s136 = sphi 0, %s134
      %s137 = sphi 0, %s136
      %s151 = sphi 0, %s137
      %s157 = sphi 0, %s159
      %s160 = sphi 0, %s157
      %s161 = sphi 0, %s160
      %s177 = sphi 0, %s161
    $region4: #{tpu_custom_call.1} parent=1 // loop_header_branch
      %21 = sbr.rel (%p19) target = $region8
    $region5: #{tpu_custom_call.1} parent=1 // loop_body
      %s23 = ssub.s32 %s18, 1
      %s24 = ssub.s32 %s18, 2
      %s31 = sadd.s32 1, %s26
      %p32 = scmp.ge.s32.totalorder %s31, 1
      %s33 = scalar_select %p32, 0, %s31
      %s34 = sadd.s32 1, %s25
      %s35 = scalar_select %p32, %s34, %s25
      %p36 = scmp.ge.s32.totalorder %s35, 2
      %s37 = scalar_select %p36, 0, %s35
      %s38 = ssub.s32 %s25, %s37
      %s39 = ssub.s32 %s26, %s33
      %s40 = sor.u32 %s38, %s39
      %p41 = scmp.eq.s32.totalorder %s40, 0
      %s43 = sadd.s32 %s42, 1
      %s44 = scalar_select %p41, %s42, %s43
      %p47 = pneg %p41
      %p48 = scmp.eq.s32.totalorder %s18, 1
      %p49 = por %p47, %p48
      %p50 = scmp.ne.s32.totalorder %s42, %s45
      %p51 = scmp.eq.s32.totalorder %s18, 0
      %p52 = por %p50, %p51
      %p53 = scmp.ne.s32.totalorder %s42, %s45
      %p54 = scmp.eq.s32.totalorder %s23, 1
      %p55 = por %p53, %p54
      %p56 = scmp.ne.s32.totalorder %s45, %s46
      %p57 = scmp.eq.s32.totalorder %s23, 0
      %p58 = por %p56, %p57
      %p59 = scmp.ne.s32.totalorder %s45, %s46
      %p60 = scmp.eq.s32.totalorder %s24, 1
      %p61 = por %p59, %p60
      %p63 = scmp.ne.s32.totalorder %s46, %s62
      %p64 = scmp.eq.s32.totalorder %s24, 0
      %p65 = por %p63, %p64
      %s66 = ssub.s32 %s26, %s33
      %p67 = scmp.eq.s32.totalorder %s66, 0
      %s69 = sadd.s32 %s68, 1
      %s70 = scalar_select %p67, %s68, %s69
      %p73 = pneg %p67
      %p74 = scmp.eq.s32.totalorder %s18, 1
      %p75 = por %p73, %p74
      %p76 = scmp.ne.s32.totalorder %s68, %s71
      %p77 = scmp.eq.s32.totalorder %s18, 0
      %p78 = por %p76, %p77
      %p79 = scmp.ne.s32.totalorder %s68, %s71
      %p80 = scmp.eq.s32.totalorder %s23, 1
      %p81 = por %p79, %p80
      %p82 = scmp.ne.s32.totalorder %s71, %s72
      %p83 = scmp.eq.s32.totalorder %s23, 0
      %p84 = por %p82, %p83
      %p85 = scmp.ne.s32.totalorder %s71, %s72
      %p86 = scmp.eq.s32.totalorder %s24, 1
      %p87 = por %p85, %p86
      %p89 = scmp.ne.s32.totalorder %s72, %s88
      %p90 = scmp.eq.s32.totalorder %s24, 0
      %p91 = por %p89, %p90
      %s93 = sadd.s32 %s92, 1
      %p96 = scmp.eq.s32.totalorder %s18, 1
      %p97 = scmp.ne.s32.totalorder %s92, %s94
      %p98 = scmp.eq.s32.totalorder %s18, 0
      %p99 = por %p97, %p98
      %p100 = scmp.ne.s32.totalorder %s92, %s94
      %p101 = scmp.eq.s32.totalorder %s23, 1
      %p102 = por %p100, %p101
      %p103 = scmp.ne.s32.totalorder %s94, %s95
      %p104 = scmp.eq.s32.totalorder %s23, 0
      %p105 = por %p103, %p104
      %p106 = scmp.ne.s32.totalorder %s94, %s95
      %p107 = scmp.eq.s32.totalorder %s24, 1
      %p108 = por %p106, %p107
      %p110 = scmp.ne.s32.totalorder %s95, %s109
      %p111 = scmp.eq.s32.totalorder %s24, 0
      %p112 = por %p110, %p111
      %s114 = sadd.s32 %s113, 1
      %p117 = scmp.eq.s32.totalorder %s18, 1
      %p118 = scmp.ne.s32.totalorder %s113, %s115
      %p119 = scmp.eq.s32.totalorder %s18, 0
      %p120 = por %p118, %p119
      %p121 = scmp.ne.s32.totalorder %s113, %s115
      %p122 = scmp.eq.s32.totalorder %s23, 1
      %p123 = por %p121, %p122
      %p124 = scmp.ne.s32.totalorder %s115, %s116
      %p125 = scmp.eq.s32.totalorder %s23, 0
      %p126 = por %p124, %p125
      %p127 = scmp.ne.s32.totalorder %s115, %s116
      %p128 = scmp.eq.s32.totalorder %s24, 1
      %p129 = por %p127, %p128
      %p131 = scmp.ne.s32.totalorder %s116, %s130
      %p132 = scmp.eq.s32.totalorder %s24, 0
      %p133 = por %p131, %p132
      %s135 = sadd.s32 %s134, 1
      %p138 = scmp.eq.s32.totalorder %s18, 1
      %p139 = scmp.ne.s32.totalorder %s134, %s136
      %p140 = scmp.eq.s32.totalorder %s18, 0
      %p141 = por %p139, %p140
      %p142 = scmp.ne.s32.totalorder %s134, %s136
      %p143 = scmp.eq.s32.totalorder %s23, 1
      %p144 = por %p142, %p143
      %p145 = scmp.ne.s32.totalorder %s136, %s137
      %p146 = scmp.eq.s32.totalorder %s23, 0
      %p147 = por %p145, %p146
      %p148 = scmp.ne.s32.totalorder %s136, %s137
      %p149 = scmp.eq.s32.totalorder %s24, 1
      %p150 = por %p148, %p149
      %p152 = scmp.ne.s32.totalorder %s137, %s151
      %p153 = scmp.eq.s32.totalorder %s24, 0
      %p154 = por %p152, %p153
      %s155 = ssub.s32 %s25, %s37
      %p156 = scmp.eq.s32.totalorder %s155, 0
      %s158 = sadd.s32 %s157, 1
      %s159 = scalar_select %p156, %s157, %s158
      %p162 = pneg %p156
      %p163 = scmp.eq.s32.totalorder %s18, 1
      %p164 = por %p162, %p163
      %p165 = scmp.ne.s32.totalorder %s157, %s160
      %p166 = scmp.eq.s32.totalorder %s18, 0
      %p167 = por %p165, %p166
      %p168 = scmp.ne.s32.totalorder %s157, %s160
      %p169 = scmp.eq.s32.totalorder %s23, 1
      %p170 = por %p168, %p169
      %p171 = scmp.ne.s32.totalorder %s160, %s161
      %p172 = scmp.eq.s32.totalorder %s23, 0
      %p173 = por %p171, %p172
      %p174 = scmp.ne.s32.totalorder %s160, %s161
      %p175 = scmp.eq.s32.totalorder %s24, 1
      %p176 = por %p174, %p175
      %p178 = scmp.ne.s32.totalorder %s161, %s177
      %p179 = scmp.eq.s32.totalorder %s24, 0
      %p180 = por %p178, %p179
      %p181 = scmp.le.s32.totalorder 1, %s18
      %p182 = scmp.lt.s32.totalorder %s18, 3
      %p183 = pnand %p181, %p182
      %p184 = pneg %p183
      // Predicated region
      $region9: #{tpu_custom_call.1} parent=5 // pred_check
        _
      $region10: #{tpu_custom_call.1} parent=5 // pred_check_branch
        %186 = sbr.rel (%p183) target = $region12
      $region11: #{tpu_custom_call.1} parent=5 // pred_region
        %s187 = ssub.s32 %s18, 1
        // Predicated region
        $region13: #{tpu_custom_call.1} parent=11 // pred_check
          %p188 = pneg %p84
        $region14: #{tpu_custom_call.1} parent=11 // pred_check_branch
          %190 = sbr.rel (%p188) target = $region16
        $region15: #{tpu_custom_call.1} parent=11 // pred_region
          %s191 = smul.u32 16, %s28
          %s193 = ssub.s32 2048, 2048
          %194 = vsyncadd [#allocation7], %s193
          %s195 = smul.addr %s191, 2
          %s196 = smul.addr %s195, 64
          %s197 = scalar_lea.hbm %s1, %s196
          %s198 = sshll.u32 [#allocation6], 4
          %s199 = int_to_ptr.vmem [resolvable:$true] %s198
          %204 = dma.hbm_to_vmem [thread:$0]  %s197, 2048, %s199, [#allocation7], 128, 128, 8
        $region16: #{tpu_custom_call.1} parent=11 // pred_fallthru
          _
        // Predicated region
        $region17: #{tpu_custom_call.1} parent=11 // pred_check
          %p205 = pneg %p105
        $region18: #{tpu_custom_call.1} parent=11 // pred_check_branch
          %207 = sbr.rel (%p205) target = $region20
        $region19: #{tpu_custom_call.1} parent=11 // pred_region
          %s209 = ssub.s32 4096, 4096
          %210 = vsyncadd [#allocation7], %s209
          %s211 = sshll.u32 [#allocation8], 4
          %s212 = int_to_ptr.vmem [resolvable:$true] %s211
          %217 = dma.hbm_to_vmem [thread:$0]  %s2, 4096, %s212, [#allocation7], 128, 128, 8
        $region20: #{tpu_custom_call.1} parent=11 // pred_fallthru
          _
        // Predicated region
        $region21: #{tpu_custom_call.1} parent=11 // pred_check
          %p218 = pneg %p126
        $region22: #{tpu_custom_call.1} parent=11 // pred_check_branch
          %220 = sbr.rel (%p218) target = $region24
        $region23: #{tpu_custom_call.1} parent=11 // pred_region
          _
        $region24: #{tpu_custom_call.1} parent=11 // pred_fallthru
          _
        // Predicated region
        $region25: #{tpu_custom_call.1} parent=11 // pred_check
          %p221 = pneg %p147
        $region26: #{tpu_custom_call.1} parent=11 // pred_check_branch
          %223 = sbr.rel (%p221) target = $region28
        $region27: #{tpu_custom_call.1} parent=11 // pred_region
          _
        $region28: #{tpu_custom_call.1} parent=11 // pred_fallthru
          _
      $region12: #{tpu_custom_call.1} parent=5 // pred_fallthru
        _
      %p224 = scmp.lt.s32.totalorder %s18, 2
      // Predicated region
      $region29: #{tpu_custom_call.1} parent=5 // pred_check
        %p225 = pneg %p224
      $region30: #{tpu_custom_call.1} parent=5 // pred_check_branch
        %227 = sbr.rel (%p225) target = $region32
      $region31: #{tpu_custom_call.1} parent=5 // pred_region
        // Predicated region
        $region33: #{tpu_custom_call.1} parent=31 // pred_check
          %p228 = pneg %p52
        $region34: #{tpu_custom_call.1} parent=31 // pred_check_branch
          %230 = sbr.rel (%p228) target = $region36
        $region35: #{tpu_custom_call.1} parent=31 // pred_region
          %s231 = sand.u32 %s42, 1
          %s232 = scalar_lea.sflag [#allocation4], %s231
          %s233 = sand.u32 %s42, 1
          %s234 = smul.addr %s233, 64
          %s235 = scalar_lea.vmem [#allocation3], %s234
          %s236 = smul.u32 16, %s25
          %s238 = ssub.s32 1024, 1024
          %239 = vsyncadd %s232, %s238
          %s240 = sadd.s32 %s26, %s236
          %s241 = smul.addr %s240, 64
          %s242 = scalar_lea.hbm %s0, %s241
          %s243 = sshll.u32 %s235, 4
          %s244 = int_to_ptr.vmem [resolvable:$true] %s243
          %249 = dma.hbm_to_vmem [thread:$0]  %s242, 1024, %s244, %s232, 64, 64, 4
        $region36: #{tpu_custom_call.1} parent=31 // pred_fallthru
          _
      $region32: #{tpu_custom_call.1} parent=5 // pred_fallthru
        _
      %p250 = scmp.le.s32.totalorder 1, %s18
      %p251 = scmp.lt.s32.totalorder %s18, 3
      %p252 = pnand %p250, %p251
      %p253 = pneg %p252
      // Predicated region
      $region37: #{tpu_custom_call.1} parent=5 // pred_check
        _
      $region38: #{tpu_custom_call.1} parent=5 // pred_check_branch
        %255 = sbr.rel (%p252) target = $region40
      $region39: #{tpu_custom_call.1} parent=5 // pred_region
        %s256 = ssub.s32 %s18, 1
        %s257 = sand.u32 %s45, 1
        %s258 = scalar_lea.sflag [#allocation4], %s257
        %s259 = sand.u32 %s45, 1
        %s260 = smul.addr %s259, 64
        %s261 = scalar_lea.vmem [#allocation3], %s260
        // Predicated region
        $region41: #{tpu_custom_call.1} parent=39 // pred_check
          %p262 = pneg %p58
        $region42: #{tpu_custom_call.1} parent=39 // pred_check_branch
          %264 = sbr.rel (%p262) target = $region44
        $region43: #{tpu_custom_call.1} parent=39 // pred_region
          %265 = dma.done %s258, 1024
        $region44: #{tpu_custom_call.1} parent=39 // pred_fallthru
          _
        // Predicated region
        $region45: #{tpu_custom_call.1} parent=39 // pred_check
          %p266 = pneg %p84
        $region46: #{tpu_custom_call.1} parent=39 // pred_check_branch
          %268 = sbr.rel (%p266) target = $region48
        $region47: #{tpu_custom_call.1} parent=39 // pred_region
          %269 = dma.done [#allocation7], 2048
        $region48: #{tpu_custom_call.1} parent=39 // pred_fallthru
          _
        // Predicated region
        $region49: #{tpu_custom_call.1} parent=39 // pred_check
          %p270 = pneg %p105
        $region50: #{tpu_custom_call.1} parent=39 // pred_check_branch
          %272 = sbr.rel (%p270) target = $region52
        $region51: #{tpu_custom_call.1} parent=39 // pred_region
          %273 = dma.done [#allocation7], 4096
        $region52: #{tpu_custom_call.1} parent=39 // pred_fallthru
          _
        %s274 = sand.u32 %s45, 1
        %s275 = scalar_lea.sflag [#allocation4], %s274
        %s276 = sand.u32 %s45, 1
        %s277 = smul.addr %s276, 64
        %s278 = scalar_lea.vmem [#allocation3], %s277
        %p279 = pneg %p58
        %p280 = pneg %p55
        %p281 = pneg %p84
        %p282 = pneg %p81
        %p283 = pneg %p105
        %p284 = pneg %p102
        %p285 = pneg %p126
        %p286 = pneg %p123
        %p287 = pneg %p147
        %p288 = pneg %p144
        %p289 = pneg %p173
        %p290 = pneg %p170
        %s291 = sand.u32 %s160, 1
        %s292 = scalar_lea.sflag [#allocation5], %s291
        %s293 = sand.u32 %s160, 1
        %s294 = smul.addr %s293, 128
        %s295 = scalar_lea.vmem [#allocation9], %s294
        %s296 = smul.u32 16, %s27
        %s297 = smul.u32 16, %s28
        %s298 = smul.u32 16, %s27
        %p300 = scmp.eq.s32.totalorder %s28, 0
        // Predicated region
        $region53: #{tpu_custom_call.1} parent=39 // pred_check
          %p301 = pneg %p300
        $region54: #{tpu_custom_call.1} parent=39 // pred_check_branch
          %303 = sbr.rel (%p301) target = $region56
        $region55: #{tpu_custom_call.1} parent=39 // pred_region
          %304 = vst [vmem:[#allocation2] sm:$0xff] 0.0
          %305 = vst [vmem:[#allocation2 + $0x8] sm:$0xff] 0.0
          %306 = vst [vmem:[#allocation2 + $0x10] sm:$0xff] 0.0
          %307 = vst [vmem:[#allocation2 + $0x18] sm:$0xff] 0.0
          %308 = vst [vmem:[#allocation2 + $0x20] sm:$0xff] 0.0
          %309 = vst [vmem:[#allocation2 + $0x28] sm:$0xff] 0.0
          %310 = vst [vmem:[#allocation2 + $0x30] sm:$0xff] 0.0
          %311 = vst [vmem:[#allocation2 + $0x38] sm:$0xff] 0.0
          %312 = vst [vmem:[#allocation2 + $0x40] sm:$0xff] 0.0
          %313 = vst [vmem:[#allocation2 + $0x48] sm:$0xff] 0.0
          %314 = vst [vmem:[#allocation2 + $0x50] sm:$0xff] 0.0
          %315 = vst [vmem:[#allocation2 + $0x58] sm:$0xff] 0.0
          %316 = vst [vmem:[#allocation2 + $0x60] sm:$0xff] 0.0
          %317 = vst [vmem:[#allocation2 + $0x68] sm:$0xff] 0.0
          %318 = vst [vmem:[#allocation2 + $0x70] sm:$0xff] 0.0
          %319 = vst [vmem:[#allocation2 + $0x78] sm:$0xff] 0.0
          %320 = vst [vmem:[#allocation2 + $0x80] sm:$0xff] 0.0
          %321 = vst [vmem:[#allocation2 + $0x88] sm:$0xff] 0.0
          %322 = vst [vmem:[#allocation2 + $0x90] sm:$0xff] 0.0
          %323 = vst [vmem:[#allocation2 + $0x98] sm:$0xff] 0.0
          %324 = vst [vmem:[#allocation2 + $0xa0] sm:$0xff] 0.0
          %325 = vst [vmem:[#allocation2 + $0xa8] sm:$0xff] 0.0
          %326 = vst [vmem:[#allocation2 + $0xb0] sm:$0xff] 0.0
          %327 = vst [vmem:[#allocation2 + $0xb8] sm:$0xff] 0.0
          %328 = vst [vmem:[#allocation2 + $0xc0] sm:$0xff] 0.0
          %329 = vst [vmem:[#allocation2 + $0xc8] sm:$0xff] 0.0
          %330 = vst [vmem:[#allocation2 + $0xd0] sm:$0xff] 0.0
          %331 = vst [vmem:[#allocation2 + $0xd8] sm:$0xff] 0.0
          %332 = vst [vmem:[#allocation2 + $0xe0] sm:$0xff] 0.0
          %333 = vst [vmem:[#allocation2 + $0xe8] sm:$0xff] 0.0
          %334 = vst [vmem:[#allocation2 + $0xf0] sm:$0xff] 0.0
          %335 = vst [vmem:[#allocation2 + $0xf8] sm:$0xff] 0.0
        $region56: #{tpu_custom_call.1} parent=39 // pred_fallthru
          _
        %v336 = vld [vmem:[#allocation2] sm:$0xff]
        %v337 = vld [vmem:[#allocation2 + $0x8] sm:$0xff]
        %v338 = vld [vmem:[#allocation2 + $0x10] sm:$0xff]
        %v339 = vld [vmem:[#allocation2 + $0x18] sm:$0xff]
        %v340 = vld [vmem:[#allocation2 + $0x20] sm:$0xff]
        %v341 = vld [vmem:[#allocation2 + $0x28] sm:$0xff]
        %v342 = vld [vmem:[#allocation2 + $0x30] sm:$0xff]
        %v343 = vld [vmem:[#allocation2 + $0x38] sm:$0xff]
        %v344 = vld [vmem:[#allocation2 + $0x40] sm:$0xff]
        %v345 = vld [vmem:[#allocation2 + $0x48] sm:$0xff]
        %v346 = vld [vmem:[#allocation2 + $0x50] sm:$0xff]
        %v347 = vld [vmem:[#allocation2 + $0x58] sm:$0xff]
        %v348 = vld [vmem:[#allocation2 + $0x60] sm:$0xff]
        %v349 = vld [vmem:[#allocation2 + $0x68] sm:$0xff]
        %v350 = vld [vmem:[#allocation2 + $0x70] sm:$0xff]
        %v351 = vld [vmem:[#allocation2 + $0x78] sm:$0xff]
        %v352 = vld [vmem:[#allocation2 + $0x80] sm:$0xff]
        %v353 = vld [vmem:[#allocation2 + $0x88] sm:$0xff]
        %v354 = vld [vmem:[#allocation2 + $0x90] sm:$0xff]
        %v355 = vld [vmem:[#allocation2 + $0x98] sm:$0xff]
        %v356 = vld [vmem:[#allocation2 + $0xa0] sm:$0xff]
        %v357 = vld [vmem:[#allocation2 + $0xa8] sm:$0xff]
        %v358 = vld [vmem:[#allocation2 + $0xb0] sm:$0xff]
        %v359 = vld [vmem:[#allocation2 + $0xb8] sm:$0xff]
        %v360 = vld [vmem:[#allocation2 + $0xc0] sm:$0xff]
        %v361 = vld [vmem:[#allocation2 + $0xc8] sm:$0xff]
        %v362 = vld [vmem:[#allocation2 + $0xd0] sm:$0xff]
        %v363 = vld [vmem:[#allocation2 + $0xd8] sm:$0xff]
        %v364 = vld [vmem:[#allocation2 + $0xe0] sm:$0xff]
        %v365 = vld [vmem:[#allocation2 + $0xe8] sm:$0xff]
        %v366 = vld [vmem:[#allocation2 + $0xf0] sm:$0xff]
        %v367 = vld [vmem:[#allocation2 + $0xf8] sm:$0xff]
        %v368 = vld [vmem:[%s261] sm:$0xf]
        %v369 = vld [vmem:[%s261 + $0x4] sm:$0xf]
        %v370 = vld [vmem:[%s261 + $0x8] sm:$0xf]
        %v371 = vld [vmem:[%s261 + $0xc] sm:$0xf]
        %v372 = vld [vmem:[%s261 + $0x10] sm:$0xf]
        %v373 = vld [vmem:[%s261 + $0x14] sm:$0xf]
        %v374 = vld [vmem:[%s261 + $0x18] sm:$0xf]
        %v375 = vld [vmem:[%s261 + $0x1c] sm:$0xf]
        %v376 = vld [vmem:[%s261 + $0x20] sm:$0xf]
        %v377 = vld [vmem:[%s261 + $0x24] sm:$0xf]
        %v378 = vld [vmem:[%s261 + $0x28] sm:$0xf]
        %v379 = vld [vmem:[%s261 + $0x2c] sm:$0xf]
        %v380 = vld [vmem:[%s261 + $0x30] sm:$0xf]
        %v381 = vld [vmem:[%s261 + $0x34] sm:$0xf]
        %v382 = vld [vmem:[%s261 + $0x38] sm:$0xf]
        %v383 = vld [vmem:[%s261 + $0x3c] sm:$0xf]
        %v384 = vld [vmem:[#allocation6] sm:$0xff]
        %v385 = vld [vmem:[#allocation6 + $0x8] sm:$0xff]
        %v386 = vld [vmem:[#allocation6 + $0x10] sm:$0xff]
        %v387 = vld [vmem:[#allocation6 + $0x18] sm:$0xff]
        %v388 = vld [vmem:[#allocation6 + $0x20] sm:$0xff]
        %v389 = vld [vmem:[#allocation6 + $0x28] sm:$0xff]
        %v390 = vld [vmem:[#allocation6 + $0x30] sm:$0xff]
        %v391 = vld [vmem:[#allocation6 + $0x38] sm:$0xff]
        %v392 = vld [vmem:[#allocation6 + $0x40] sm:$0xff]
        %v393 = vld [vmem:[#allocation6 + $0x48] sm:$0xff]
        %v394 = vld [vmem:[#allocation6 + $0x50] sm:$0xff]
        %v395 = vld [vmem:[#allocation6 + $0x58] sm:$0xff]
        %v396 = vld [vmem:[#allocation6 + $0x60] sm:$0xff]
        %v397 = vld [vmem:[#allocation6 + $0x68] sm:$0xff]
        %v398 = vld [vmem:[#allocation6 + $0x70] sm:$0xff]
        %v399 = vld [vmem:[#allocation6 + $0x78] sm:$0xff]
        %v416 = vunpack.c.l.b16 %v368
        %v417 = vunpack.c.l.b16 %v369
        %v418 = vunpack.c.l.b16 %v370
        %v419 = vunpack.c.l.b16 %v371
        %v420 = vunpack.c.l.b16 %v372
        %v421 = vunpack.c.l.b16 %v373
        %v422 = vunpack.c.l.b16 %v374
        %v423 = vunpack.c.l.b16 %v375
        %v424 = vunpack.c.l.b16 %v376
        %v425 = vunpack.c.l.b16 %v377
        %v426 = vunpack.c.l.b16 %v378
        %v427 = vunpack.c.l.b16 %v379
        %v428 = vunpack.c.l.b16 %v380
        %v429 = vunpack.c.l.b16 %v381
        %v430 = vunpack.c.l.b16 %v382
        %v431 = vunpack.c.l.b16 %v383
        %v432 = vpack.c.b16 %v417, %v416
        %v433 = vpack.c.b16 %v419, %v418
        %v434 = vpack.c.b16 %v421, %v420
        %v435 = vpack.c.b16 %v423, %v422
        %v436 = vpack.c.b16 %v425, %v424
        %v437 = vpack.c.b16 %v427, %v426
        %v438 = vpack.c.b16 %v429, %v428
        %v439 = vpack.c.b16 %v431, %v430
        %v464 = vunpack.c.l.b16 %v384
        %v465 = vunpack.c.h.b16 %v384
        %v466 = vunpack.c.l.b16 %v385
        %v467 = vunpack.c.h.b16 %v385
        %v468 = vunpack.c.l.b16 %v386
        %v469 = vunpack.c.h.b16 %v386
        %v470 = vunpack.c.l.b16 %v387
        %v471 = vunpack.c.h.b16 %v387
        %v472 = vunpack.c.l.b16 %v388
        %v473 = vunpack.c.h.b16 %v388
        %v474 = vunpack.c.l.b16 %v389
        %v475 = vunpack.c.h.b16 %v389
        %v476 = vunpack.c.l.b16 %v390
        %v477 = vunpack.c.h.b16 %v390
        %v478 = vunpack.c.l.b16 %v391
        %v479 = vunpack.c.h.b16 %v391
        %v480 = vunpack.c.l.b16 %v392
        %v481 = vunpack.c.h.b16 %v392
        %v482 = vunpack.c.l.b16 %v393
        %v483 = vunpack.c.h.b16 %v393
        %v484 = vunpack.c.l.b16 %v394
        %v485 = vunpack.c.h.b16 %v394
        %v486 = vunpack.c.l.b16 %v395
        %v487 = vunpack.c.h.b16 %v395
        %v488 = vunpack.c.l.b16 %v396
        %v489 = vunpack.c.h.b16 %v396
        %v490 = vunpack.c.l.b16 %v397
        %v491 = vunpack.c.h.b16 %v397
        %v492 = vunpack.c.l.b16 %v398
        %v493 = vunpack.c.h.b16 %v398
        %v494 = vunpack.c.l.b16 %v399
        %v495 = vunpack.c.h.b16 %v399
        %v496 = vpack.c.b16 %v466, %v464
        %v497 = vpack.c.b16 %v467, %v465
        %v498 = vpack.c.b16 %v470, %v468
        %v499 = vpack.c.b16 %v471, %v469
        %v500 = vpack.c.b16 %v474, %v472
        %v501 = vpack.c.b16 %v475, %v473
        %v502 = vpack.c.b16 %v478, %v476
        %v503 = vpack.c.b16 %v479, %v477
        %v504 = vpack.c.b16 %v482, %v480
        %v505 = vpack.c.b16 %v483, %v481
        %v506 = vpack.c.b16 %v486, %v484
        %v507 = vpack.c.b16 %v487, %v485
        %v508 = vpack.c.b16 %v490, %v488
        %v509 = vpack.c.b16 %v491, %v489
        %v510 = vpack.c.b16 %v494, %v492
        %v511 = vpack.c.b16 %v495, %v493
        %528 = vmatprep.subr.bf16.mxu0 %v497
        %529 = vmatpush1.bf16.msra.mxu0 %v496
        %530 = vmatprep.subr.bf16.mxu0 %v499
        %531 = vmatpush1.bf16.msra.mxu0 %v498
        %532 = vmatprep.subr.bf16.mxu0 %v501
        %533 = vmatpush1.bf16.msra.mxu0 %v500
        %534 = vmatprep.subr.bf16.mxu0 %v503
        %535 = vmatpush1.bf16.msra.mxu0 %v502
        %536 = vmatprep.subr.bf16.mxu0 %v505
        %537 = vmatpush1.bf16.msra.mxu0 %v504
        %538 = vmatprep.subr.bf16.mxu0 %v507
        %539 = vmatpush1.bf16.msra.mxu0 %v506
        %540 = vmatprep.subr.bf16.mxu0 %v509
        %541 = vmatpush1.bf16.msra.mxu0 %v508
        %542 = vmatprep.subr.bf16.mxu0 %v511
        %543 = vmatpush1.bf16.msra.mxu0 %v510
        %544 = vmatprep.subr.bf16.mxu0 0
        %545 = vmatpush1.bf16.msra.mxu0 0
        %546 = vmatprep.subr.bf16.mxu0 0
        %547 = vmatpush1.bf16.msra.mxu0 0
        %548 = vmatprep.subr.bf16.mxu0 0
        %549 = vmatpush1.bf16.msra.mxu0 0
        %550 = vmatprep.subr.bf16.mxu0 0
        %551 = vmatpush1.bf16.msra.mxu0 0
        %552 = vmatprep.subr.bf16.mxu0 0
        %553 = vmatpush1.bf16.msra.mxu0 0
        %554 = vmatprep.subr.bf16.mxu0 0
        %555 = vmatpush1.bf16.msra.mxu0 0
        %556 = vmatprep.subr.bf16.mxu0 0
        %557 = vmatpush1.bf16.msra.mxu0 0
        %558 = vmatprep.subr.bf16.mxu0 0
        %559 = vmatpush1.bf16.msra.mxu0 0
        %560 = vmatprep.mubr.bf16.mxu0 0
        %561 = vmatmul.mubr.bf16.gmra.mrb[0].mxu0 %v432
        %v562 = vpop.f32.mrb[0].mxu0
        %v563 = vadd.f32 0.0, %v562
        %v564 = vpop.f32.mrb[0].mxu0
        %v565 = vadd.f32 0.0, %v564
        %v566 = vpop.f32.mrb[0].mxu0
        %v567 = vadd.f32 0.0, %v566
        %v568 = vpop.f32.mrb[0].mxu0
        %v569 = vadd.f32 0.0, %v568
        %570 = vmatprep.mubr.bf16.mxu0 0
        %571 = vmatmul.mubr.bf16.gmra.mrb[0].mxu0 %v433
        %v572 = vpop.f32.mrb[0].mxu0
        %v573 = vadd.f32 0.0, %v572
        %v574 = vpop.f32.mrb[0].mxu0
        %v575 = vadd.f32 0.0, %v574
        %v576 = vpop.f32.mrb[0].mxu0
        %v577 = vadd.f32 0.0, %v576
        %v578 = vpop.f32.mrb[0].mxu0
        %v579 = vadd.f32 0.0, %v578
        %580 = vmatprep.mubr.bf16.mxu0 0
        %581 = vmatmul.mubr.bf16.gmra.mrb[0].mxu0 %v434
        %v582 = vpop.f32.mrb[0].mxu0
        %v583 = vadd.f32 0.0, %v582
        %v584 = vpop.f32.mrb[0].mxu0
        %v585 = vadd.f32 0.0, %v584
        %v586 = vpop.f32.mrb[0].mxu0
        %v587 = vadd.f32 0.0, %v586
        %v588 = vpop.f32.mrb[0].mxu0
        %v589 = vadd.f32 0.0, %v588
        %590 = vmatprep.mubr.bf16.mxu0 0
        %591 = vmatmul.mubr.bf16.gmra.mrb[0].mxu0 %v435
        %v592 = vpop.f32.mrb[0].mxu0
        %v593 = vadd.f32 0.0, %v592
        %v594 = vpop.f32.mrb[0].mxu0
        %v595 = vadd.f32 0.0, %v594
        %v596 = vpop.f32.mrb[0].mxu0
        %v597 = vadd.f32 0.0, %v596
        %v598 = vpop.f32.mrb[0].mxu0
        %v599 = vadd.f32 0.0, %v598
        %600 = vmatprep.mubr.bf16.mxu0 0
        %601 = vmatmul.mubr.bf16.gmra.mrb[0].mxu0 %v436
        %v602 = vpop.f32.mrb[0].mxu0
        %v603 = vadd.f32 0.0, %v602
        %v604 = vpop.f32.mrb[0].mxu0
        %v605 = vadd.f32 0.0, %v604
        %v606 = vpop.f32.mrb[0].mxu0
        %v607 = vadd.f32 0.0, %v606
        %v608 = vpop.f32.mrb[0].mxu0
        %v609 = vadd.f32 0.0, %v608
        %610 = vmatprep.mubr.bf16.mxu0 0
        %611 = vmatmul.mubr.bf16.gmra.mrb[0].mxu0 %v437
        %v612 = vpop.f32.mrb[0].mxu0
        %v613 = vadd.f32 0.0, %v612
        %v614 = vpop.f32.mrb[0].mxu0
        %v615 = vadd.f32 0.0, %v614
        %v616 = vpop.f32.mrb[0].mxu0
        %v617 = vadd.f32 0.0, %v616
        %v618 = vpop.f32.mrb[0].mxu0
        %v619 = vadd.f32 0.0, %v618
        %620 = vmatprep.mubr.bf16.mxu0 0
        %621 = vmatmul.mubr.bf16.gmra.mrb[0].mxu0 %v438
        %v622 = vpop.f32.mrb[0].mxu0
        %v623 = vadd.f32 0.0, %v622
        %v624 = vpop.f32.mrb[0].mxu0
        %v625 = vadd.f32 0.0, %v624
        %v626 = vpop.f32.mrb[0].mxu0
        %v627 = vadd.f32 0.0, %v626
        %v628 = vpop.f32.mrb[0].mxu0
        %v629 = vadd.f32 0.0, %v628
        %630 = vmatprep.mubr.bf16.mxu0 0
        %631 = vmatmul.mubr.bf16.gmra.mrb[0].mxu0 %v439
        %v632 = vpop.f32.mrb[0].mxu0
        %v633 = vadd.f32 0.0, %v632
        %v634 = vpop.f32.mrb[0].mxu0
        %v635 = vadd.f32 0.0, %v634
        %v636 = vpop.f32.mrb[0].mxu0
        %v637 = vadd.f32 0.0, %v636
        %v638 = vpop.f32.mrb[0].mxu0
        %v639 = vadd.f32 0.0, %v638
        %640 = vdwg.mxu0
        %v641 = vadd.f32 %v336, %v563
        %v642 = vadd.f32 %v337, %v565
        %v643 = vadd.f32 %v338, %v567
        %v644 = vadd.f32 %v339, %v569
        %v645 = vadd.f32 %v340, %v573
        %v646 = vadd.f32 %v341, %v575
        %v647 = vadd.f32 %v342, %v577
        %v648 = vadd.f32 %v343, %v579
        %v649 = vadd.f32 %v344, %v583
        %v650 = vadd.f32 %v345, %v585
        %v651 = vadd.f32 %v346, %v587
        %v652 = vadd.f32 %v347, %v589
        %v653 = vadd.f32 %v348, %v593
        %v654 = vadd.f32 %v349, %v595
        %v655 = vadd.f32 %v350, %v597
        %v656 = vadd.f32 %v351, %v599
        %v657 = vadd.f32 %v352, %v603
        %v658 = vadd.f32 %v353, %v605
        %v659 = vadd.f32 %v354, %v607
        %v660 = vadd.f32 %v355, %v609
        %v661 = vadd.f32 %v356, %v613
        %v662 = vadd.f32 %v357, %v615
        %v663 = vadd.f32 %v358, %v617
        %v664 = vadd.f32 %v359, %v619
        %v665 = vadd.f32 %v360, %v623
        %v666 = vadd.f32 %v361, %v625
        %v667 = vadd.f32 %v362, %v627
        %v668 = vadd.f32 %v363, %v629
        %v669 = vadd.f32 %v364, %v633
        %v670 = vadd.f32 %v365, %v635
        %v671 = vadd.f32 %v366, %v637
        %v672 = vadd.f32 %v367, %v639
        %673 = vst [vmem:[#allocation2] sm:$0xff] %v641
        %674 = vst [vmem:[#allocation2 + $0x8] sm:$0xff] %v642
        %675 = vst [vmem:[#allocation2 + $0x10] sm:$0xff] %v643
        %676 = vst [vmem:[#allocation2 + $0x18] sm:$0xff] %v644
        %677 = vst [vmem:[#allocation2 + $0x20] sm:$0xff] %v645
        %678 = vst [vmem:[#allocation2 + $0x28] sm:$0xff] %v646
        %679 = vst [vmem:[#allocation2 + $0x30] sm:$0xff] %v647
        %680 = vst [vmem:[#allocation2 + $0x38] sm:$0xff] %v648
        %681 = vst [vmem:[#allocation2 + $0x40] sm:$0xff] %v649
        %682 = vst [vmem:[#allocation2 + $0x48] sm:$0xff] %v650
        %683 = vst [vmem:[#allocation2 + $0x50] sm:$0xff] %v651
        %684 = vst [vmem:[#allocation2 + $0x58] sm:$0xff] %v652
        %685 = vst [vmem:[#allocation2 + $0x60] sm:$0xff] %v653
        %686 = vst [vmem:[#allocation2 + $0x68] sm:$0xff] %v654
        %687 = vst [vmem:[#allocation2 + $0x70] sm:$0xff] %v655
        %688 = vst [vmem:[#allocation2 + $0x78] sm:$0xff] %v656
        %689 = vst [vmem:[#allocation2 + $0x80] sm:$0xff] %v657
        %690 = vst [vmem:[#allocation2 + $0x88] sm:$0xff] %v658
        %691 = vst [vmem:[#allocation2 + $0x90] sm:$0xff] %v659
        %692 = vst [vmem:[#allocation2 + $0x98] sm:$0xff] %v660
        %693 = vst [vmem:[#allocation2 + $0xa0] sm:$0xff] %v661
        %694 = vst [vmem:[#allocation2 + $0xa8] sm:$0xff] %v662
        %695 = vst [vmem:[#allocation2 + $0xb0] sm:$0xff] %v663
        %696 = vst [vmem:[#allocation2 + $0xb8] sm:$0xff] %v664
        %697 = vst [vmem:[#allocation2 + $0xc0] sm:$0xff] %v665
        %698 = vst [vmem:[#allocation2 + $0xc8] sm:$0xff] %v666
        %699 = vst [vmem:[#allocation2 + $0xd0] sm:$0xff] %v667
        %700 = vst [vmem:[#allocation2 + $0xd8] sm:$0xff] %v668
        %701 = vst [vmem:[#allocation2 + $0xe0] sm:$0xff] %v669
        %702 = vst [vmem:[#allocation2 + $0xe8] sm:$0xff] %v670
        %703 = vst [vmem:[#allocation2 + $0xf0] sm:$0xff] %v671
        %704 = vst [vmem:[#allocation2 + $0xf8] sm:$0xff] %v672
        // Predicated region
        $region57: #{tpu_custom_call.1} parent=39 // pred_check
          %p705 = pneg %p300
        $region58: #{tpu_custom_call.1} parent=39 // pred_check_branch
          %707 = sbr.rel (%p705) target = $region60
        $region59: #{tpu_custom_call.1} parent=39 // pred_region
          %v708 = vld [vmem:[#allocation2] sm:$0xff]
          %v709 = vld [vmem:[#allocation2 + $0x8] sm:$0xff]
          %v710 = vld [vmem:[#allocation2 + $0x10] sm:$0xff]
          %v711 = vld [vmem:[#allocation2 + $0x18] sm:$0xff]
          %v712 = vld [vmem:[#allocation2 + $0x20] sm:$0xff]
          %v713 = vld [vmem:[#allocation2 + $0x28] sm:$0xff]
          %v714 = vld [vmem:[#allocation2 + $0x30] sm:$0xff]
          %v715 = vld [vmem:[#allocation2 + $0x38] sm:$0xff]
          %v716 = vld [vmem:[#allocation2 + $0x40] sm:$0xff]
          %v717 = vld [vmem:[#allocation2 + $0x48] sm:$0xff]
          %v718 = vld [vmem:[#allocation2 + $0x50] sm:$0xff]
          %v719 = vld [vmem:[#allocation2 + $0x58] sm:$0xff]
          %v720 = vld [vmem:[#allocation2 + $0x60] sm:$0xff]
          %v721 = vld [vmem:[#allocation2 + $0x68] sm:$0xff]
          %v722 = vld [vmem:[#allocation2 + $0x70] sm:$0xff]
          %v723 = vld [vmem:[#allocation2 + $0x78] sm:$0xff]
          %v724 = vld [vmem:[#allocation2 + $0x80] sm:$0xff]
          %v725 = vld [vmem:[#allocation2 + $0x88] sm:$0xff]
          %v726 = vld [vmem:[#allocation2 + $0x90] sm:$0xff]
          %v727 = vld [vmem:[#allocation2 + $0x98] sm:$0xff]
          %v728 = vld [vmem:[#allocation2 + $0xa0] sm:$0xff]
          %v729 = vld [vmem:[#allocation2 + $0xa8] sm:$0xff]
          %v730 = vld [vmem:[#allocation2 + $0xb0] sm:$0xff]
          %v731 = vld [vmem:[#allocation2 + $0xb8] sm:$0xff]
          %v732 = vld [vmem:[#allocation2 + $0xc0] sm:$0xff]
          %v733 = vld [vmem:[#allocation2 + $0xc8] sm:$0xff]
          %v734 = vld [vmem:[#allocation2 + $0xd0] sm:$0xff]
          %v735 = vld [vmem:[#allocation2 + $0xd8] sm:$0xff]
          %v736 = vld [vmem:[#allocation2 + $0xe0] sm:$0xff]
          %v737 = vld [vmem:[#allocation2 + $0xe8] sm:$0xff]
          %v738 = vld [vmem:[#allocation2 + $0xf0] sm:$0xff]
          %v739 = vld [vmem:[#allocation2 + $0xf8] sm:$0xff]
          %v740 = vmul.f32 %v708, 0.5
          %v741 = vmul.f32 %v709, 0.5
          %v742 = vmul.f32 %v710, 0.5
          %v743 = vmul.f32 %v711, 0.5
          %v744 = vmul.f32 %v712, 0.5
          %v745 = vmul.f32 %v713, 0.5
          %v746 = vmul.f32 %v714, 0.5
          %v747 = vmul.f32 %v715, 0.5
          %v748 = vmul.f32 %v716, 0.5
          %v749 = vmul.f32 %v717, 0.5
          %v750 = vmul.f32 %v718, 0.5
          %v751 = vmul.f32 %v719, 0.5
          %v752 = vmul.f32 %v720, 0.5
          %v753 = vmul.f32 %v721, 0.5
          %v754 = vmul.f32 %v722, 0.5
          %v755 = vmul.f32 %v723, 0.5
          %v756 = vmul.f32 %v724, 0.5
          %v757 = vmul.f32 %v725, 0.5
          %v758 = vmul.f32 %v726, 0.5
          %v759 = vmul.f32 %v727, 0.5
          %v760 = vmul.f32 %v728, 0.5
          %v761 = vmul.f32 %v729, 0.5
          %v762 = vmul.f32 %v730, 0.5
          %v763 = vmul.f32 %v731, 0.5
          %v764 = vmul.f32 %v732, 0.5
          %v765 = vmul.f32 %v733, 0.5
          %v766 = vmul.f32 %v734, 0.5
          %v767 = vmul.f32 %v735, 0.5
          %v768 = vmul.f32 %v736, 0.5
          %v769 = vmul.f32 %v737, 0.5
          %v770 = vmul.f32 %v738, 0.5
          %v771 = vmul.f32 %v739, 0.5
          %v772 = vmul.f32 %v708, 0.70710677
          %v773 = vmul.f32 %v709, 0.70710677
          %v774 = vmul.f32 %v710, 0.70710677
          %v775 = vmul.f32 %v711, 0.70710677
          %v776 = vmul.f32 %v712, 0.70710677
          %v777 = vmul.f32 %v713, 0.70710677
          %v778 = vmul.f32 %v714, 0.70710677
          %v779 = vmul.f32 %v715, 0.70710677
          %v780 = vmul.f32 %v716, 0.70710677
          %v781 = vmul.f32 %v717, 0.70710677
          %v782 = vmul.f32 %v718, 0.70710677
          %v783 = vmul.f32 %v719, 0.70710677
          %v784 = vmul.f32 %v720, 0.70710677
          %v785 = vmul.f32 %v721, 0.70710677
          %v786 = vmul.f32 %v722, 0.70710677
          %v787 = vmul.f32 %v723, 0.70710677
          %v788 = vmul.f32 %v724, 0.70710677
          %v789 = vmul.f32 %v725, 0.70710677
          %v790 = vmul.f32 %v726, 0.70710677
          %v791 = vmul.f32 %v727, 0.70710677
          %v792 = vmul.f32 %v728, 0.70710677
          %v793 = vmul.f32 %v729, 0.70710677
          %v794 = vmul.f32 %v730, 0.70710677
          %v795 = vmul.f32 %v731, 0.70710677
          %v796 = vmul.f32 %v732, 0.70710677
          %v797 = vmul.f32 %v733, 0.70710677
          %v798 = vmul.f32 %v734, 0.70710677
          %v799 = vmul.f32 %v735, 0.70710677
          %v800 = vmul.f32 %v736, 0.70710677
          %v801 = vmul.f32 %v737, 0.70710677
          %v802 = vmul.f32 %v738, 0.70710677
          %v803 = vmul.f32 %v739, 0.70710677
          %v804 = verf.f32.pop %v772
          %v805 = verf.f32.pop %v773
          %v806 = verf.f32.pop %v774
          %v807 = verf.f32.pop %v775
          %v808 = verf.f32.pop %v776
          %v809 = verf.f32.pop %v777
          %v810 = verf.f32.pop %v778
          %v811 = verf.f32.pop %v779
          %v812 = verf.f32.pop %v780
          %v813 = verf.f32.pop %v781
          %v814 = verf.f32.pop %v782
          %v815 = verf.f32.pop %v783
          %v816 = verf.f32.pop %v784
          %v817 = verf.f32.pop %v785
          %v818 = verf.f32.pop %v786
          %v819 = verf.f32.pop %v787
          %v820 = verf.f32.pop %v788
          %v821 = verf.f32.pop %v789
          %v822 = verf.f32.pop %v790
          %v823 = verf.f32.pop %v791
          %v824 = verf.f32.pop %v792
          %v825 = verf.f32.pop %v793
          %v826 = verf.f32.pop %v794
          %v827 = verf.f32.pop %v795
          %v828 = verf.f32.pop %v796
          %v829 = verf.f32.pop %v797
          %v830 = verf.f32.pop %v798
          %v831 = verf.f32.pop %v799
          %v832 = verf.f32.pop %v800
          %v833 = verf.f32.pop %v801
          %v834 = verf.f32.pop %v802
          %v835 = verf.f32.pop %v803
          %v836 = vadd.f32 %v804, 1.0
          %v837 = vadd.f32 %v805, 1.0
          %v838 = vadd.f32 %v806, 1.0
          %v839 = vadd.f32 %v807, 1.0
          %v840 = vadd.f32 %v808, 1.0
          %v841 = vadd.f32 %v809, 1.0
          %v842 = vadd.f32 %v810, 1.0
          %v843 = vadd.f32 %v811, 1.0
          %v844 = vadd.f32 %v812, 1.0
          %v845 = vadd.f32 %v813, 1.0
          %v846 = vadd.f32 %v814, 1.0
          %v847 = vadd.f32 %v815, 1.0
          %v848 = vadd.f32 %v816, 1.0
          %v849 = vadd.f32 %v817, 1.0
          %v850 = vadd.f32 %v818, 1.0
          %v851 = vadd.f32 %v819, 1.0
          %v852 = vadd.f32 %v820, 1.0
          %v853 = vadd.f32 %v821, 1.0
          %v854 = vadd.f32 %v822, 1.0
          %v855 = vadd.f32 %v823, 1.0
          %v856 = vadd.f32 %v824, 1.0
          %v857 = vadd.f32 %v825, 1.0
          %v858 = vadd.f32 %v826, 1.0
          %v859 = vadd.f32 %v827, 1.0
          %v860 = vadd.f32 %v828, 1.0
          %v861 = vadd.f32 %v829, 1.0
          %v862 = vadd.f32 %v830, 1.0
          %v863 = vadd.f32 %v831, 1.0
          %v864 = vadd.f32 %v832, 1.0
          %v865 = vadd.f32 %v833, 1.0
          %v866 = vadd.f32 %v834, 1.0
          %v867 = vadd.f32 %v835, 1.0
          %v868 = vmul.f32 %v740, %v836
          %v869 = vmul.f32 %v741, %v837
          %v870 = vmul.f32 %v742, %v838
          %v871 = vmul.f32 %v743, %v839
          %v872 = vmul.f32 %v744, %v840
          %v873 = vmul.f32 %v745, %v841
          %v874 = vmul.f32 %v746, %v842
          %v875 = vmul.f32 %v747, %v843
          %v876 = vmul.f32 %v748, %v844
          %v877 = vmul.f32 %v749, %v845
          %v878 = vmul.f32 %v750, %v846
          %v879 = vmul.f32 %v751, %v847
          %v880 = vmul.f32 %v752, %v848
          %v881 = vmul.f32 %v753, %v849
          %v882 = vmul.f32 %v754, %v850
          %v883 = vmul.f32 %v755, %v851
          %v884 = vmul.f32 %v756, %v852
          %v885 = vmul.f32 %v757, %v853
          %v886 = vmul.f32 %v758, %v854
          %v887 = vmul.f32 %v759, %v855
          %v888 = vmul.f32 %v760, %v856
          %v889 = vmul.f32 %v761, %v857
          %v890 = vmul.f32 %v762, %v858
          %v891 = vmul.f32 %v763, %v859
          %v892 = vmul.f32 %v764, %v860
          %v893 = vmul.f32 %v765, %v861
          %v894 = vmul.f32 %v766, %v862
          %v895 = vmul.f32 %v767, %v863
          %v896 = vmul.f32 %v768, %v864
          %v897 = vmul.f32 %v769, %v865
          %v898 = vmul.f32 %v770, %v866
          %v899 = vmul.f32 %v771, %v867
          %v900 = vpack.c.bf16 %v870, %v868
          %v901 = vpack.c.bf16 %v871, %v869
          %v902 = vpack.c.bf16 %v874, %v872
          %v903 = vpack.c.bf16 %v875, %v873
          %v904 = vpack.c.bf16 %v878, %v876
          %v905 = vpack.c.bf16 %v879, %v877
          %v906 = vpack.c.bf16 %v882, %v880
          %v907 = vpack.c.bf16 %v883, %v881
          %v908 = vpack.c.bf16 %v886, %v884
          %v909 = vpack.c.bf16 %v887, %v885
          %v910 = vpack.c.bf16 %v890, %v888
          %v911 = vpack.c.bf16 %v891, %v889
          %v912 = vpack.c.bf16 %v894, %v892
          %v913 = vpack.c.bf16 %v895, %v893
          %v914 = vpack.c.bf16 %v898, %v896
          %v915 = vpack.c.bf16 %v899, %v897
          %v916 = vld [vmem:[#allocation8] sm:$0xff]
          %v917 = vld [vmem:[#allocation8 + $0x8] sm:$0xff]
          %v918 = vld [vmem:[#allocation8 + $0x10] sm:$0xff]
          %v919 = vld [vmem:[#allocation8 + $0x18] sm:$0xff]
          %v920 = vld [vmem:[#allocation8 + $0x20] sm:$0xff]
          %v921 = vld [vmem:[#allocation8 + $0x28] sm:$0xff]
          %v922 = vld [vmem:[#allocation8 + $0x30] sm:$0xff]
          %v923 = vld [vmem:[#allocation8 + $0x38] sm:$0xff]
          %v924 = vld [vmem:[#allocation8 + $0x40] sm:$0xff]
          %v925 = vld [vmem:[#allocation8 + $0x48] sm:$0xff]
          %v926 = vld [vmem:[#allocation8 + $0x50] sm:$0xff]
          %v927 = vld [vmem:[#allocation8 + $0x58] sm:$0xff]
          %v928 = vld [vmem:[#allocation8 + $0x60] sm:$0xff]
          %v929 = vld [vmem:[#allocation8 + $0x68] sm:$0xff]
          %v930 = vld [vmem:[#allocation8 + $0x70] sm:$0xff]
          %v931 = vld [vmem:[#allocation8 + $0x78] sm:$0xff]
          %v932 = vld [vmem:[#allocation8 + $0x80] sm:$0xff]
          %v933 = vld [vmem:[#allocation8 + $0x88] sm:$0xff]
          %v934 = vld [vmem:[#allocation8 + $0x90] sm:$0xff]
          %v935 = vld [vmem:[#allocation8 + $0x98] sm:$0xff]
          %v936 = vld [vmem:[#allocation8 + $0xa0] sm:$0xff]
          %v937 = vld [vmem:[#allocation8 + $0xa8] sm:$0xff]
          %v938 = vld [vmem:[#allocation8 + $0xb0] sm:$0xff]
          %v939 = vld [vmem:[#allocation8 + $0xb8] sm:$0xff]
          %v940 = vld [vmem:[#allocation8 + $0xc0] sm:$0xff]
          %v941 = vld [vmem:[#allocation8 + $0xc8] sm:$0xff]
          %v942 = vld [vmem:[#allocation8 + $0xd0] sm:$0xff]
          %v943 = vld [vmem:[#allocation8 + $0xd8] sm:$0xff]
          %v944 = vld [vmem:[#allocation8 + $0xe0] sm:$0xff]
          %v945 = vld [vmem:[#allocation8 + $0xe8] sm:$0xff]
          %v946 = vld [vmem:[#allocation8 + $0xf0] sm:$0xff]
          %v947 = vld [vmem:[#allocation8 + $0xf8] sm:$0xff]
          %v980 = vunpack.c.l.b16 %v916
          %v981 = vunpack.c.h.b16 %v916
          %v982 = vunpack.c.l.b16 %v917
          %v983 = vunpack.c.h.b16 %v917
          %v984 = vunpack.c.l.b16 %v918
          %v985 = vunpack.c.h.b16 %v918
          %v986 = vunpack.c.l.b16 %v919
          %v987 = vunpack.c.h.b16 %v919
          %v988 = vunpack.c.l.b16 %v920
          %v989 = vunpack.c.h.b16 %v920
          %v990 = vunpack.c.l.b16 %v921
          %v991 = vunpack.c.h.b16 %v921
          %v992 = vunpack.c.l.b16 %v922
          %v993 = vunpack.c.h.b16 %v922
          %v994 = vunpack.c.l.b16 %v923
          %v995 = vunpack.c.h.b16 %v923
          %v996 = vunpack.c.l.b16 %v924
          %v997 = vunpack.c.h.b16 %v924
          %v998 = vunpack.c.l.b16 %v925
          %v999 = vunpack.c.h.b16 %v925
          %v1000 = vunpack.c.l.b16 %v926
          %v1001 = vunpack.c.h.b16 %v926
          %v1002 = vunpack.c.l.b16 %v927
          %v1003 = vunpack.c.h.b16 %v927
          %v1004 = vunpack.c.l.b16 %v928
          %v1005 = vunpack.c.h.b16 %v928
          %v1006 = vunpack.c.l.b16 %v929
          %v1007 = vunpack.c.h.b16 %v929
          %v1008 = vunpack.c.l.b16 %v930
          %v1009 = vunpack.c.h.b16 %v930
          %v1010 = vunpack.c.l.b16 %v931
          %v1011 = vunpack.c.h.b16 %v931
          %v1012 = vunpack.c.l.b16 %v932
          %v1013 = vunpack.c.h.b16 %v932
          %v1014 = vunpack.c.l.b16 %v933
          %v1015 = vunpack.c.h.b16 %v933
          %v1016 = vunpack.c.l.b16 %v934
          %v1017 = vunpack.c.h.b16 %v934
          %v1018 = vunpack.c.l.b16 %v935
          %v1019 = vunpack.c.h.b16 %v935
          %v1020 = vunpack.c.l.b16 %v936
          %v1021 = vunpack.c.h.b16 %v936
          %v1022 = vunpack.c.l.b16 %v937
          %v1023 = vunpack.c.h.b16 %v937
          %v1024 = vunpack.c.l.b16 %v938
          %v1025 = vunpack.c.h.b16 %v938
          %v1026 = vunpack.c.l.b16 %v939
          %v1027 = vunpack.c.h.b16 %v939
          %v1028 = vunpack.c.l.b16 %v940
          %v1029 = vunpack.c.h.b16 %v940
          %v1030 = vunpack.c.l.b16 %v941
          %v1031 = vunpack.c.h.b16 %v941
          %v1032 = vunpack.c.l.b16 %v942
          %v1033 = vunpack.c.h.b16 %v942
          %v1034 = vunpack.c.l.b16 %v943
          %v1035 = vunpack.c.h.b16 %v943
          %v1036 = vunpack.c.l.b16 %v944
          %v1037 = vunpack.c.h.b16 %v944
          %v1038 = vunpack.c.l.b16 %v945
          %v1039 = vunpack.c.h.b16 %v945
          %v1040 = vunpack.c.l.b16 %v946
          %v1041 = vunpack.c.h.b16 %v946
          %v1042 = vunpack.c.l.b16 %v947
          %v1043 = vunpack.c.h.b16 %v947
          %v1044 = vpack.c.b16 %v982, %v980
          %v1045 = vpack.c.b16 %v983, %v981
          %v1046 = vpack.c.b16 %v986, %v984
          %v1047 = vpack.c.b16 %v987, %v985
          %v1048 = vpack.c.b16 %v990, %v988
          %v1049 = vpack.c.b16 %v991, %v989
          %v1050 = vpack.c.b16 %v994, %v992
          %v1051 = vpack.c.b16 %v995, %v993
          %v1052 = vpack.c.b16 %v998, %v996
          %v1053 = vpack.c.b16 %v999, %v997
          %v1054 = vpack.c.b16 %v1002, %v1000
          %v1055 = vpack.c.b16 %v1003, %v1001
          %v1056 = vpack.c.b16 %v1006, %v1004
          %v1057 = vpack.c.b16 %v1007, %v1005
          %v1058 = vpack.c.b16 %v1010, %v1008
          %v1059 = vpack.c.b16 %v1011, %v1009
          %v1060 = vpack.c.b16 %v1014, %v1012
          %v1061 = vpack.c.b16 %v1015, %v1013
          %v1062 = vpack.c.b16 %v1018, %v1016
          %v1063 = vpack.c.b16 %v1019, %v1017
          %v1064 = vpack.c.b16 %v1022, %v1020
          %v1065 = vpack.c.b16 %v1023, %v1021
          %v1066 = vpack.c.b16 %v1026, %v1024
          %v1067 = vpack.c.b16 %v1027, %v1025
          %v1068 = vpack.c.b16 %v1030, %v1028
          %v1069 = vpack.c.b16 %v1031, %v1029
          %v1070 = vpack.c.b16 %v1034, %v1032
          %v1071 = vpack.c.b16 %v1035, %v1033
          %v1072 = vpack.c.b16 %v1038, %v1036
          %v1073 = vpack.c.b16 %v1039, %v1037
          %v1074 = vpack.c.b16 %v1042, %v1040
          %v1075 = vpack.c.b16 %v1043, %v1041
          %1108 = vmatprep.subr.bf16.mxu0 %v1045
          %1109 = vmatpush1.bf16.msra.mxu0 %v1044
          %1110 = vmatprep.subr.bf16.mxu0 %v1047
          %1111 = vmatpush1.bf16.msra.mxu0 %v1046
          %1112 = vmatprep.subr.bf16.mxu0 %v1049
          %1113 = vmatpush1.bf16.msra.mxu0 %v1048
          %1114 = vmatprep.subr.bf16.mxu0 %v1051
          %1115 = vmatpush1.bf16.msra.mxu0 %v1050
          %1116 = vmatprep.subr.bf16.mxu0 %v1053
          %1117 = vmatpush1.bf16.msra.mxu0 %v1052
          %1118 = vmatprep.subr.bf16.mxu0 %v1055
          %1119 = vmatpush1.bf16.msra.mxu0 %v1054
          %1120 = vmatprep.subr.bf16.mxu0 %v1057
          %1121 = vmatpush1.bf16.msra.mxu0 %v1056
          %1122 = vmatprep.subr.bf16.mxu0 %v1059
          %1123 = vmatpush1.bf16.msra.mxu0 %v1058
          %1124 = vmatprep.subr.bf16.mxu0 %v1061
          %1125 = vmatpush1.bf16.msra.mxu0 %v1060
          %1126 = vmatprep.subr.bf16.mxu0 %v1063
          %1127 = vmatpush1.bf16.msra.mxu0 %v1062
          %1128 = vmatprep.subr.bf16.mxu0 %v1065
          %1129 = vmatpush1.bf16.msra.mxu0 %v1064
          %1130 = vmatprep.subr.bf16.mxu0 %v1067
          %1131 = vmatpush1.bf16.msra.mxu0 %v1066
          %1132 = vmatprep.subr.bf16.mxu0 %v1069
          %1133 = vmatpush1.bf16.msra.mxu0 %v1068
          %1134 = vmatprep.subr.bf16.mxu0 %v1071
          %1135 = vmatpush1.bf16.msra.mxu0 %v1070
          %1136 = vmatprep.subr.bf16.mxu0 %v1073
          %1137 = vmatpush1.bf16.msra.mxu0 %v1072
          %1138 = vmatprep.subr.bf16.mxu0 %v1075
          %1139 = vmatpush1.bf16.msra.mxu0 %v1074
          %1140 = vmatprep.mubr.bf16.mxu0 %v901
          %1141 = vmatmul.mubr.bf16.gmra.mrb[0].mxu0 %v900
          %v1142 = vpop.f32.mrb[0].mxu0
          %v1143 = vadd.f32 0.0, %v1142
          %v1144 = vpop.f32.mrb[0].mxu0
          %v1145 = vadd.f32 0.0, %v1144
          %v1146 = vpop.f32.mrb[0].mxu0
          %v1147 = vadd.f32 0.0, %v1146
          %v1148 = vpop.f32.mrb[0].mxu0
          %v1149 = vadd.f32 0.0, %v1148
          %1150 = vmatprep.mubr.bf16.mxu0 %v903
          %1151 = vmatmul.mubr.bf16.gmra.mrb[0].mxu0 %v902
          %v1152 = vpop.f32.mrb[0].mxu0
          %v1153 = vadd.f32 0.0, %v1152
          %v1154 = vpop.f32.mrb[0].mxu0
          %v1155 = vadd.f32 0.0, %v1154
          %v1156 = vpop.f32.mrb[0].mxu0
          %v1157 = vadd.f32 0.0, %v1156
          %v1158 = vpop.f32.mrb[0].mxu0
          %v1159 = vadd.f32 0.0, %v1158
          %1160 = vmatprep.mubr.bf16.mxu0 %v905
          %1161 = vmatmul.mubr.bf16.gmra.mrb[0].mxu0 %v904
          %v1162 = vpop.f32.mrb[0].mxu0
          %v1163 = vadd.f32 0.0, %v1162
          %v1164 = vpop.f32.mrb[0].mxu0
          %v1165 = vadd.f32 0.0, %v1164
          %v1166 = vpop.f32.mrb[0].mxu0
          %v1167 = vadd.f32 0.0, %v1166
          %v1168 = vpop.f32.mrb[0].mxu0
          %v1169 = vadd.f32 0.0, %v1168
          %1170 = vmatprep.mubr.bf16.mxu0 %v907
          %1171 = vmatmul.mubr.bf16.gmra.mrb[0].mxu0 %v906
          %v1172 = vpop.f32.mrb[0].mxu0
          %v1173 = vadd.f32 0.0, %v1172
          %v1174 = vpop.f32.mrb[0].mxu0
          %v1175 = vadd.f32 0.0, %v1174
          %v1176 = vpop.f32.mrb[0].mxu0
          %v1177 = vadd.f32 0.0, %v1176
          %v1178 = vpop.f32.mrb[0].mxu0
          %v1179 = vadd.f32 0.0, %v1178
          %1180 = vmatprep.mubr.bf16.mxu0 %v909
          %1181 = vmatmul.mubr.bf16.gmra.mrb[0].mxu0 %v908
          %v1182 = vpop.f32.mrb[0].mxu0
          %v1183 = vadd.f32 0.0, %v1182
          %v1184 = vpop.f32.mrb[0].mxu0
          %v1185 = vadd.f32 0.0, %v1184
          %v1186 = vpop.f32.mrb[0].mxu0
          %v1187 = vadd.f32 0.0, %v1186
          %v1188 = vpop.f32.mrb[0].mxu0
          %v1189 = vadd.f32 0.0, %v1188
          %1190 = vmatprep.mubr.bf16.mxu0 %v911
          %1191 = vmatmul.mubr.bf16.gmra.mrb[0].mxu0 %v910
          %v1192 = vpop.f32.mrb[0].mxu0
          %v1193 = vadd.f32 0.0, %v1192
          %v1194 = vpop.f32.mrb[0].mxu0
          %v1195 = vadd.f32 0.0, %v1194
          %v1196 = vpop.f32.mrb[0].mxu0
          %v1197 = vadd.f32 0.0, %v1196
          %v1198 = vpop.f32.mrb[0].mxu0
          %v1199 = vadd.f32 0.0, %v1198
          %1200 = vmatprep.mubr.bf16.mxu0 %v913
          %1201 = vmatmul.mubr.bf16.gmra.mrb[0].mxu0 %v912
          %v1202 = vpop.f32.mrb[0].mxu0
          %v1203 = vadd.f32 0.0, %v1202
          %v1204 = vpop.f32.mrb[0].mxu0
          %v1205 = vadd.f32 0.0, %v1204
          %v1206 = vpop.f32.mrb[0].mxu0
          %v1207 = vadd.f32 0.0, %v1206
          %v1208 = vpop.f32.mrb[0].mxu0
          %v1209 = vadd.f32 0.0, %v1208
          %1210 = vmatprep.mubr.bf16.mxu0 %v915
          %1211 = vmatmul.mubr.bf16.gmra.mrb[0].mxu0 %v914
          %v1212 = vpop.f32.mrb[0].mxu0
          %v1213 = vadd.f32 0.0, %v1212
          %v1214 = vpop.f32.mrb[0].mxu0
          %v1215 = vadd.f32 0.0, %v1214
          %v1216 = vpop.f32.mrb[0].mxu0
          %v1217 = vadd.f32 0.0, %v1216
          %v1218 = vpop.f32.mrb[0].mxu0
          %v1219 = vadd.f32 0.0, %v1218
          %1220 = vdwg.mxu0
          %v1221 = vadd.f32 %v708, %v1143
          %v1222 = vadd.f32 %v709, %v1145
          %v1223 = vadd.f32 %v710, %v1147
          %v1224 = vadd.f32 %v711, %v1149
          %v1225 = vadd.f32 %v712, %v1153
          %v1226 = vadd.f32 %v713, %v1155
          %v1227 = vadd.f32 %v714, %v1157
          %v1228 = vadd.f32 %v715, %v1159
          %v1229 = vadd.f32 %v716, %v1163
          %v1230 = vadd.f32 %v717, %v1165
          %v1231 = vadd.f32 %v718, %v1167
          %v1232 = vadd.f32 %v719, %v1169
          %v1233 = vadd.f32 %v720, %v1173
          %v1234 = vadd.f32 %v721, %v1175
          %v1235 = vadd.f32 %v722, %v1177
          %v1236 = vadd.f32 %v723, %v1179
          %v1237 = vadd.f32 %v724, %v1183
          %v1238 = vadd.f32 %v725, %v1185
          %v1239 = vadd.f32 %v726, %v1187
          %v1240 = vadd.f32 %v727, %v1189
          %v1241 = vadd.f32 %v728, %v1193
          %v1242 = vadd.f32 %v729, %v1195
          %v1243 = vadd.f32 %v730, %v1197
          %v1244 = vadd.f32 %v731, %v1199
          %v1245 = vadd.f32 %v732, %v1203
          %v1246 = vadd.f32 %v733, %v1205
          %v1247 = vadd.f32 %v734, %v1207
          %v1248 = vadd.f32 %v735, %v1209
          %v1249 = vadd.f32 %v736, %v1213
          %v1250 = vadd.f32 %v737, %v1215
          %v1251 = vadd.f32 %v738, %v1217
          %v1252 = vadd.f32 %v739, %v1219
          %v1253 = vadd.f32 %v1221, %v1222
          %1254 = vadd.xlane.f32.xlu0 %v1253
          %v1255 = vpop.xlane.xlu0 %1254
          %v1256 = vadd.f32 %v1223, %v1224
          %1257 = vadd.xlane.f32.xlu0 %v1256
          %v1258 = vpop.xlane.xlu0 %1257
          %v1259 = vadd.f32 %v1225, %v1226
          %1260 = vadd.xlane.f32.xlu0 %v1259
          %v1261 = vpop.xlane.xlu0 %1260
          %v1262 = vadd.f32 %v1227, %v1228
          %1263 = vadd.xlane.f32.xlu0 %v1262
          %v1264 = vpop.xlane.xlu0 %1263
          %v1265 = vadd.f32 %v1229, %v1230
          %1266 = vadd.xlane.f32.xlu0 %v1265
          %v1267 = vpop.xlane.xlu0 %1266
          %v1268 = vadd.f32 %v1231, %v1232
          %1269 = vadd.xlane.f32.xlu0 %v1268
          %v1270 = vpop.xlane.xlu0 %1269
          %v1271 = vadd.f32 %v1233, %v1234
          %1272 = vadd.xlane.f32.xlu0 %v1271
          %v1273 = vpop.xlane.xlu0 %1272
          %v1274 = vadd.f32 %v1235, %v1236
          %1275 = vadd.xlane.f32.xlu0 %v1274
          %v1276 = vpop.xlane.xlu0 %1275
          %v1277 = vadd.f32 %v1237, %v1238
          %1278 = vadd.xlane.f32.xlu0 %v1277
          %v1279 = vpop.xlane.xlu0 %1278
          %v1280 = vadd.f32 %v1239, %v1240
          %1281 = vadd.xlane.f32.xlu0 %v1280
          %v1282 = vpop.xlane.xlu0 %1281
          %v1283 = vadd.f32 %v1241, %v1242
          %1284 = vadd.xlane.f32.xlu0 %v1283
          %v1285 = vpop.xlane.xlu0 %1284
          %v1286 = vadd.f32 %v1243, %v1244
          %1287 = vadd.xlane.f32.xlu0 %v1286
          %v1288 = vpop.xlane.xlu0 %1287
          %v1289 = vadd.f32 %v1245, %v1246
          %1290 = vadd.xlane.f32.xlu0 %v1289
          %v1291 = vpop.xlane.xlu0 %1290
          %v1292 = vadd.f32 %v1247, %v1248
          %1293 = vadd.xlane.f32.xlu0 %v1292
          %v1294 = vpop.xlane.xlu0 %1293
          %v1295 = vadd.f32 %v1249, %v1250
          %1296 = vadd.xlane.f32.xlu0 %v1295
          %v1297 = vpop.xlane.xlu0 %1296
          %v1298 = vadd.f32 %v1251, %v1252
          %1299 = vadd.xlane.f32.xlu0 %v1298
          %v1300 = vpop.xlane.xlu0 %1299
          %v1301 = vmul.f32 %v1255, 0.00390625
          %v1302 = vmul.f32 %v1258, 0.00390625
          %v1303 = vmul.f32 %v1261, 0.00390625
          %v1304 = vmul.f32 %v1264, 0.00390625
          %v1305 = vmul.f32 %v1267, 0.00390625
          %v1306 = vmul.f32 %v1270, 0.00390625
          %v1307 = vmul.f32 %v1273, 0.00390625
          %v1308 = vmul.f32 %v1276, 0.00390625
          %v1309 = vmul.f32 %v1279, 0.00390625
          %v1310 = vmul.f32 %v1282, 0.00390625
          %v1311 = vmul.f32 %v1285, 0.00390625
          %v1312 = vmul.f32 %v1288, 0.00390625
          %v1313 = vmul.f32 %v1291, 0.00390625
          %v1314 = vmul.f32 %v1294, 0.00390625
          %v1315 = vmul.f32 %v1297, 0.00390625
          %v1316 = vmul.f32 %v1300, 0.00390625
          %v1317 = vsub.f32 %v1221, %v1301
          %v1318 = vsub.f32 %v1222, %v1301
          %v1319 = vsub.f32 %v1223, %v1302
          %v1320 = vsub.f32 %v1224, %v1302
          %v1321 = vsub.f32 %v1225, %v1303
          %v1322 = vsub.f32 %v1226, %v1303
          %v1323 = vsub.f32 %v1227, %v1304
          %v1324 = vsub.f32 %v1228, %v1304
          %v1325 = vsub.f32 %v1229, %v1305
          %v1326 = vsub.f32 %v1230, %v1305
          %v1327 = vsub.f32 %v1231, %v1306
          %v1328 = vsub.f32 %v1232, %v1306
          %v1329 = vsub.f32 %v1233, %v1307
          %v1330 = vsub.f32 %v1234, %v1307
          %v1331 = vsub.f32 %v1235, %v1308
          %v1332 = vsub.f32 %v1236, %v1308
          %v1333 = vsub.f32 %v1237, %v1309
          %v1334 = vsub.f32 %v1238, %v1309
          %v1335 = vsub.f32 %v1239, %v1310
          %v1336 = vsub.f32 %v1240, %v1310
          %v1337 = vsub.f32 %v1241, %v1311
          %v1338 = vsub.f32 %v1242, %v1311
          %v1339 = vsub.f32 %v1243, %v1312
          %v1340 = vsub.f32 %v1244, %v1312
          %v1341 = vsub.f32 %v1245, %v1313
          %v1342 = vsub.f32 %v1246, %v1313
          %v1343 = vsub.f32 %v1247, %v1314
          %v1344 = vsub.f32 %v1248, %v1314
          %v1345 = vsub.f32 %v1249, %v1315
          %v1346 = vsub.f32 %v1250, %v1315
          %v1347 = vsub.f32 %v1251, %v1316
          %v1348 = vsub.f32 %v1252, %v1316
          %v1349 = vmul.f32 %v1317, %v1317
          %v1350 = vmul.f32 %v1318, %v1318
          %v1351 = vmul.f32 %v1319, %v1319
          %v1352 = vmul.f32 %v1320, %v1320
          %v1353 = vmul.f32 %v1321, %v1321
          %v1354 = vmul.f32 %v1322, %v1322
          %v1355 = vmul.f32 %v1323, %v1323
          %v1356 = vmul.f32 %v1324, %v1324
          %v1357 = vmul.f32 %v1325, %v1325
          %v1358 = vmul.f32 %v1326, %v1326
          %v1359 = vmul.f32 %v1327, %v1327
          %v1360 = vmul.f32 %v1328, %v1328
          %v1361 = vmul.f32 %v1329, %v1329
          %v1362 = vmul.f32 %v1330, %v1330
          %v1363 = vmul.f32 %v1331, %v1331
          %v1364 = vmul.f32 %v1332, %v1332
          %v1365 = vmul.f32 %v1333, %v1333
          %v1366 = vmul.f32 %v1334, %v1334
          %v1367 = vmul.f32 %v1335, %v1335
          %v1368 = vmul.f32 %v1336, %v1336
          %v1369 = vmul.f32 %v1337, %v1337
          %v1370 = vmul.f32 %v1338, %v1338
          %v1371 = vmul.f32 %v1339, %v1339
          %v1372 = vmul.f32 %v1340, %v1340
          %v1373 = vmul.f32 %v1341, %v1341
          %v1374 = vmul.f32 %v1342, %v1342
          %v1375 = vmul.f32 %v1343, %v1343
          %v1376 = vmul.f32 %v1344, %v1344
          %v1377 = vmul.f32 %v1345, %v1345
          %v1378 = vmul.f32 %v1346, %v1346
          %v1379 = vmul.f32 %v1347, %v1347
          %v1380 = vmul.f32 %v1348, %v1348
          %v1381 = vadd.f32 %v1349, %v1350
          %1382 = vadd.xlane.f32.xlu0 %v1381
          %v1383 = vpop.xlane.xlu0 %1382
          %v1384 = vadd.f32 %v1351, %v1352
          %1385 = vadd.xlane.f32.xlu0 %v1384
          %v1386 = vpop.xlane.xlu0 %1385
          %v1387 = vadd.f32 %v1353, %v1354
          %1388 = vadd.xlane.f32.xlu0 %v1387
          %v1389 = vpop.xlane.xlu0 %1388
          %v1390 = vadd.f32 %v1355, %v1356
          %1391 = vadd.xlane.f32.xlu0 %v1390
          %v1392 = vpop.xlane.xlu0 %1391
          %v1393 = vadd.f32 %v1357, %v1358
          %1394 = vadd.xlane.f32.xlu0 %v1393
          %v1395 = vpop.xlane.xlu0 %1394
          %v1396 = vadd.f32 %v1359, %v1360
          %1397 = vadd.xlane.f32.xlu0 %v1396
          %v1398 = vpop.xlane.xlu0 %1397
          %v1399 = vadd.f32 %v1361, %v1362
          %1400 = vadd.xlane.f32.xlu0 %v1399
          %v1401 = vpop.xlane.xlu0 %1400
          %v1402 = vadd.f32 %v1363, %v1364
          %1403 = vadd.xlane.f32.xlu0 %v1402
          %v1404 = vpop.xlane.xlu0 %1403
          %v1405 = vadd.f32 %v1365, %v1366
          %1406 = vadd.xlane.f32.xlu0 %v1405
          %v1407 = vpop.xlane.xlu0 %1406
          %v1408 = vadd.f32 %v1367, %v1368
          %1409 = vadd.xlane.f32.xlu0 %v1408
          %v1410 = vpop.xlane.xlu0 %1409
          %v1411 = vadd.f32 %v1369, %v1370
          %1412 = vadd.xlane.f32.xlu0 %v1411
          %v1413 = vpop.xlane.xlu0 %1412
          %v1414 = vadd.f32 %v1371, %v1372
          %1415 = vadd.xlane.f32.xlu0 %v1414
          %v1416 = vpop.xlane.xlu0 %1415
          %v1417 = vadd.f32 %v1373, %v1374
          %1418 = vadd.xlane.f32.xlu0 %v1417
          %v1419 = vpop.xlane.xlu0 %1418
          %v1420 = vadd.f32 %v1375, %v1376
          %1421 = vadd.xlane.f32.xlu0 %v1420
          %v1422 = vpop.xlane.xlu0 %1421
          %v1423 = vadd.f32 %v1377, %v1378
          %1424 = vadd.xlane.f32.xlu0 %v1423
          %v1425 = vpop.xlane.xlu0 %1424
          %v1426 = vadd.f32 %v1379, %v1380
          %1427 = vadd.xlane.f32.xlu0 %v1426
          %v1428 = vpop.xlane.xlu0 %1427
          %v1429 = vmul.f32 %v1301, %v1301
          %v1430 = vmul.f32 %v1302, %v1302
          %v1431 = vmul.f32 %v1303, %v1303
          %v1432 = vmul.f32 %v1304, %v1304
          %v1433 = vmul.f32 %v1305, %v1305
          %v1434 = vmul.f32 %v1306, %v1306
          %v1435 = vmul.f32 %v1307, %v1307
          %v1436 = vmul.f32 %v1308, %v1308
          %v1437 = vmul.f32 %v1309, %v1309
          %v1438 = vmul.f32 %v1310, %v1310
          %v1439 = vmul.f32 %v1311, %v1311
          %v1440 = vmul.f32 %v1312, %v1312
          %v1441 = vmul.f32 %v1313, %v1313
          %v1442 = vmul.f32 %v1314, %v1314
          %v1443 = vmul.f32 %v1315, %v1315
          %v1444 = vmul.f32 %v1316, %v1316
          %v1445 = vmul.f32 %v1429, 0.0
          %v1446 = vmul.f32 %v1430, 0.0
          %v1447 = vmul.f32 %v1431, 0.0
          %v1448 = vmul.f32 %v1432, 0.0
          %v1449 = vmul.f32 %v1433, 0.0
          %v1450 = vmul.f32 %v1434, 0.0
          %v1451 = vmul.f32 %v1435, 0.0
          %v1452 = vmul.f32 %v1436, 0.0
          %v1453 = vmul.f32 %v1437, 0.0
          %v1454 = vmul.f32 %v1438, 0.0
          %v1455 = vmul.f32 %v1439, 0.0
          %v1456 = vmul.f32 %v1440, 0.0
          %v1457 = vmul.f32 %v1441, 0.0
          %v1458 = vmul.f32 %v1442, 0.0
          %v1459 = vmul.f32 %v1443, 0.0
          %v1460 = vmul.f32 %v1444, 0.0
          %v1461 = vsub.f32 %v1383, %v1445
          %v1462 = vsub.f32 %v1386, %v1446
          %v1463 = vsub.f32 %v1389, %v1447
          %v1464 = vsub.f32 %v1392, %v1448
          %v1465 = vsub.f32 %v1395, %v1449
          %v1466 = vsub.f32 %v1398, %v1450
          %v1467 = vsub.f32 %v1401, %v1451
          %v1468 = vsub.f32 %v1404, %v1452
          %v1469 = vsub.f32 %v1407, %v1453
          %v1470 = vsub.f32 %v1410, %v1454
          %v1471 = vsub.f32 %v1413, %v1455
          %v1472 = vsub.f32 %v1416, %v1456
          %v1473 = vsub.f32 %v1419, %v1457
          %v1474 = vsub.f32 %v1422, %v1458
          %v1475 = vsub.f32 %v1425, %v1459
          %v1476 = vsub.f32 %v1428, %v1460
          %v1477 = vmul.f32 %v1461, 0.00390625
          %v1478 = vmul.f32 %v1462, 0.00390625
          %v1479 = vmul.f32 %v1463, 0.00390625
          %v1480 = vmul.f32 %v1464, 0.00390625
          %v1481 = vmul.f32 %v1465, 0.00390625
          %v1482 = vmul.f32 %v1466, 0.00390625
          %v1483 = vmul.f32 %v1467, 0.00390625
          %v1484 = vmul.f32 %v1468, 0.00390625
          %v1485 = vmul.f32 %v1469, 0.00390625
          %v1486 = vmul.f32 %v1470, 0.00390625
          %v1487 = vmul.f32 %v1471, 0.00390625
          %v1488 = vmul.f32 %v1472, 0.00390625
          %v1489 = vmul.f32 %v1473, 0.00390625
          %v1490 = vmul.f32 %v1474, 0.00390625
          %v1491 = vmul.f32 %v1475, 0.00390625
          %v1492 = vmul.f32 %v1476, 0.00390625
          %v1493 = vmax.f32 %v1477, 0.0
          %v1494 = vmax.f32 %v1478, 0.0
          %v1495 = vmax.f32 %v1479, 0.0
          %v1496 = vmax.f32 %v1480, 0.0
          %v1497 = vmax.f32 %v1481, 0.0
          %v1498 = vmax.f32 %v1482, 0.0
          %v1499 = vmax.f32 %v1483, 0.0
          %v1500 = vmax.f32 %v1484, 0.0
          %v1501 = vmax.f32 %v1485, 0.0
          %v1502 = vmax.f32 %v1486, 0.0
          %v1503 = vmax.f32 %v1487, 0.0
          %v1504 = vmax.f32 %v1488, 0.0
          %v1505 = vmax.f32 %v1489, 0.0
          %v1506 = vmax.f32 %v1490, 0.0
          %v1507 = vmax.f32 %v1491, 0.0
          %v1508 = vmax.f32 %v1492, 0.0
          %v1509 = vadd.f32 %v1493, 1e-05
          %v1510 = vadd.f32 %v1494, 1e-05
          %v1511 = vadd.f32 %v1495, 1e-05
          %v1512 = vadd.f32 %v1496, 1e-05
          %v1513 = vadd.f32 %v1497, 1e-05
          %v1514 = vadd.f32 %v1498, 1e-05
          %v1515 = vadd.f32 %v1499, 1e-05
          %v1516 = vadd.f32 %v1500, 1e-05
          %v1517 = vadd.f32 %v1501, 1e-05
          %v1518 = vadd.f32 %v1502, 1e-05
          %v1519 = vadd.f32 %v1503, 1e-05
          %v1520 = vadd.f32 %v1504, 1e-05
          %v1521 = vadd.f32 %v1505, 1e-05
          %v1522 = vadd.f32 %v1506, 1e-05
          %v1523 = vadd.f32 %v1507, 1e-05
          %v1524 = vadd.f32 %v1508, 1e-05
          %v1525 = vrsqrt.pop %v1509
          %v1526 = vrsqrt.pop %v1510
          %v1527 = vrsqrt.pop %v1511
          %v1528 = vrsqrt.pop %v1512
          %v1529 = vrsqrt.pop %v1513
          %v1530 = vrsqrt.pop %v1514
          %v1531 = vrsqrt.pop %v1515
          %v1532 = vrsqrt.pop %v1516
          %v1533 = vrsqrt.pop %v1517
          %v1534 = vrsqrt.pop %v1518
          %v1535 = vrsqrt.pop %v1519
          %v1536 = vrsqrt.pop %v1520
          %v1537 = vrsqrt.pop %v1521
          %v1538 = vrsqrt.pop %v1522
          %v1539 = vrsqrt.pop %v1523
          %v1540 = vrsqrt.pop %v1524
          %v1541 = vmul.f32 %v1317, %v1525
          %v1542 = vmul.f32 %v1318, %v1525
          %v1543 = vmul.f32 %v1319, %v1526
          %v1544 = vmul.f32 %v1320, %v1526
          %v1545 = vmul.f32 %v1321, %v1527
          %v1546 = vmul.f32 %v1322, %v1527
          %v1547 = vmul.f32 %v1323, %v1528
          %v1548 = vmul.f32 %v1324, %v1528
          %v1549 = vmul.f32 %v1325, %v1529
          %v1550 = vmul.f32 %v1326, %v1529
          %v1551 = vmul.f32 %v1327, %v1530
          %v1552 = vmul.f32 %v1328, %v1530
          %v1553 = vmul.f32 %v1329, %v1531
          %v1554 = vmul.f32 %v1330, %v1531
          %v1555 = vmul.f32 %v1331, %v1532
          %v1556 = vmul.f32 %v1332, %v1532
          %v1557 = vmul.f32 %v1333, %v1533
          %v1558 = vmul.f32 %v1334, %v1533
          %v1559 = vmul.f32 %v1335, %v1534
          %v1560 = vmul.f32 %v1336, %v1534
          %v1561 = vmul.f32 %v1337, %v1535
          %v1562 = vmul.f32 %v1338, %v1535
          %v1563 = vmul.f32 %v1339, %v1536
          %v1564 = vmul.f32 %v1340, %v1536
          %v1565 = vmul.f32 %v1341, %v1537
          %v1566 = vmul.f32 %v1342, %v1537
          %v1567 = vmul.f32 %v1343, %v1538
          %v1568 = vmul.f32 %v1344, %v1538
          %v1569 = vmul.f32 %v1345, %v1539
          %v1570 = vmul.f32 %v1346, %v1539
          %v1571 = vmul.f32 %v1347, %v1540
          %v1572 = vmul.f32 %v1348, %v1540
          %v1573 = vld [vmem:[%s3] sm:$0x3]
          %v1575 = vlaneseq
          %v1576 = vshrl.u32 %v1575, 7
          %v1577 = vsub.s32 0, %v1576
          %v1578 = vrot.slane %v1573, %v1577
          %v1579 = vlaneseq
          %v1580 = vshrl.u32 %v1579, 7
          %v1581 = vsub.s32 1, %v1580
          %v1582 = vrot.slane %v1573, %v1581
          %v1585 = vmul.f32 %v1541, %v1578
          %v1586 = vmul.f32 %v1542, %v1582
          %v1587 = vmul.f32 %v1543, %v1578
          %v1588 = vmul.f32 %v1544, %v1582
          %v1589 = vmul.f32 %v1545, %v1578
          %v1590 = vmul.f32 %v1546, %v1582
          %v1591 = vmul.f32 %v1547, %v1578
          %v1592 = vmul.f32 %v1548, %v1582
          %v1593 = vmul.f32 %v1549, %v1578
          %v1594 = vmul.f32 %v1550, %v1582
          %v1595 = vmul.f32 %v1551, %v1578
          %v1596 = vmul.f32 %v1552, %v1582
          %v1597 = vmul.f32 %v1553, %v1578
          %v1598 = vmul.f32 %v1554, %v1582
          %v1599 = vmul.f32 %v1555, %v1578
          %v1600 = vmul.f32 %v1556, %v1582
          %v1601 = vmul.f32 %v1557, %v1578
          %v1602 = vmul.f32 %v1558, %v1582
          %v1603 = vmul.f32 %v1559, %v1578
          %v1604 = vmul.f32 %v1560, %v1582
          %v1605 = vmul.f32 %v1561, %v1578
          %v1606 = vmul.f32 %v1562, %v1582
          %v1607 = vmul.f32 %v1563, %v1578
          %v1608 = vmul.f32 %v1564, %v1582
          %v1609 = vmul.f32 %v1565, %v1578
          %v1610 = vmul.f32 %v1566, %v1582
          %v1611 = vmul.f32 %v1567, %v1578
          %v1612 = vmul.f32 %v1568, %v1582
          %v1613 = vmul.f32 %v1569, %v1578
          %v1614 = vmul.f32 %v1570, %v1582
          %v1615 = vmul.f32 %v1571, %v1578
          %v1616 = vmul.f32 %v1572, %v1582
          %v1617 = vld [vmem:[%s4] sm:$0x3]
          %v1619 = vlaneseq
          %v1620 = vshrl.u32 %v1619, 7
          %v1621 = vsub.s32 0, %v1620
          %v1622 = vrot.slane %v1617, %v1621
          %v1623 = vlaneseq
          %v1624 = vshrl.u32 %v1623, 7
          %v1625 = vsub.s32 1, %v1624
          %v1626 = vrot.slane %v1617, %v1625
          %v1629 = vadd.f32 %v1585, %v1622
          %v1630 = vadd.f32 %v1586, %v1626
          %v1631 = vadd.f32 %v1587, %v1622
          %v1632 = vadd.f32 %v1588, %v1626
          %v1633 = vadd.f32 %v1589, %v1622
          %v1634 = vadd.f32 %v1590, %v1626
          %v1635 = vadd.f32 %v1591, %v1622
          %v1636 = vadd.f32 %v1592, %v1626
          %v1637 = vadd.f32 %v1593, %v1622
          %v1638 = vadd.f32 %v1594, %v1626
          %v1639 = vadd.f32 %v1595, %v1622
          %v1640 = vadd.f32 %v1596, %v1626
          %v1641 = vadd.f32 %v1597, %v1622
          %v1642 = vadd.f32 %v1598, %v1626
          %v1643 = vadd.f32 %v1599, %v1622
          %v1644 = vadd.f32 %v1600, %v1626
          %v1645 = vadd.f32 %v1601, %v1622
          %v1646 = vadd.f32 %v1602, %v1626
          %v1647 = vadd.f32 %v1603, %v1622
          %v1648 = vadd.f32 %v1604, %v1626
          %v1649 = vadd.f32 %v1605, %v1622
          %v1650 = vadd.f32 %v1606, %v1626
          %v1651 = vadd.f32 %v1607, %v1622
          %v1652 = vadd.f32 %v1608, %v1626
          %v1653 = vadd.f32 %v1609, %v1622
          %v1654 = vadd.f32 %v1610, %v1626
          %v1655 = vadd.f32 %v1611, %v1622
          %v1656 = vadd.f32 %v1612, %v1626
          %v1657 = vadd.f32 %v1613, %v1622
          %v1658 = vadd.f32 %v1614, %v1626
          %v1659 = vadd.f32 %v1615, %v1622
          %v1660 = vadd.f32 %v1616, %v1626
          %v1661 = vpack.c.bf16 %v1631, %v1629
          %v1662 = vpack.c.bf16 %v1632, %v1630
          %v1663 = vpack.c.bf16 %v1635, %v1633
          %v1664 = vpack.c.bf16 %v1636, %v1634
          %v1665 = vpack.c.bf16 %v1639, %v1637
          %v1666 = vpack.c.bf16 %v1640, %v1638
          %v1667 = vpack.c.bf16 %v1643, %v1641
          %v1668 = vpack.c.bf16 %v1644, %v1642
          %v1669 = vpack.c.bf16 %v1647, %v1645
          %v1670 = vpack.c.bf16 %v1648, %v1646
          %v1671 = vpack.c.bf16 %v1651, %v1649
          %v1672 = vpack.c.bf16 %v1652, %v1650
          %v1673 = vpack.c.bf16 %v1655, %v1653
          %v1674 = vpack.c.bf16 %v1656, %v1654
          %v1675 = vpack.c.bf16 %v1659, %v1657
          %v1676 = vpack.c.bf16 %v1660, %v1658
          %v1693 = vunpack.c.l.b16 %v1661
          %v1694 = vunpack.c.l.b16 %v1662
          %v1695 = vunpack.c.h.b16 %v1661
          %v1696 = vunpack.c.h.b16 %v1662
          %v1697 = vunpack.c.l.b16 %v1663
          %v1698 = vunpack.c.l.b16 %v1664
          %v1699 = vunpack.c.h.b16 %v1663
          %v1700 = vunpack.c.h.b16 %v1664
          %v1701 = vunpack.c.l.b16 %v1665
          %v1702 = vunpack.c.l.b16 %v1666
          %v1703 = vunpack.c.h.b16 %v1665
          %v1704 = vunpack.c.h.b16 %v1666
          %v1705 = vunpack.c.l.b16 %v1667
          %v1706 = vunpack.c.l.b16 %v1668
          %v1707 = vunpack.c.h.b16 %v1667
          %v1708 = vunpack.c.h.b16 %v1668
          %v1709 = vunpack.c.l.b16 %v1669
          %v1710 = vunpack.c.l.b16 %v1670
          %v1711 = vunpack.c.h.b16 %v1669
          %v1712 = vunpack.c.h.b16 %v1670
          %v1713 = vunpack.c.l.b16 %v1671
          %v1714 = vunpack.c.l.b16 %v1672
          %v1715 = vunpack.c.h.b16 %v1671
          %v1716 = vunpack.c.h.b16 %v1672
          %v1717 = vunpack.c.l.b16 %v1673
          %v1718 = vunpack.c.l.b16 %v1674
          %v1719 = vunpack.c.h.b16 %v1673
          %v1720 = vunpack.c.h.b16 %v1674
          %v1721 = vunpack.c.l.b16 %v1675
          %v1722 = vunpack.c.l.b16 %v1676
          %v1723 = vunpack.c.h.b16 %v1675
          %v1724 = vunpack.c.h.b16 %v1676
          %v1725 = vpack.c.b16 %v1694, %v1693
          %v1726 = vpack.c.b16 %v1696, %v1695
          %v1727 = vpack.c.b16 %v1698, %v1697
          %v1728 = vpack.c.b16 %v1700, %v1699
          %v1729 = vpack.c.b16 %v1702, %v1701
          %v1730 = vpack.c.b16 %v1704, %v1703
          %v1731 = vpack.c.b16 %v1706, %v1705
          %v1732 = vpack.c.b16 %v1708, %v1707
          %v1733 = vpack.c.b16 %v1710, %v1709
          %v1734 = vpack.c.b16 %v1712, %v1711
          %v1735 = vpack.c.b16 %v1714, %v1713
          %v1736 = vpack.c.b16 %v1716, %v1715
          %v1737 = vpack.c.b16 %v1718, %v1717
          %v1738 = vpack.c.b16 %v1720, %v1719
          %v1739 = vpack.c.b16 %v1722, %v1721
          %v1740 = vpack.c.b16 %v1724, %v1723
          %1757 = vst [vmem:[%s295] sm:$0xff] %v1725
          %1758 = vst [vmem:[%s295 + $0x8] sm:$0xff] %v1726
          %1759 = vst [vmem:[%s295 + $0x10] sm:$0xff] %v1727
          %1760 = vst [vmem:[%s295 + $0x18] sm:$0xff] %v1728
          %1761 = vst [vmem:[%s295 + $0x20] sm:$0xff] %v1729
          %1762 = vst [vmem:[%s295 + $0x28] sm:$0xff] %v1730
          %1763 = vst [vmem:[%s295 + $0x30] sm:$0xff] %v1731
          %1764 = vst [vmem:[%s295 + $0x38] sm:$0xff] %v1732
          %1765 = vst [vmem:[%s295 + $0x40] sm:$0xff] %v1733
          %1766 = vst [vmem:[%s295 + $0x48] sm:$0xff] %v1734
          %1767 = vst [vmem:[%s295 + $0x50] sm:$0xff] %v1735
          %1768 = vst [vmem:[%s295 + $0x58] sm:$0xff] %v1736
          %1769 = vst [vmem:[%s295 + $0x60] sm:$0xff] %v1737
          %1770 = vst [vmem:[%s295 + $0x68] sm:$0xff] %v1738
          %1771 = vst [vmem:[%s295 + $0x70] sm:$0xff] %v1739
          %1772 = vst [vmem:[%s295 + $0x78] sm:$0xff] %v1740
        $region60: #{tpu_custom_call.1} parent=39 // pred_fallthru
          _
        %s1773 = sand.u32 %s160, 1
        %s1774 = scalar_lea.sflag [#allocation5], %s1773
        %s1775 = sand.u32 %s160, 1
        %s1776 = smul.addr %s1775, 128
        %s1777 = scalar_lea.vmem [#allocation9], %s1776
        // Predicated region
        $region61: #{tpu_custom_call.1} parent=39 // pred_check
          %p1778 = pneg %p170
        $region62: #{tpu_custom_call.1} parent=39 // pred_check_branch
          %1780 = sbr.rel (%p1778) target = $region64
        $region63: #{tpu_custom_call.1} parent=39 // pred_region
          %s1781 = smul.u32 16, %s27
          %s1783 = ssub.s32 2048, 2048
          %1784 = vsyncadd %s1774, %s1783
          %s1785 = smul.addr %s1781, 2
          %s1786 = smul.addr %s1785, 64
          %s1787 = scalar_lea.hbm %s5, %s1786
          %s1788 = sshll.u32 %s1777, 4
          %s1789 = int_to_ptr.vmem [resolvable:$true] %s1788
          %1794 = dma.vmem_to_hbm [thread:$0]  %s1789, 2048, %s1787, %s1774, 128, 128, 8
        $region64: #{tpu_custom_call.1} parent=39 // pred_fallthru
          _
      $region40: #{tpu_custom_call.1} parent=5 // pred_fallthru
        _
      %p1795 = scmp.le.s32.totalorder 2, %s18
      // Predicated region
      $region65: #{tpu_custom_call.1} parent=5 // pred_check
        %p1796 = pneg %p1795
      $region66: #{tpu_custom_call.1} parent=5 // pred_check_branch
        %1798 = sbr.rel (%p1796) target = $region68
      $region67: #{tpu_custom_call.1} parent=5 // pred_region
        %s1799 = ssub.s32 %s18, 2
        // Predicated region
        $region69: #{tpu_custom_call.1} parent=67 // pred_check
          %p1800 = pneg %p176
        $region70: #{tpu_custom_call.1} parent=67 // pred_check_branch
          %1802 = sbr.rel (%p1800) target = $region72
        $region71: #{tpu_custom_call.1} parent=67 // pred_region
          %s1803 = sand.u32 %s161, 1
          %s1804 = scalar_lea.sflag [#allocation5], %s1803
          %s1805 = sand.u32 %s161, 1
          %s1806 = smul.addr %s1805, 128
          %s1807 = scalar_lea.vmem [#allocation9], %s1806
          %1808 = dma.done %s1804, 2048
        $region72: #{tpu_custom_call.1} parent=67 // pred_fallthru
          _
      $region68: #{tpu_custom_call.1} parent=5 // pred_fallthru
        _
    $region6: #{tpu_custom_call.1} parent=1 // loop_footer
      %s22 = sadd.s32 1, %s18
    $region7: #{tpu_custom_call.1} parent=1 // loop_footer_branch
      %17 = sbr.rel target = $region3
    $region8: #{tpu_custom_call.1} parent=1 // loop_exit
      _
    %1809 = vsyncpa [#allocation4], 1
    %s1810 = scalar_lea.sflag [#allocation4], 1
    %1811 = vsyncpa %s1810, 1
    %1812 = vsyncpa [#allocation7], 1
    %1813 = vsyncpa [#allocation5], 1
    %s1814 = scalar_lea.sflag [#allocation5], 1
    %1815 = vsyncpa %s1814, 1

// kernel: tpu_custom_call.1
$region0: #{tpu_custom_call.1}
  #allocation0 [shape = 'u32[]', space=smem, size = 0x4, offset = 0x4, fixed_abs, tag = 'smem constant byte address 0x4 - core index']
  #allocation1 [shape = 'u32[144,128]{1,0:T(1,128)}', space=vmem, size = 0x12000, scoped, tag = 'internal scratch']
  #allocation2 [shape = 'f32[128,256]{1,0:T(8,128)}', space=vmem, size = 0x20000, scoped, tag = 'scratch operand']
  %s0 = inlined_call_operand.hbm [shape: bf16[256,128], index: 0, kind: input, shape index: {}]
  %s1 = inlined_call_operand.hbm [shape: bf16[128,256], index: 1, kind: input, shape index: {}]
  %s2 = inlined_call_operand.hbm [shape: bf16[256,256], index: 2, kind: input, shape index: {}]
  %s3 = inlined_call_operand.vmem [shape: f32[1,256], index: 3, kind: input, shape index: {}]
  %s4 = inlined_call_operand.vmem [shape: f32[1,256], index: 4, kind: input, shape index: {}]
  %s5 = inlined_call_operand.hbm [shape: bf16[256,256], index: 5, kind: output, shape index: {}]
  %s6 = sld [smem:[#allocation0]]
  $region73: #{tpu_custom_call.1} parent=0
    _
  %s8 = ssub.s32 1, %s6
  %s9 = scalar_select 0, %s8, %s6
  $region1: #{tpu_custom_call.1} parent=0
    #allocation3 [shape = 'u8[65536]{0}', space=vmem, size = 0x10000, scoped, tag = 'input window, operand 0']
    #allocation4 [shape = 's32[2]{0}', space=sflag, size = 0x8, scoped, tag = 'scoped memory for tpu_custom_call.1']
    #allocation5 [shape = 's32[2]{0}', space=sflag, size = 0x8, scoped, tag = 'scoped memory for tpu_custom_call.1']
    #allocation6 [shape = 'u8[65536]{0}', space=vmem, size = 0x10000, scoped, tag = 'input window, operand 1, single buffered']
    #allocation7 [shape = 's32[1]{0}', space=sflag, size = 0x4, scoped, tag = 'scoped memory for tpu_custom_call.1']
    #allocation8 [shape = 'u8[131072]{0}', space=vmem, size = 0x20000, scoped, tag = 'input window, operand 2, single buffered']
    #allocation9 [shape = 'u8[131072]{0}', space=vmem, size = 0x20000, scoped, tag = 'output window, operand 0']
    %10 = vsyncpa [#allocation4], 0
    %s11 = scalar_lea.sflag [#allocation4], 1
    %12 = vsyncpa %s11, 0
    %13 = vsyncpa [#allocation7], 0
    %14 = vsyncpa [#allocation5], 0
    %s15 = scalar_lea.sflag [#allocation5], 1
    %16 = vsyncpa %s15, 0
    loop: start=0, step=1, limit=4
    $region2: #{tpu_custom_call.1} parent=1 // loop_pre_header
      _
    $region3: #{tpu_custom_call.1} parent=1 // loop_header
      %s18 = sphi 0, %s22
      %p19 = scmp.ge.s32.totalorder %s18, 4
      %s25 = sphi 0, %s37
      %s26 = sphi 0, %s33
      %s27 = sphi 0, %s25
      %s28 = sphi 0, %s26
      %s29 = sphi 0, %s27
      %s30 = sphi 0, %s28
      %s42 = sphi 0, %s44
      %s45 = sphi 0, %s42
      %s46 = sphi 0, %s45
      %s62 = sphi 0, %s46
      %s68 = sphi 0, %s70
      %s71 = sphi 0, %s68
      %s72 = sphi 0, %s71
      %s88 = sphi 0, %s72
      %s92 = sphi 0, %s92
      %s94 = sphi 0, %s92
      %s95 = sphi 0, %s94
      %s109 = sphi 0, %s95
      %s113 = sphi 0, %s113
      %s115 = sphi 0, %s113
      %s116 = sphi 0, %s115
      %s130 = sphi 0, %s116
      %s134 = sphi 0, %s134
      %s136 = sphi 0, %s134
      %s137 = sphi 0, %s136
      %s151 = sphi 0, %s137
      %s157 = sphi 0, %s159
      %s160 = sphi 0, %s157
      %s161 = sphi 0, %s160
      %s177 = sphi 0, %s161
    $region4: #{tpu_custom_call.1} parent=1 // loop_header_branch
      %21 = sbr.rel (%p19) target = $region8
    $region5: #{tpu_custom_call.1} parent=1 // loop_body
      %s23 = ssub.s32 %s18, 1
      %s24 = ssub.s32 %s18, 2
      %s31 = sadd.s32 1, %s26
      %p32 = scmp.ge.s32.totalorder %s31, 1
      %s33 = scalar_select %p32, 0, %s31
      %s34 = sadd.s32 1, %s25
      %s35 = scalar_select %p32, %s34, %s25
      %p36 = scmp.ge.s32.totalorder %s35, 2
      %s37 = scalar_select %p36, 0, %s35
      %s38 = ssub.s32 %s25, %s37
      %s39 = ssub.s32 %s26, %s33
      %s40 = sor.u32 %s38, %s39
      %p41 = scmp.eq.s32.totalorder %s40, 0
      %s43 = sadd.s32 %s42, 1
      %s44 = scalar_select %p41, %s42, %s43
      %p47 = pneg %p41
      %p48 = scmp.eq.s32.totalorder %s18, 1
      %p49 = por %p47, %p48
      %p50 = scmp.ne.s32.totalorder %s42, %s45
      %p51 = scmp.eq.s32.totalorder %s18, 0
      %p52 = por %p50, %p51
      %p53 = scmp.ne.s32.totalorder %s42, %s45
      %p54 = scmp.eq.s32.totalorder %s23, 1
      %p55 = por %p53, %p54
      %p56 = scmp.ne.s32.totalorder %s45, %s46
      %p57 = scmp.eq.s32.totalorder %s23, 0
      %p58 = por %p56, %p57
      %p59 = scmp.ne.s32.totalorder %s45, %s46
      %p60 = scmp.eq.s32.totalorder %s24, 1
      %p61 = por %p59, %p60
      %p63 = scmp.ne.s32.totalorder %s46, %s62
      %p64 = scmp.eq.s32.totalorder %s24, 0
      %p65 = por %p63, %p64
      %s66 = ssub.s32 %s26, %s33
      %p67 = scmp.eq.s32.totalorder %s66, 0
      %s69 = sadd.s32 %s68, 1
      %s70 = scalar_select %p67, %s68, %s69
      %p73 = pneg %p67
      %p74 = scmp.eq.s32.totalorder %s18, 1
      %p75 = por %p73, %p74
      %p76 = scmp.ne.s32.totalorder %s68, %s71
      %p77 = scmp.eq.s32.totalorder %s18, 0
      %p78 = por %p76, %p77
      %p79 = scmp.ne.s32.totalorder %s68, %s71
      %p80 = scmp.eq.s32.totalorder %s23, 1
      %p81 = por %p79, %p80
      %p82 = scmp.ne.s32.totalorder %s71, %s72
      %p83 = scmp.eq.s32.totalorder %s23, 0
      %p84 = por %p82, %p83
      %p85 = scmp.ne.s32.totalorder %s71, %s72
      %p86 = scmp.eq.s32.totalorder %s24, 1
      %p87 = por %p85, %p86
      %p89 = scmp.ne.s32.totalorder %s72, %s88
      %p90 = scmp.eq.s32.totalorder %s24, 0
      %p91 = por %p89, %p90
      %s93 = sadd.s32 %s92, 1
      %p96 = scmp.eq.s32.totalorder %s18, 1
      %p97 = scmp.ne.s32.totalorder %s92, %s94
      %p98 = scmp.eq.s32.totalorder %s18, 0
      %p99 = por %p97, %p98
      %p100 = scmp.ne.s32.totalorder %s92, %s94
      %p101 = scmp.eq.s32.totalorder %s23, 1
      %p102 = por %p100, %p101
      %p103 = scmp.ne.s32.totalorder %s94, %s95
      %p104 = scmp.eq.s32.totalorder %s23, 0
      %p105 = por %p103, %p104
      %p106 = scmp.ne.s32.totalorder %s94, %s95
      %p107 = scmp.eq.s32.totalorder %s24, 1
      %p108 = por %p106, %p107
      %p110 = scmp.ne.s32.totalorder %s95, %s109
      %p111 = scmp.eq.s32.totalorder %s24, 0
      %p112 = por %p110, %p111
      %s114 = sadd.s32 %s113, 1
      %p117 = scmp.eq.s32.totalorder %s18, 1
      %p118 = scmp.ne.s32.totalorder %s113, %s115
      %p119 = scmp.eq.s32.totalorder %s18, 0
      %p120 = por %p118, %p119
      %p121 = scmp.ne.s32.totalorder %s113, %s115
      %p122 = scmp.eq.s32.totalorder %s23, 1
      %p123 = por %p121, %p122
      %p124 = scmp.ne.s32.totalorder %s115, %s116
      %p125 = scmp.eq.s32.totalorder %s23, 0
      %p126 = por %p124, %p125
      %p127 = scmp.ne.s32.totalorder %s115, %s116
      %p128 = scmp.eq.s32.totalorder %s24, 1
      %p129 = por %p127, %p128
      %p131 = scmp.ne.s32.totalorder %s116, %s130
      %p132 = scmp.eq.s32.totalorder %s24, 0
      %p133 = por %p131, %p132
      %s135 = sadd.s32 %s134, 1
      %p138 = scmp.eq.s32.totalorder %s18, 1
      %p139 = scmp.ne.s32.totalorder %s134, %s136
      %p140 = scmp.eq.s32.totalorder %s18, 0
      %p141 = por %p139, %p140
      %p142 = scmp.ne.s32.totalorder %s134, %s136
      %p143 = scmp.eq.s32.totalorder %s23, 1
      %p144 = por %p142, %p143
      %p145 = scmp.ne.s32.totalorder %s136, %s137
      %p146 = scmp.eq.s32.totalorder %s23, 0
      %p147 = por %p145, %p146
      %p148 = scmp.ne.s32.totalorder %s136, %s137
      %p149 = scmp.eq.s32.totalorder %s24, 1
      %p150 = por %p148, %p149
      %p152 = scmp.ne.s32.totalorder %s137, %s151
      %p153 = scmp.eq.s32.totalorder %s24, 0
      %p154 = por %p152, %p153
      %s155 = ssub.s32 %s25, %s37
      %p156 = scmp.eq.s32.totalorder %s155, 0
      %s158 = sadd.s32 %s157, 1
      %s159 = scalar_select %p156, %s157, %s158
      %p162 = pneg %p156
      %p163 = scmp.eq.s32.totalorder %s18, 1
      %p164 = por %p162, %p163
      %p165 = scmp.ne.s32.totalorder %s157, %s160
      %p166 = scmp.eq.s32.totalorder %s18, 0
      %p167 = por %p165, %p166
      %p168 = scmp.ne.s32.totalorder %s157, %s160
      %p169 = scmp.eq.s32.totalorder %s23, 1
      %p170 = por %p168, %p169
      %p171 = scmp.ne.s32.totalorder %s160, %s161
      %p172 = scmp.eq.s32.totalorder %s23, 0
      %p173 = por %p171, %p172
      %p174 = scmp.ne.s32.totalorder %s160, %s161
      %p175 = scmp.eq.s32.totalorder %s24, 1
      %p176 = por %p174, %p175
      %p178 = scmp.ne.s32.totalorder %s161, %s177
      %p179 = scmp.eq.s32.totalorder %s24, 0
      %p180 = por %p178, %p179
      %p181 = scmp.le.s32.totalorder 1, %s18
      %p182 = scmp.lt.s32.totalorder %s18, 3
      %p183 = pnand %p181, %p182
      %p184 = pneg %p183
      // Predicated region
      $region9: #{tpu_custom_call.1} parent=5 // pred_check
        _
      $region10: #{tpu_custom_call.1} parent=5 // pred_check_branch
        %186 = sbr.rel (%p183) target = $region12
      $region11: #{tpu_custom_call.1} parent=5 // pred_region
        %s187 = ssub.s32 %s18, 1
        // Predicated region
        $region13: #{tpu_custom_call.1} parent=11 // pred_check
          %p188 = pneg %p84
        $region14: #{tpu_custom_call.1} parent=11 // pred_check_branch
          %190 = sbr.rel (%p188) target = $region16
        $region15: #{tpu_custom_call.1} parent=11 // pred_region
          %s191 = smul.u32 16, %s28
          %s193 = ssub.s32 2048, 2048
          %194 = vsyncadd [#allocation7], %s193
          %s195 = smul.addr %s191, 2
          %s196 = smul.addr %s195, 64
          %s197 = scalar_lea.hbm %s1, %s196
          %s198 = sshll.u32 [#allocation6], 4
          %s199 = int_to_ptr.vmem [resolvable:$true] %s198
          %204 = dma.hbm_to_vmem [thread:$0]  %s197, 2048, %s199, [#allocation7], 128, 128, 8
        $region16: #{tpu_custom_call.1} parent=11 // pred_fallthru
          _
        // Predicated region
        $region17: #{tpu_custom_call.1} parent=11 // pred_check
          %p205 = pneg %p105
        $region18: #{tpu_custom_call.1} parent=11 // pred_check_branch
          %207 = sbr.rel (%p205) target = $region20
        $region19: #{tpu_custom_call.1} parent=11 // pred_region
          %s209 = ssub.s32 4096, 4096
          %210 = vsyncadd [#allocation7], %s209
          %s211 = sshll.u32 [#allocation8], 4
          %s212 = int_to_ptr.vmem [resolvable:$true] %s211
          %217 = dma.hbm_to_vmem [thread:$0]  %s2, 4096, %s212, [#allocation7], 128, 128, 8
        $region20: #{tpu_custom_call.1} parent=11 // pred_fallthru
          _
        // Predicated region
        $region21: #{tpu_custom_call.1} parent=11 // pred_check
          %p218 = pneg %p126
        $region22: #{tpu_custom_call.1} parent=11 // pred_check_branch
          %220 = sbr.rel (%p218) target = $region24
        $region23: #{tpu_custom_call.1} parent=11 // pred_region
          _
        $region24: #{tpu_custom_call.1} parent=11 // pred_fallthru
          _
        // Predicated region
        $region25: #{tpu_custom_call.1} parent=11 // pred_check
          %p221 = pneg %p147
        $region26: #{tpu_custom_call.1} parent=11 // pred_check_branch
          %223 = sbr.rel (%p221) target = $region28
        $region27: #{tpu_custom_call.1} parent=11 // pred_region
          _
        $region28: #{tpu_custom_call.1} parent=11 // pred_fallthru
          _
      $region12: #{tpu_custom_call.1} parent=5 // pred_fallthru
        _
      %p224 = scmp.lt.s32.totalorder %s18, 2
      // Predicated region
      $region29: #{tpu_custom_call.1} parent=5 // pred_check
        %p225 = pneg %p224
      $region30: #{tpu_custom_call.1} parent=5 // pred_check_branch
        %227 = sbr.rel (%p225) target = $region32
      $region31: #{tpu_custom_call.1} parent=5 // pred_region
        // Predicated region
        $region33: #{tpu_custom_call.1} parent=31 // pred_check
          %p228 = pneg %p52
        $region34: #{tpu_custom_call.1} parent=31 // pred_check_branch
          %230 = sbr.rel (%p228) target = $region36
        $region35: #{tpu_custom_call.1} parent=31 // pred_region
          %s231 = sand.u32 %s42, 1
          %s232 = scalar_lea.sflag [#allocation4], %s231
          %s233 = sand.u32 %s42, 1
          %s234 = smul.addr %s233, 64
          %s235 = scalar_lea.vmem [#allocation3], %s234
          %s236 = smul.u32 16, %s25
          %s238 = ssub.s32 1024, 1024
          %239 = vsyncadd %s232, %s238
          %s240 = sadd.s32 %s26, %s236
          %s241 = smul.addr %s240, 64
          %s242 = scalar_lea.hbm %s0, %s241
          %s243 = sshll.u32 %s235, 4
          %s244 = int_to_ptr.vmem [resolvable:$true] %s243
          %249 = dma.hbm_to_vmem [thread:$0]  %s242, 1024, %s244, %s232, 64, 64, 4
        $region36: #{tpu_custom_call.1} parent=31 // pred_fallthru
          _
      $region32: #{tpu_custom_call.1} parent=5 // pred_fallthru
        _
      %p250 = scmp.le.s32.totalorder 1, %s18
      %p251 = scmp.lt.s32.totalorder %s18, 3
      %p252 = pnand %p250, %p251
      %p253 = pneg %p252
      // Predicated region
      $region37: #{tpu_custom_call.1} parent=5 // pred_check
        _
      $region38: #{tpu_custom_call.1} parent=5 // pred_check_branch
        %255 = sbr.rel (%p252) target = $region40
      $region39: #{tpu_custom_call.1} parent=5 // pred_region
        %s256 = ssub.s32 %s18, 1
        %s257 = sand.u32 %s45, 1
        %s258 = scalar_lea.sflag [#allocation4], %s257
        %s259 = sand.u32 %s45, 1
        %s260 = smul.addr %s259, 64
        %s261 = scalar_lea.vmem [#allocation3], %s260
        // Predicated region
        $region41: #{tpu_custom_call.1} parent=39 // pred_check
          %p262 = pneg %p58
        $region42: #{tpu_custom_call.1} parent=39 // pred_check_branch
          %264 = sbr.rel (%p262) target = $region44
        $region43: #{tpu_custom_call.1} parent=39 // pred_region
          %265 = dma.done %s258, 1024
        $region44: #{tpu_custom_call.1} parent=39 // pred_fallthru
          _
        // Predicated region
        $region45: #{tpu_custom_call.1} parent=39 // pred_check
          %p266 = pneg %p84
        $region46: #{tpu_custom_call.1} parent=39 // pred_check_branch
          %268 = sbr.rel (%p266) target = $region48
        $region47: #{tpu_custom_call.1} parent=39 // pred_region
          %269 = dma.done [#allocation7], 2048
        $region48: #{tpu_custom_call.1} parent=39 // pred_fallthru
          _
        // Predicated region
        $region49: #{tpu_custom_call.1} parent=39 // pred_check
          %p270 = pneg %p105
        $region50: #{tpu_custom_call.1} parent=39 // pred_check_branch
          %272 = sbr.rel (%p270) target = $region52
        $region51: #{tpu_custom_call.1} parent=39 // pred_region
          %273 = dma.done [#allocation7], 4096
        $region52: #{tpu_custom_call.1} parent=39 // pred_fallthru
          _
        %s274 = sand.u32 %s45, 1
        %s275 = scalar_lea.sflag [#allocation4], %s274
        %s276 = sand.u32 %s45, 1
        %s277 = smul.addr %s276, 64
        %s278 = scalar_lea.vmem [#allocation3], %s277
        %p279 = pneg %p58
        %p280 = pneg %p55
        %p281 = pneg %p84
        %p282 = pneg %p81
        %p283 = pneg %p105
        %p284 = pneg %p102
        %p285 = pneg %p126
        %p286 = pneg %p123
        %p287 = pneg %p147
        %p288 = pneg %p144
        %p289 = pneg %p173
        %p290 = pneg %p170
        %s291 = sand.u32 %s160, 1
        %s292 = scalar_lea.sflag [#allocation5], %s291
        %s293 = sand.u32 %s160, 1
        %s294 = smul.addr %s293, 128
        %s295 = scalar_lea.vmem [#allocation9], %s294
        %s296 = smul.u32 16, %s27
        %s297 = smul.u32 16, %s28
        %s298 = smul.u32 16, %s27
        %p300 = scmp.eq.s32.totalorder %s28, 0
        // Predicated region
        $region53: #{tpu_custom_call.1} parent=39 // pred_check
          %p301 = pneg %p300
        $region54: #{tpu_custom_call.1} parent=39 // pred_check_branch
          %303 = sbr.rel (%p301) target = $region56
        $region55: #{tpu_custom_call.1} parent=39 // pred_region
          %304 = vst [vmem:[#allocation2] sm:$0xff] 0.0
          %305 = vst [vmem:[#allocation2 + $0x8] sm:$0xff] 0.0
          %306 = vst [vmem:[#allocation2 + $0x10] sm:$0xff] 0.0
          %307 = vst [vmem:[#allocation2 + $0x18] sm:$0xff] 0.0
          %308 = vst [vmem:[#allocation2 + $0x20] sm:$0xff] 0.0
          %309 = vst [vmem:[#allocation2 + $0x28] sm:$0xff] 0.0
          %310 = vst [vmem:[#allocation2 + $0x30] sm:$0xff] 0.0
          %311 = vst [vmem:[#allocation2 + $0x38] sm:$0xff] 0.0
          %312 = vst [vmem:[#allocation2 + $0x40] sm:$0xff] 0.0
          %313 = vst [vmem:[#allocation2 + $0x48] sm:$0xff] 0.0
          %314 = vst [vmem:[#allocation2 + $0x50] sm:$0xff] 0.0
          %315 = vst [vmem:[#allocation2 + $0x58] sm:$0xff] 0.0
          %316 = vst [vmem:[#allocation2 + $0x60] sm:$0xff] 0.0
          %317 = vst [vmem:[#allocation2 + $0x68] sm:$0xff] 0.0
          %318 = vst [vmem:[#allocation2 + $0x70] sm:$0xff] 0.0
          %319 = vst [vmem:[#allocation2 + $0x78] sm:$0xff] 0.0
          %320 = vst [vmem:[#allocation2 + $0x80] sm:$0xff] 0.0
          %321 = vst [vmem:[#allocation2 + $0x88] sm:$0xff] 0.0
          %322 = vst [vmem:[#allocation2 + $0x90] sm:$0xff] 0.0
          %323 = vst [vmem:[#allocation2 + $0x98] sm:$0xff] 0.0
          %324 = vst [vmem:[#allocation2 + $0xa0] sm:$0xff] 0.0
          %325 = vst [vmem:[#allocation2 + $0xa8] sm:$0xff] 0.0
          %326 = vst [vmem:[#allocation2 + $0xb0] sm:$0xff] 0.0
          %327 = vst [vmem:[#allocation2 + $0xb8] sm:$0xff] 0.0
          %328 = vst [vmem:[#allocation2 + $0xc0] sm:$0xff] 0.0
          %329 = vst [vmem:[#allocation2 + $0xc8] sm:$0xff] 0.0
          %330 = vst [vmem:[#allocation2 + $0xd0] sm:$0xff] 0.0
          %331 = vst [vmem:[#allocation2 + $0xd8] sm:$0xff] 0.0
          %332 = vst [vmem:[#allocation2 + $0xe0] sm:$0xff] 0.0
          %333 = vst [vmem:[#allocation2 + $0xe8] sm:$0xff] 0.0
          %334 = vst [vmem:[#allocation2 + $0xf0] sm:$0xff] 0.0
          %335 = vst [vmem:[#allocation2 + $0xf8] sm:$0xff] 0.0
        $region56: #{tpu_custom_call.1} parent=39 // pred_fallthru
          _
        %v336 = vld [vmem:[#allocation2] sm:$0xff]
        %v337 = vld [vmem:[#allocation2 + $0x8] sm:$0xff]
        %v338 = vld [vmem:[#allocation2 + $0x10] sm:$0xff]
        %v339 = vld [vmem:[#allocation2 + $0x18] sm:$0xff]
        %v340 = vld [vmem:[#allocation2 + $0x20] sm:$0xff]
        %v341 = vld [vmem:[#allocation2 + $0x28] sm:$0xff]
        %v342 = vld [vmem:[#allocation2 + $0x30] sm:$0xff]
        %v343 = vld [vmem:[#allocation2 + $0x38] sm:$0xff]
        %v344 = vld [vmem:[#allocation2 + $0x40] sm:$0xff]
        %v345 = vld [vmem:[#allocation2 + $0x48] sm:$0xff]
        %v346 = vld [vmem:[#allocation2 + $0x50] sm:$0xff]
        %v347 = vld [vmem:[#allocation2 + $0x58] sm:$0xff]
        %v348 = vld [vmem:[#allocation2 + $0x60] sm:$0xff]
        %v349 = vld [vmem:[#allocation2 + $0x68] sm:$0xff]
        %v350 = vld [vmem:[#allocation2 + $0x70] sm:$0xff]
        %v351 = vld [vmem:[#allocation2 + $0x78] sm:$0xff]
        %v352 = vld [vmem:[#allocation2 + $0x80] sm:$0xff]
        %v353 = vld [vmem:[#allocation2 + $0x88] sm:$0xff]
        %v354 = vld [vmem:[#allocation2 + $0x90] sm:$0xff]
        %v355 = vld [vmem:[#allocation2 + $0x98] sm:$0xff]
        %v356 = vld [vmem:[#allocation2 + $0xa0] sm:$0xff]
        %v357 = vld [vmem:[#allocation2 + $0xa8] sm:$0xff]
        %v358 = vld [vmem:[#allocation2 + $0xb0] sm:$0xff]
        %v359 = vld [vmem:[#allocation2 + $0xb8] sm:$0xff]
        %v360 = vld [vmem:[#allocation2 + $0xc0] sm:$0xff]
        %v361 = vld [vmem:[#allocation2 + $0xc8] sm:$0xff]
        %v362 = vld [vmem:[#allocation2 + $0xd0] sm:$0xff]
        %v363 = vld [vmem:[#allocation2 + $0xd8] sm:$0xff]
        %v364 = vld [vmem:[#allocation2 + $0xe0] sm:$0xff]
        %v365 = vld [vmem:[#allocation2 + $0xe8] sm:$0xff]
        %v366 = vld [vmem:[#allocation2 + $0xf0] sm:$0xff]
        %v367 = vld [vmem:[#allocation2 + $0xf8] sm:$0xff]
        %v368 = vld [vmem:[%s261] sm:$0xf]
        %v369 = vld [vmem:[%s261 + $0x4] sm:$0xf]
        %v370 = vld [vmem:[%s261 + $0x8] sm:$0xf]
        %v371 = vld [vmem:[%s261 + $0xc] sm:$0xf]
        %v372 = vld [vmem:[%s261 + $0x10] sm:$0xf]
        %v373 = vld [vmem:[%s261 + $0x14] sm:$0xf]
        %v374 = vld [vmem:[%s261 + $0x18] sm:$0xf]
        %v375 = vld [vmem:[%s261 + $0x1c] sm:$0xf]
        %v376 = vld [vmem:[%s261 + $0x20] sm:$0xf]
        %v377 = vld [vmem:[%s261 + $0x24] sm:$0xf]
        %v378 = vld [vmem:[%s261 + $0x28] sm:$0xf]
        %v379 = vld [vmem:[%s261 + $0x2c] sm:$0xf]
        %v380 = vld [vmem:[%s261 + $0x30] sm:$0xf]
        %v381 = vld [vmem:[%s261 + $0x34] sm:$0xf]
        %v382 = vld [vmem:[%s261 + $0x38] sm:$0xf]
        %v383 = vld [vmem:[%s261 + $0x3c] sm:$0xf]
        %v384 = vld [vmem:[#allocation6] sm:$0xff]
        %v385 = vld [vmem:[#allocation6 + $0x8] sm:$0xff]
        %v386 = vld [vmem:[#allocation6 + $0x10] sm:$0xff]
        %v387 = vld [vmem:[#allocation6 + $0x18] sm:$0xff]
        %v388 = vld [vmem:[#allocation6 + $0x20] sm:$0xff]
        %v389 = vld [vmem:[#allocation6 + $0x28] sm:$0xff]
        %v390 = vld [vmem:[#allocation6 + $0x30] sm:$0xff]
        %v391 = vld [vmem:[#allocation6 + $0x38] sm:$0xff]
        %v392 = vld [vmem:[#allocation6 + $0x40] sm:$0xff]
        %v393 = vld [vmem:[#allocation6 + $0x48] sm:$0xff]
        %v394 = vld [vmem:[#allocation6 + $0x50] sm:$0xff]
        %v395 = vld [vmem:[#allocation6 + $0x58] sm:$0xff]
        %v396 = vld [vmem:[#allocation6 + $0x60] sm:$0xff]
        %v397 = vld [vmem:[#allocation6 + $0x68] sm:$0xff]
        %v398 = vld [vmem:[#allocation6 + $0x70] sm:$0xff]
        %v399 = vld [vmem:[#allocation6 + $0x78] sm:$0xff]
        %v416 = vunpack.c.l.b16 %v368
        %v417 = vunpack.c.l.b16 %v369
        %v418 = vunpack.c.l.b16 %v370
        %v419 = vunpack.c.l.b16 %v371
        %v420 = vunpack.c.l.b16 %v372
        %v421 = vunpack.c.l.b16 %v373
        %v422 = vunpack.c.l.b16 %v374
        %v423 = vunpack.c.l.b16 %v375
        %v424 = vunpack.c.l.b16 %v376
        %v425 = vunpack.c.l.b16 %v377
        %v426 = vunpack.c.l.b16 %v378
        %v427 = vunpack.c.l.b16 %v379
        %v428 = vunpack.c.l.b16 %v380
        %v429 = vunpack.c.l.b16 %v381
        %v430 = vunpack.c.l.b16 %v382
        %v431 = vunpack.c.l.b16 %v383
        %v432 = vpack.c.b16 %v417, %v416
        %v433 = vpack.c.b16 %v419, %v418
        %v434 = vpack.c.b16 %v421, %v420
        %v435 = vpack.c.b16 %v423, %v422
        %v436 = vpack.c.b16 %v425, %v424
        %v437 = vpack.c.b16 %v427, %v426
        %v438 = vpack.c.b16 %v429, %v428
        %v439 = vpack.c.b16 %v431, %v430
        %v464 = vunpack.c.l.b16 %v384
        %v465 = vunpack.c.h.b16 %v384
        %v466 = vunpack.c.l.b16 %v385
        %v467 = vunpack.c.h.b16 %v385
        %v468 = vunpack.c.l.b16 %v386
        %v469 = vunpack.c.h.b16 %v386
        %v470 = vunpack.c.l.b16 %v387
        %v471 = vunpack.c.h.b16 %v387
        %v472 = vunpack.c.l.b16 %v388
        %v473 = vunpack.c.h.b16 %v388
        %v474 = vunpack.c.l.b16 %v389
        %v475 = vunpack.c.h.b16 %v389
        %v476 = vunpack.c.l.b16 %v390
        %v477 = vunpack.c.h.b16 %v390
        %v478 = vunpack.c.l.b16 %v391
        %v479 = vunpack.c.h.b16 %v391
        %v480 = vunpack.c.l.b16 %v392
        %v481 = vunpack.c.h.b16 %v392
        %v482 = vunpack.c.l.b16 %v393
        %v483 = vunpack.c.h.b16 %v393
        %v484 = vunpack.c.l.b16 %v394
        %v485 = vunpack.c.h.b16 %v394
        %v486 = vunpack.c.l.b16 %v395
        %v487 = vunpack.c.h.b16 %v395
        %v488 = vunpack.c.l.b16 %v396
        %v489 = vunpack.c.h.b16 %v396
        %v490 = vunpack.c.l.b16 %v397
        %v491 = vunpack.c.h.b16 %v397
        %v492 = vunpack.c.l.b16 %v398
        %v493 = vunpack.c.h.b16 %v398
        %v494 = vunpack.c.l.b16 %v399
        %v495 = vunpack.c.h.b16 %v399
        %v496 = vpack.c.b16 %v466, %v464
        %v497 = vpack.c.b16 %v467, %v465
        %v498 = vpack.c.b16 %v470, %v468
        %v499 = vpack.c.b16 %v471, %v469
        %v500 = vpack.c.b16 %v474, %v472
        %v501 = vpack.c.b16 %v475, %v473
        %v502 = vpack.c.b16 %v478, %v476
        %v503 = vpack.c.b16 %v479, %v477
        %v504 = vpack.c.b16 %v482, %v480
        %v505 = vpack.c.b16 %v483, %v481
        %v506 = vpack.c.b16 %v486, %v484
        %v507 = vpack.c.b16 %v487, %v485
        %v508 = vpack.c.b16 %v490, %v488
        %v509 = vpack.c.b16 %v491, %v489
        %v510 = vpack.c.b16 %v494, %v492
        %v511 = vpack.c.b16 %v495, %v493
        %528 = vmatprep.subr.bf16.mxu0 %v497
        %529 = vmatpush1.bf16.msra.mxu0 %v496
        %530 = vmatprep.subr.bf16.mxu0 %v499
        %531 = vmatpush1.bf16.msra.mxu0 %v498
        %532 = vmatprep.subr.bf16.mxu0 %v501
        %533 = vmatpush1.bf16.msra.mxu0 %v500
        %534 = vmatprep.subr.bf16.mxu0 %v503
        %535 = vmatpush1.bf16.msra.mxu0 %v502
        %536 = vmatprep.subr.bf16.mxu0 %v505
        %537 = vmatpush1.bf16.msra.mxu0 %v504
        %538 = vmatprep.subr.bf16.mxu0 %v507
        %539 = vmatpush1.bf16.msra.mxu0 %v506
        %540 = vmatprep.subr.bf16.mxu0 %v509
        %541 = vmatpush1.bf16.msra.mxu0 %v508
        %542 = vmatprep.subr.bf16.mxu0 %v511
        %543 = vmatpush1.bf16.msra.mxu0 %v510
        %544 = vmatprep.subr.bf16.mxu0 0
        %545 = vmatpush1.bf16.msra.mxu0 0
        %546 = vmatprep.subr.bf16.mxu0 0
        %547 = vmatpush1.bf16.msra.mxu0 0
        %548 = vmatprep.subr.bf16.mxu0 0
        %549 = vmatpush1.bf16.msra.mxu0 0
        %550 = vmatprep.subr.bf16.mxu0 0
        %551 = vmatpush1.bf16.msra.mxu0 0
        %552 = vmatprep.subr.bf16.mxu0 0
        %553 = vmatpush1.bf16.msra.mxu0 0
        %554 = vmatprep.subr.bf16.mxu0 0
        %555 = vmatpush1.bf16.msra.mxu0 0
        %556 = vmatprep.subr.bf16.mxu0 0
        %557 = vmatpush1.bf16.msra.mxu0 0
        %558 = vmatprep.subr.bf16.mxu0 0
        %559 = vmatpush1.bf16.msra.mxu0 0
        %560 = vmatprep.mubr.bf16.mxu0 0
        %561 = vmatmul.mubr.bf16.gmra.mrb[0].mxu0 %v432
        %v562 = vpop.f32.mrb[0].mxu0
        %v563 = vadd.f32 0.0, %v562
        %v564 = vpop.f32.mrb[0].mxu0
        %v565 = vadd.f32 0.0, %v564
        %v566 = vpop.f32.mrb[0].mxu0
        %v567 = vadd.f32 0.0, %v566
        %v568 = vpop.f32.mrb[0].mxu0
        %v569 = vadd.f32 0.0, %v568
        %570 = vmatprep.mubr.bf16.mxu0 0
        %571 = vmatmul.mubr.bf16.gmra.mrb[0].mxu0 %v433
        %v572 = vpop.f32.mrb[0].mxu0
        %v573 = vadd.f32 0.0, %v572
        %v574 = vpop.f32.mrb[0].mxu0
        %v575 = vadd.f32 0.0, %v574
        %v576 = vpop.f32.mrb[0].mxu0
        %v577 = vadd.f32 0.0, %v576
        %v578 = vpop.f32.mrb[0].mxu0
        %v579 = vadd.f32 0.0, %v578
        %580 = vmatprep.mubr.bf16.mxu0 0
        %581 = vmatmul.mubr.bf16.gmra.mrb[0].mxu0 %v434
        %v582 = vpop.f32.mrb[0].mxu0
        %v583 = vadd.f32 0.0, %v582
        %v584 = vpop.f32.mrb[0].mxu0
        %v585 = vadd.f32 0.0, %v584
        %v586 = vpop.f32.mrb[0].mxu0
        %v587 = vadd.f32 0.0, %v586
        %v588 = vpop.f32.mrb[0].mxu0
        %v589 = vadd.f32 0.0, %v588
        %590 = vmatprep.mubr.bf16.mxu0 0
        %591 = vmatmul.mubr.bf16.gmra.mrb[0].mxu0 %v435
        %v592 = vpop.f32.mrb[0].mxu0
        %v593 = vadd.f32 0.0, %v592
        %v594 = vpop.f32.mrb[0].mxu0
        %v595 = vadd.f32 0.0, %v594
        %v596 = vpop.f32.mrb[0].mxu0
        %v597 = vadd.f32 0.0, %v596
        %v598 = vpop.f32.mrb[0].mxu0
        %v599 = vadd.f32 0.0, %v598
        %600 = vmatprep.mubr.bf16.mxu0 0
        %601 = vmatmul.mubr.bf16.gmra.mrb[0].mxu0 %v436
        %v602 = vpop.f32.mrb[0].mxu0
        %v603 = vadd.f32 0.0, %v602
        %v604 = vpop.f32.mrb[0].mxu0
        %v605 = vadd.f32 0.0, %v604
        %v606 = vpop.f32.mrb[0].mxu0
        %v607 = vadd.f32 0.0, %v606
        %v608 = vpop.f32.mrb[0].mxu0
        %v609 = vadd.f32 0.0, %v608
        %610 = vmatprep.mubr.bf16.mxu0 0
        %611 = vmatmul.mubr.bf16.gmra.mrb[0].mxu0 %v437
        %v612 = vpop.f32.mrb[0].mxu0
        %v613 = vadd.f32 0.0, %v612
        %v614 = vpop.f32.mrb[0].mxu0
        %v615 = vadd.f32 0.0, %v614
        %v616 = vpop.f32.mrb[0].mxu0
        %v617 = vadd.f32 0.0, %v616
        %v618 = vpop.f32.mrb[0].mxu0
        %v619 = vadd.f32 0.0, %v618
        %620 = vmatprep.mubr.bf16.mxu0 0
        %621 = vmatmul.mubr.bf16.gmra.mrb[0].mxu0 %v438
        %v622 = vpop.f32.mrb[0].mxu0
        %v623 = vadd.f32 0.0, %v622
        %v624 = vpop.f32.mrb[0].mxu0
        %v625 = vadd.f32 0.0, %v624
        %v626 = vpop.f32.mrb[0].mxu0
        %v627 = vadd.f32 0.0, %v626
        %v628 = vpop.f32.mrb[0].mxu0
        %v629 = vadd.f32 0.0, %v628
        %630 = vmatprep.mubr.bf16.mxu0 0
        %631 = vmatmul.mubr.bf16.gmra.mrb[0].mxu0 %v439
        %v632 = vpop.f32.mrb[0].mxu0
        %v633 = vadd.f32 0.0, %v632
        %v634 = vpop.f32.mrb[0].mxu0
        %v635 = vadd.f32 0.0, %v634
        %v636 = vpop.f32.mrb[0].mxu0
        %v637 = vadd.f32 0.0, %v636
        %v638 = vpop.f32.mrb[0].mxu0
        %v639 = vadd.f32 0.0, %v638
        %640 = vdwg.mxu0
        %v641 = vadd.f32 %v336, %v563
        %v642 = vadd.f32 %v337, %v565
        %v643 = vadd.f32 %v338, %v567
        %v644 = vadd.f32 %v339, %v569
        %v645 = vadd.f32 %v340, %v573
        %v646 = vadd.f32 %v341, %v575
        %v647 = vadd.f32 %v342, %v577
        %v648 = vadd.f32 %v343, %v579
        %v649 = vadd.f32 %v344, %v583
        %v650 = vadd.f32 %v345, %v585
        %v651 = vadd.f32 %v346, %v587
        %v652 = vadd.f32 %v347, %v589
        %v653 = vadd.f32 %v348, %v593
        %v654 = vadd.f32 %v349, %v595
        %v655 = vadd.f32 %v350, %v597
        %v656 = vadd.f32 %v351, %v599
        %v657 = vadd.f32 %v352, %v603
        %v658 = vadd.f32 %v353, %v605
        %v659 = vadd.f32 %v354, %v607
        %v660 = vadd.f32 %v355, %v609
        %v661 = vadd.f32 %v356, %v613
        %v662 = vadd.f32 %v357, %v615
        %v663 = vadd.f32 %v358, %v617
        %v664 = vadd.f32 %v359, %v619
        %v665 = vadd.f32 %v360, %v623
        %v666 = vadd.f32 %v361, %v625
        %v667 = vadd.f32 %v362, %v627
        %v668 = vadd.f32 %v363, %v629
        %v669 = vadd.f32 %v364, %v633
        %v670 = vadd.f32 %v365, %v635
        %v671 = vadd.f32 %v366, %v637
        %v672 = vadd.f32 %v367, %v639
        %673 = vst [vmem:[#allocation2] sm:$0xff] %v641
        %674 = vst [vmem:[#allocation2 + $0x8] sm:$0xff] %v642
        %675 = vst [vmem:[#allocation2 + $0x10] sm:$0xff] %v643
        %676 = vst [vmem:[#allocation2 + $0x18] sm:$0xff] %v644
        %677 = vst [vmem:[#allocation2 + $0x20] sm:$0xff] %v645
        %678 = vst [vmem:[#allocation2 + $0x28] sm:$0xff] %v646
        %679 = vst [vmem:[#allocation2 + $0x30] sm:$0xff] %v647
        %680 = vst [vmem:[#allocation2 + $0x38] sm:$0xff] %v648
        %681 = vst [vmem:[#allocation2 + $0x40] sm:$0xff] %v649
        %682 = vst [vmem:[#allocation2 + $0x48] sm:$0xff] %v650
        %683 = vst [vmem:[#allocation2 + $0x50] sm:$0xff] %v651
        %684 = vst [vmem:[#allocation2 + $0x58] sm:$0xff] %v652
        %685 = vst [vmem:[#allocation2 + $0x60] sm:$0xff] %v653
        %686 = vst [vmem:[#allocation2 + $0x68] sm:$0xff] %v654
        %687 = vst [vmem:[#allocation2 + $0x70] sm:$0xff] %v655
        %688 = vst [vmem:[#allocation2 + $0x78] sm:$0xff] %v656
        %689 = vst [vmem:[#allocation2 + $0x80] sm:$0xff] %v657
        %690 = vst [vmem:[#allocation2 + $0x88] sm:$0xff] %v658
        %691 = vst [vmem:[#allocation2 + $0x90] sm:$0xff] %v659
        %692 = vst [vmem:[#allocation2 + $0x98] sm:$0xff] %v660
        %693 = vst [vmem:[#allocation2 + $0xa0] sm:$0xff] %v661
        %694 = vst [vmem:[#allocation2 + $0xa8] sm:$0xff] %v662
        %695 = vst [vmem:[#allocation2 + $0xb0] sm:$0xff] %v663
        %696 = vst [vmem:[#allocation2 + $0xb8] sm:$0xff] %v664
        %697 = vst [vmem:[#allocation2 + $0xc0] sm:$0xff] %v665
        %698 = vst [vmem:[#allocation2 + $0xc8] sm:$0xff] %v666
        %699 = vst [vmem:[#allocation2 + $0xd0] sm:$0xff] %v667
        %700 = vst [vmem:[#allocation2 + $0xd8] sm:$0xff] %v668
        %701 = vst [vmem:[#allocation2 + $0xe0] sm:$0xff] %v669
        %702 = vst [vmem:[#allocation2 + $0xe8] sm:$0xff] %v670
        %703 = vst [vmem:[#allocation2 + $0xf0] sm:$0xff] %v671
        %704 = vst [vmem:[#allocation2 + $0xf8] sm:$0xff] %v672
        // Predicated region
        $region57: #{tpu_custom_call.1} parent=39 // pred_check
          %p705 = pneg %p300
        $region58: #{tpu_custom_call.1} parent=39 // pred_check_branch
          %707 = sbr.rel (%p705) target = $region60
        $region59: #{tpu_custom_call.1} parent=39 // pred_region
          %v708 = vld [vmem:[#allocation2] sm:$0xff]
          %v709 = vld [vmem:[#allocation2 + $0x8] sm:$0xff]
          %v710 = vld [vmem:[#allocation2 + $0x10] sm:$0xff]
          %v711 = vld [vmem:[#allocation2 + $0x18] sm:$0xff]
          %v712 = vld [vmem:[#allocation2 + $0x20] sm:$0xff]
          %v713 = vld [vmem:[#allocation2 + $0x28] sm:$0xff]
          %v714 = vld [vmem:[#allocation2 + $0x30] sm:$0xff]
          %v715 = vld [vmem:[#allocation2 + $0x38] sm:$0xff]
          %v716 = vld [vmem:[#allocation2 + $0x40] sm:$0xff]
          %v717 = vld [vmem:[#allocation2 + $0x48] sm:$0xff]
          %v718 = vld [vmem:[#allocation2 + $0x50] sm:$0xff]
          %v719 = vld [vmem:[#allocation2 + $0x58] sm:$0xff]
          %v720 = vld [vmem:[#allocation2 + $0x60] sm:$0xff]
          %v721 = vld [vmem:[#allocation2 + $0x68] sm:$0xff]
          %v722 = vld [vmem:[#allocation2 + $0x70] sm:$0xff]
          %v723 = vld [vmem:[#allocation2 + $0x78] sm:$0xff]
          %v724 = vld [vmem:[#allocation2 + $0x80] sm:$0xff]
          %v725 = vld [vmem:[#allocation2 + $0x88] sm:$0xff]
          %v726 = vld [vmem:[#allocation2 + $0x90] sm:$0xff]
          %v727 = vld [vmem:[#allocation2 + $0x98] sm:$0xff]
          %v728 = vld [vmem:[#allocation2 + $0xa0] sm:$0xff]
          %v729 = vld [vmem:[#allocation2 + $0xa8] sm:$0xff]
          %v730 = vld [vmem:[#allocation2 + $0xb0] sm:$0xff]
          %v731 = vld [vmem:[#allocation2 + $0xb8] sm:$0xff]
          %v732 = vld [vmem:[#allocation2 + $0xc0] sm:$0xff]
          %v733 = vld [vmem:[#allocation2 + $0xc8] sm:$0xff]
          %v734 = vld [vmem:[#allocation2 + $0xd0] sm:$0xff]
          %v735 = vld [vmem:[#allocation2 + $0xd8] sm:$0xff]
          %v736 = vld [vmem:[#allocation2 + $0xe0] sm:$0xff]
          %v737 = vld [vmem:[#allocation2 + $0xe8] sm:$0xff]
          %v738 = vld [vmem:[#allocation2 + $0xf0] sm:$0xff]
          %v739 = vld [vmem:[#allocation2 + $0xf8] sm:$0xff]
          %v740 = vmul.f32 %v708, 0.5
          %v741 = vmul.f32 %v709, 0.5
          %v742 = vmul.f32 %v710, 0.5
          %v743 = vmul.f32 %v711, 0.5
          %v744 = vmul.f32 %v712, 0.5
          %v745 = vmul.f32 %v713, 0.5
          %v746 = vmul.f32 %v714, 0.5
          %v747 = vmul.f32 %v715, 0.5
          %v748 = vmul.f32 %v716, 0.5
          %v749 = vmul.f32 %v717, 0.5
          %v750 = vmul.f32 %v718, 0.5
          %v751 = vmul.f32 %v719, 0.5
          %v752 = vmul.f32 %v720, 0.5
          %v753 = vmul.f32 %v721, 0.5
          %v754 = vmul.f32 %v722, 0.5
          %v755 = vmul.f32 %v723, 0.5
          %v756 = vmul.f32 %v724, 0.5
          %v757 = vmul.f32 %v725, 0.5
          %v758 = vmul.f32 %v726, 0.5
          %v759 = vmul.f32 %v727, 0.5
          %v760 = vmul.f32 %v728, 0.5
          %v761 = vmul.f32 %v729, 0.5
          %v762 = vmul.f32 %v730, 0.5
          %v763 = vmul.f32 %v731, 0.5
          %v764 = vmul.f32 %v732, 0.5
          %v765 = vmul.f32 %v733, 0.5
          %v766 = vmul.f32 %v734, 0.5
          %v767 = vmul.f32 %v735, 0.5
          %v768 = vmul.f32 %v736, 0.5
          %v769 = vmul.f32 %v737, 0.5
          %v770 = vmul.f32 %v738, 0.5
          %v771 = vmul.f32 %v739, 0.5
          %v772 = vmul.f32 %v708, 0.70710677
          %v773 = vmul.f32 %v709, 0.70710677
          %v774 = vmul.f32 %v710, 0.70710677
          %v775 = vmul.f32 %v711, 0.70710677
          %v776 = vmul.f32 %v712, 0.70710677
          %v777 = vmul.f32 %v713, 0.70710677
          %v778 = vmul.f32 %v714, 0.70710677
          %v779 = vmul.f32 %v715, 0.70710677
          %v780 = vmul.f32 %v716, 0.70710677
          %v781 = vmul.f32 %v717, 0.70710677
          %v782 = vmul.f32 %v718, 0.70710677
          %v783 = vmul.f32 %v719, 0.70710677
          %v784 = vmul.f32 %v720, 0.70710677
          %v785 = vmul.f32 %v721, 0.70710677
          %v786 = vmul.f32 %v722, 0.70710677
          %v787 = vmul.f32 %v723, 0.70710677
          %v788 = vmul.f32 %v724, 0.70710677
          %v789 = vmul.f32 %v725, 0.70710677
          %v790 = vmul.f32 %v726, 0.70710677
          %v791 = vmul.f32 %v727, 0.70710677
          %v792 = vmul.f32 %v728, 0.70710677
          %v793 = vmul.f32 %v729, 0.70710677
          %v794 = vmul.f32 %v730, 0.70710677
          %v795 = vmul.f32 %v731, 0.70710677
          %v796 = vmul.f32 %v732, 0.70710677
          %v797 = vmul.f32 %v733, 0.70710677
          %v798 = vmul.f32 %v734, 0.70710677
          %v799 = vmul.f32 %v735, 0.70710677
          %v800 = vmul.f32 %v736, 0.70710677
          %v801 = vmul.f32 %v737, 0.70710677
          %v802 = vmul.f32 %v738, 0.70710677
          %v803 = vmul.f32 %v739, 0.70710677
          %v804 = verf.f32.pop %v772
          %v805 = verf.f32.pop %v773
          %v806 = verf.f32.pop %v774
          %v807 = verf.f32.pop %v775
          %v808 = verf.f32.pop %v776
          %v809 = verf.f32.pop %v777
          %v810 = verf.f32.pop %v778
          %v811 = verf.f32.pop %v779
          %v812 = verf.f32.pop %v780
          %v813 = verf.f32.pop %v781
          %v814 = verf.f32.pop %v782
          %v815 = verf.f32.pop %v783
          %v816 = verf.f32.pop %v784
          %v817 = verf.f32.pop %v785
          %v818 = verf.f32.pop %v786
          %v819 = verf.f32.pop %v787
          %v820 = verf.f32.pop %v788
          %v821 = verf.f32.pop %v789
          %v822 = verf.f32.pop %v790
          %v823 = verf.f32.pop %v791
          %v824 = verf.f32.pop %v792
          %v825 = verf.f32.pop %v793
          %v826 = verf.f32.pop %v794
          %v827 = verf.f32.pop %v795
          %v828 = verf.f32.pop %v796
          %v829 = verf.f32.pop %v797
          %v830 = verf.f32.pop %v798
          %v831 = verf.f32.pop %v799
          %v832 = verf.f32.pop %v800
          %v833 = verf.f32.pop %v801
          %v834 = verf.f32.pop %v802
          %v835 = verf.f32.pop %v803
          %v836 = vadd.f32 %v804, 1.0
          %v837 = vadd.f32 %v805, 1.0
          %v838 = vadd.f32 %v806, 1.0
          %v839 = vadd.f32 %v807, 1.0
          %v840 = vadd.f32 %v808, 1.0
          %v841 = vadd.f32 %v809, 1.0
          %v842 = vadd.f32 %v810, 1.0
          %v843 = vadd.f32 %v811, 1.0
          %v844 = vadd.f32 %v812, 1.0
          %v845 = vadd.f32 %v813, 1.0
          %v846 = vadd.f32 %v814, 1.0
          %v847 = vadd.f32 %v815, 1.0
          %v848 = vadd.f32 %v816, 1.0
          %v849 = vadd.f32 %v817, 1.0
          %v850 = vadd.f32 %v818, 1.0
          %v851 = vadd.f32 %v819, 1.0
          %v852 = vadd.f32 %v820, 1.0
          %v853 = vadd.f32 %v821, 1.0
          %v854 = vadd.f32 %v822, 1.0
          %v855 = vadd.f32 %v823, 1.0
          %v856 = vadd.f32 %v824, 1.0
          %v857 = vadd.f32 %v825, 1.0
          %v858 = vadd.f32 %v826, 1.0
          %v859 = vadd.f32 %v827, 1.0
          %v860 = vadd.f32 %v828, 1.0
          %v861 = vadd.f32 %v829, 1.0
          %v862 = vadd.f32 %v830, 1.0
          %v863 = vadd.f32 %v831, 1.0
          %v864 = vadd.f32 %v832, 1.0
          %v865 = vadd.f32 %v833, 1.0
          %v866 = vadd.f32 %v834, 1.0
          %v867 = vadd.f32 %v835, 1.0
          %v868 = vmul.f32 %v740, %v836
          %v869 = vmul.f32 %v741, %v837
          %v870 = vmul.f32 %v742, %v838
          %v871 = vmul.f32 %v743, %v839
          %v872 = vmul.f32 %v744, %v840
          %v873 = vmul.f32 %v745, %v841
          %v874 = vmul.f32 %v746, %v842
          %v875 = vmul.f32 %v747, %v843
          %v876 = vmul.f32 %v748, %v844
          %v877 = vmul.f32 %v749, %v845
          %v878 = vmul.f32 %v750, %v846
          %v879 = vmul.f32 %v751, %v847
          %v880 = vmul.f32 %v752, %v848
          %v881 = vmul.f32 %v753, %v849
          %v882 = vmul.f32 %v754, %v850
          %v883 = vmul.f32 %v755, %v851
          %v884 = vmul.f32 %v756, %v852
          %v885 = vmul.f32 %v757, %v853
          %v886 = vmul.f32 %v758, %v854
          %v887 = vmul.f32 %v759, %v855
          %v888 = vmul.f32 %v760, %v856
          %v889 = vmul.f32 %v761, %v857
          %v890 = vmul.f32 %v762, %v858
          %v891 = vmul.f32 %v763, %v859
          %v892 = vmul.f32 %v764, %v860
          %v893 = vmul.f32 %v765, %v861
          %v894 = vmul.f32 %v766, %v862
          %v895 = vmul.f32 %v767, %v863
          %v896 = vmul.f32 %v768, %v864
          %v897 = vmul.f32 %v769, %v865
          %v898 = vmul.f32 %v770, %v866
          %v899 = vmul.f32 %v771, %v867
          %v900 = vpack.c.bf16 %v870, %v868
          %v901 = vpack.c.bf16 %v871, %v869
          %v902 = vpack.c.bf16 %v874, %v872
          %v903 = vpack.c.bf16 %v875, %v873
          %v904 = vpack.c.bf16 %v878, %v876
          %v905 = vpack.c.bf16 %v879, %v877
          %v906 = vpack.c.bf16 %v882, %v880
          %v907 = vpack.c.bf16 %v883, %v881
          %v908 = vpack.c.bf16 %v886, %v884
          %v909 = vpack.c.bf16 %v887, %v885
          %v910 = vpack.c.bf16 %v890, %v888
          %v911 = vpack.c.bf16 %v891, %v889
          %v912 = vpack.c.bf16 %v894, %v892
          %v913 = vpack.c.bf16 %v895, %v893
          %v914 = vpack.c.bf16 %v898, %v896
          %v915 = vpack.c.bf16 %v899, %v897
          %v916 = vld [vmem:[#allocation8] sm:$0xff]
          %v917 = vld [vmem:[#allocation8 + $0x8] sm:$0xff]
          %v918 = vld [vmem:[#allocation8 + $0x10] sm:$0xff]
          %v919 = vld [vmem:[#allocation8 + $0x18] sm:$0xff]
          %v920 = vld [vmem:[#allocation8 + $0x20] sm:$0xff]
          %v921 = vld [vmem:[#allocation8 + $0x28] sm:$0xff]
          %v922 = vld [vmem:[#allocation8 + $0x30] sm:$0xff]
          %v923 = vld [vmem:[#allocation8 + $0x38] sm:$0xff]
          %v924 = vld [vmem:[#allocation8 + $0x40] sm:$0xff]
          %v925 = vld [vmem:[#allocation8 + $0x48] sm:$0xff]
          %v926 = vld [vmem:[#allocation8 + $0x50] sm:$0xff]
          %v927 = vld [vmem:[#allocation8 + $0x58] sm:$0xff]
          %v928 = vld [vmem:[#allocation8 + $0x60] sm:$0xff]
          %v929 = vld [vmem:[#allocation8 + $0x68] sm:$0xff]
          %v930 = vld [vmem:[#allocation8 + $0x70] sm:$0xff]
          %v931 = vld [vmem:[#allocation8 + $0x78] sm:$0xff]
          %v932 = vld [vmem:[#allocation8 + $0x80] sm:$0xff]
          %v933 = vld [vmem:[#allocation8 + $0x88] sm:$0xff]
          %v934 = vld [vmem:[#allocation8 + $0x90] sm:$0xff]
          %v935 = vld [vmem:[#allocation8 + $0x98] sm:$0xff]
          %v936 = vld [vmem:[#allocation8 + $0xa0] sm:$0xff]
          %v937 = vld [vmem:[#allocation8 + $0xa8] sm:$0xff]
          %v938 = vld [vmem:[#allocation8 + $0xb0] sm:$0xff]
          %v939 = vld [vmem:[#allocation8 + $0xb8] sm:$0xff]
          %v940 = vld [vmem:[#allocation8 + $0xc0] sm:$0xff]
          %v941 = vld [vmem:[#allocation8 + $0xc8] sm:$0xff]
          %v942 = vld [vmem:[#allocation8 + $0xd0] sm:$0xff]
          %v943 = vld [vmem:[#allocation8 + $0xd8] sm:$0xff]
          %v944 = vld [vmem:[#allocation8 + $0xe0] sm:$0xff]
          %v945 = vld [vmem:[#allocation8 + $0xe8] sm:$0xff]
          %v946 = vld [vmem:[#allocation8 + $0xf0] sm:$0xff]
          %v947 = vld [vmem:[#allocation8 + $0xf8] sm:$0xff]
          %v980 = vunpack.c.l.b16 %v916
          %v981 = vunpack.c.h.b16 %v916
          %v982 = vunpack.c.l.b16 %v917
          %v983 = vunpack.c.h.b16 %v917
          %v984 = vunpack.c.l.b16 %v918
          %v985 = vunpack.c.h.b16 %v918
          %v986 = vunpack.c.l.b16 %v919
          %v987 = vunpack.c.h.b16 %v919
          %v988 = vunpack.c.l.b16 %v920
          %v989 = vunpack.c.h.b16 %v920
          %v990 = vunpack.c.l.b16 %v921
          %v991 = vunpack.c.h.b16 %v921
          %v992 = vunpack.c.l.b16 %v922
          %v993 = vunpack.c.h.b16 %v922
          %v994 = vunpack.c.l.b16 %v923
          %v995 = vunpack.c.h.b16 %v923
          %v996 = vunpack.c.l.b16 %v924
          %v997 = vunpack.c.h.b16 %v924
          %v998 = vunpack.c.l.b16 %v925
          %v999 = vunpack.c.h.b16 %v925
          %v1000 = vunpack.c.l.b16 %v926
          %v1001 = vunpack.c.h.b16 %v926
          %v1002 = vunpack.c.l.b16 %v927
          %v1003 = vunpack.c.h.b16 %v927
          %v1004 = vunpack.c.l.b16 %v928
          %v1005 = vunpack.c.h.b16 %v928
          %v1006 = vunpack.c.l.b16 %v929
          %v1007 = vunpack.c.h.b16 %v929
          %v1008 = vunpack.c.l.b16 %v930
          %v1009 = vunpack.c.h.b16 %v930
          %v1010 = vunpack.c.l.b16 %v931
          %v1011 = vunpack.c.h.b16 %v931
          %v1012 = vunpack.c.l.b16 %v932
          %v1013 = vunpack.c.h.b16 %v932
          %v1014 = vunpack.c.l.b16 %v933
          %v1015 = vunpack.c.h.b16 %v933
          %v1016 = vunpack.c.l.b16 %v934
          %v1017 = vunpack.c.h.b16 %v934
          %v1018 = vunpack.c.l.b16 %v935
          %v1019 = vunpack.c.h.b16 %v935
          %v1020 = vunpack.c.l.b16 %v936
          %v1021 = vunpack.c.h.b16 %v936
          %v1022 = vunpack.c.l.b16 %v937
          %v1023 = vunpack.c.h.b16 %v937
          %v1024 = vunpack.c.l.b16 %v938
          %v1025 = vunpack.c.h.b16 %v938
          %v1026 = vunpack.c.l.b16 %v939
          %v1027 = vunpack.c.h.b16 %v939
          %v1028 = vunpack.c.l.b16 %v940
          %v1029 = vunpack.c.h.b16 %v940
          %v1030 = vunpack.c.l.b16 %v941
          %v1031 = vunpack.c.h.b16 %v941
          %v1032 = vunpack.c.l.b16 %v942
          %v1033 = vunpack.c.h.b16 %v942
          %v1034 = vunpack.c.l.b16 %v943
          %v1035 = vunpack.c.h.b16 %v943
          %v1036 = vunpack.c.l.b16 %v944
          %v1037 = vunpack.c.h.b16 %v944
          %v1038 = vunpack.c.l.b16 %v945
          %v1039 = vunpack.c.h.b16 %v945
          %v1040 = vunpack.c.l.b16 %v946
          %v1041 = vunpack.c.h.b16 %v946
          %v1042 = vunpack.c.l.b16 %v947
          %v1043 = vunpack.c.h.b16 %v947
          %v1044 = vpack.c.b16 %v982, %v980
          %v1045 = vpack.c.b16 %v983, %v981
          %v1046 = vpack.c.b16 %v986, %v984
          %v1047 = vpack.c.b16 %v987, %v985
          %v1048 = vpack.c.b16 %v990, %v988
          %v1049 = vpack.c.b16 %v991, %v989
          %v1050 = vpack.c.b16 %v994, %v992
          %v1051 = vpack.c.b16 %v995, %v993
          %v1052 = vpack.c.b16 %v998, %v996
          %v1053 = vpack.c.b16 %v999, %v997
          %v1054 = vpack.c.b16 %v1002, %v1000
          %v1055 = vpack.c.b16 %v1003, %v1001
          %v1056 = vpack.c.b16 %v1006, %v1004
          %v1057 = vpack.c.b16 %v1007, %v1005
          %v1058 = vpack.c.b16 %v1010, %v1008
          %v1059 = vpack.c.b16 %v1011, %v1009
          %v1060 = vpack.c.b16 %v1014, %v1012
          %v1061 = vpack.c.b16 %v1015, %v1013
          %v1062 = vpack.c.b16 %v1018, %v1016
          %v1063 = vpack.c.b16 %v1019, %v1017
          %v1064 = vpack.c.b16 %v1022, %v1020
          %v1065 = vpack.c.b16 %v1023, %v1021
          %v1066 = vpack.c.b16 %v1026, %v1024
          %v1067 = vpack.c.b16 %v1027, %v1025
          %v1068 = vpack.c.b16 %v1030, %v1028
          %v1069 = vpack.c.b16 %v1031, %v1029
          %v1070 = vpack.c.b16 %v1034, %v1032
          %v1071 = vpack.c.b16 %v1035, %v1033
          %v1072 = vpack.c.b16 %v1038, %v1036
          %v1073 = vpack.c.b16 %v1039, %v1037
          %v1074 = vpack.c.b16 %v1042, %v1040
          %v1075 = vpack.c.b16 %v1043, %v1041
          %1108 = vmatprep.subr.bf16.mxu0 %v1045
          %1109 = vmatpush1.bf16.msra.mxu0 %v1044
          %1110 = vmatprep.subr.bf16.mxu0 %v1047
          %1111 = vmatpush1.bf16.msra.mxu0 %v1046
          %1112 = vmatprep.subr.bf16.mxu0 %v1049
          %1113 = vmatpush1.bf16.msra.mxu0 %v1048
          %1114 = vmatprep.subr.bf16.mxu0 %v1051
          %1115 = vmatpush1.bf16.msra.mxu0 %v1050
          %1116 = vmatprep.subr.bf16.mxu0 %v1053
          %1117 = vmatpush1.bf16.msra.mxu0 %v1052
          %1118 = vmatprep.subr.bf16.mxu0 %v1055
          %1119 = vmatpush1.bf16.msra.mxu0 %v1054
          %1120 = vmatprep.subr.bf16.mxu0 %v1057
          %1121 = vmatpush1.bf16.msra.mxu0 %v1056
          %1122 = vmatprep.subr.bf16.mxu0 %v1059
          %1123 = vmatpush1.bf16.msra.mxu0 %v1058
          %1124 = vmatprep.subr.bf16.mxu0 %v1061
          %1125 = vmatpush1.bf16.msra.mxu0 %v1060
          %1126 = vmatprep.subr.bf16.mxu0 %v1063
          %1127 = vmatpush1.bf16.msra.mxu0 %v1062
          %1128 = vmatprep.subr.bf16.mxu0 %v1065
          %1129 = vmatpush1.bf16.msra.mxu0 %v1064
          %1130 = vmatprep.subr.bf16.mxu0 %v1067
          %1131 = vmatpush1.bf16.msra.mxu0 %v1066
          %1132 = vmatprep.subr.bf16.mxu0 %v1069
          %1133 = vmatpush1.bf16.msra.mxu0 %v1068
          %1134 = vmatprep.subr.bf16.mxu0 %v1071
          %1135 = vmatpush1.bf16.msra.mxu0 %v1070
          %1136 = vmatprep.subr.bf16.mxu0 %v1073
          %1137 = vmatpush1.bf16.msra.mxu0 %v1072
          %1138 = vmatprep.subr.bf16.mxu0 %v1075
          %1139 = vmatpush1.bf16.msra.mxu0 %v1074
          %1140 = vmatprep.mubr.bf16.mxu0 %v901
          %1141 = vmatmul.mubr.bf16.gmra.mrb[0].mxu0 %v900
          %v1142 = vpop.f32.mrb[0].mxu0
          %v1143 = vadd.f32 0.0, %v1142
          %v1144 = vpop.f32.mrb[0].mxu0
          %v1145 = vadd.f32 0.0, %v1144
          %v1146 = vpop.f32.mrb[0].mxu0
          %v1147 = vadd.f32 0.0, %v1146
          %v1148 = vpop.f32.mrb[0].mxu0
          %v1149 = vadd.f32 0.0, %v1148
          %1150 = vmatprep.mubr.bf16.mxu0 %v903
          %1151 = vmatmul.mubr.bf16.gmra.mrb[0].mxu0 %v902
          %v1152 = vpop.f32.mrb[0].mxu0
          %v1153 = vadd.f32 0.0, %v1152
          %v1154 = vpop.f32.mrb[0].mxu0
          %v1155 = vadd.f32 0.0, %v1154
          %v1156 = vpop.f32.mrb[0].mxu0
          %v1157 = vadd.f32 0.0, %v1156
          %v1158 = vpop.f32.mrb[0].mxu0
          %v1159 = vadd.f32 0.0, %v1158
          %1160 = vmatprep.mubr.bf16.mxu0 %v905
          %1161 = vmatmul.mubr.bf16.gmra.mrb[0].mxu0 %v904
          %v1162 = vpop.f32.mrb[0].mxu0
          %v1163 = vadd.f32 0.0, %v1162
          %v1164 = vpop.f32.mrb[0].mxu0
          %v1165 = vadd.f32 0.0, %v1164
          %v1166 = vpop.f32.mrb[0].mxu0
          %v1167 = vadd.f32 0.0, %v1166
          %v1168 = vpop.f32.mrb[0].mxu0
          %v1169 = vadd.f32 0.0, %v1168
          %1170 = vmatprep.mubr.bf16.mxu0 %v907
          %1171 = vmatmul.mubr.bf16.gmra.mrb[0].mxu0 %v906
          %v1172 = vpop.f32.mrb[0].mxu0
          %v1173 = vadd.f32 0.0, %v1172
          %v1174 = vpop.f32.mrb[0].mxu0
          %v1175 = vadd.f32 0.0, %v1174
          %v1176 = vpop.f32.mrb[0].mxu0
          %v1177 = vadd.f32 0.0, %v1176
          %v1178 = vpop.f32.mrb[0].mxu0
          %v1179 = vadd.f32 0.0, %v1178
          %1180 = vmatprep.mubr.bf16.mxu0 %v909
          %1181 = vmatmul.mubr.bf16.gmra.mrb[0].mxu0 %v908
          %v1182 = vpop.f32.mrb[0].mxu0
          %v1183 = vadd.f32 0.0, %v1182
          %v1184 = vpop.f32.mrb[0].mxu0
          %v1185 = vadd.f32 0.0, %v1184
          %v1186 = vpop.f32.mrb[0].mxu0
          %v1187 = vadd.f32 0.0, %v1186
          %v1188 = vpop.f32.mrb[0].mxu0
          %v1189 = vadd.f32 0.0, %v1188
          %1190 = vmatprep.mubr.bf16.mxu0 %v911
          %1191 = vmatmul.mubr.bf16.gmra.mrb[0].mxu0 %v910
          %v1192 = vpop.f32.mrb[0].mxu0
          %v1193 = vadd.f32 0.0, %v1192
          %v1194 = vpop.f32.mrb[0].mxu0
          %v1195 = vadd.f32 0.0, %v1194
          %v1196 = vpop.f32.mrb[0].mxu0
          %v1197 = vadd.f32 0.0, %v1196
          %v1198 = vpop.f32.mrb[0].mxu0
          %v1199 = vadd.f32 0.0, %v1198
          %1200 = vmatprep.mubr.bf16.mxu0 %v913
          %1201 = vmatmul.mubr.bf16.gmra.mrb[0].mxu0 %v912
          %v1202 = vpop.f32.mrb[0].mxu0
          %v1203 = vadd.f32 0.0, %v1202
          %v1204 = vpop.f32.mrb[0].mxu0
          %v1205 = vadd.f32 0.0, %v1204
          %v1206 = vpop.f32.mrb[0].mxu0
          %v1207 = vadd.f32 0.0, %v1206
          %v1208 = vpop.f32.mrb[0].mxu0
          %v1209 = vadd.f32 0.0, %v1208
          %1210 = vmatprep.mubr.bf16.mxu0 %v915
          %1211 = vmatmul.mubr.bf16.gmra.mrb[0].mxu0 %v914
          %v1212 = vpop.f32.mrb[0].mxu0
          %v1213 = vadd.f32 0.0, %v1212
          %v1214 = vpop.f32.mrb[0].mxu0
          %v1215 = vadd.f32 0.0, %v1214
          %v1216 = vpop.f32.mrb[0].mxu0
          %v1217 = vadd.f32 0.0, %v1216
          %v1218 = vpop.f32.mrb[0].mxu0
          %v1219 = vadd.f32 0.0, %v1218
          %1220 = vdwg.mxu0
          %v1221 = vadd.f32 %v708, %v1143
          %v1222 = vadd.f32 %v709, %v1145
          %v1223 = vadd.f32 %v710, %v1147
          %v1224 = vadd.f32 %v711, %v1149
          %v1225 = vadd.f32 %v712, %v1153
          %v1226 = vadd.f32 %v713, %v1155
          %v1227 = vadd.f32 %v714, %v1157
          %v1228 = vadd.f32 %v715, %v1159
          %v1229 = vadd.f32 %v716, %v1163
          %v1230 = vadd.f32 %v717, %v1165
          %v1231 = vadd.f32 %v718, %v1167
          %v1232 = vadd.f32 %v719, %v1169
          %v1233 = vadd.f32 %v720, %v1173
          %v1234 = vadd.f32 %v721, %v1175
          %v1235 = vadd.f32 %v722, %v1177
          %v1236 = vadd.f32 %v723, %v1179
          %v1237 = vadd.f32 %v724, %v1183
          %v1238 = vadd.f32 %v725, %v1185
          %v1239 = vadd.f32 %v726, %v1187
          %v1240 = vadd.f32 %v727, %v1189
          %v1241 = vadd.f32 %v728, %v1193
          %v1242 = vadd.f32 %v729, %v1195
          %v1243 = vadd.f32 %v730, %v1197
          %v1244 = vadd.f32 %v731, %v1199
          %v1245 = vadd.f32 %v732, %v1203
          %v1246 = vadd.f32 %v733, %v1205
          %v1247 = vadd.f32 %v734, %v1207
          %v1248 = vadd.f32 %v735, %v1209
          %v1249 = vadd.f32 %v736, %v1213
          %v1250 = vadd.f32 %v737, %v1215
          %v1251 = vadd.f32 %v738, %v1217
          %v1252 = vadd.f32 %v739, %v1219
          %v1253 = vadd.f32 %v1221, %v1222
          %1254 = vadd.xlane.f32.xlu0 %v1253
          %v1255 = vpop.xlane.xlu0 %1254
          %v1256 = vadd.f32 %v1223, %v1224
          %1257 = vadd.xlane.f32.xlu0 %v1256
          %v1258 = vpop.xlane.xlu0 %1257
          %v1259 = vadd.f32 %v1225, %v1226
          %1260 = vadd.xlane.f32.xlu0 %v1259
          %v1261 = vpop.xlane.xlu0 %1260
          %v1262 = vadd.f32 %v1227, %v1228
          %1263 = vadd.xlane.f32.xlu0 %v1262
          %v1264 = vpop.xlane.xlu0 %1263
          %v1265 = vadd.f32 %v1229, %v1230
          %1266 = vadd.xlane.f32.xlu0 %v1265
          %v1267 = vpop.xlane.xlu0 %1266
          %v1268 = vadd.f32 %v1231, %v1232
          %1269 = vadd.xlane.f32.xlu0 %v1268
          %v1270 = vpop.xlane.xlu0 %1269
          %v1271 = vadd.f32 %v1233, %v1234
          %1272 = vadd.xlane.f32.xlu0 %v1271
          %v1273 = vpop.xlane.xlu0 %1272
          %v1274 = vadd.f32 %v1235, %v1236
          %1275 = vadd.xlane.f32.xlu0 %v1274
          %v1276 = vpop.xlane.xlu0 %1275
          %v1277 = vadd.f32 %v1237, %v1238
          %1278 = vadd.xlane.f32.xlu0 %v1277
          %v1279 = vpop.xlane.xlu0 %1278
          %v1280 = vadd.f32 %v1239, %v1240
          %1281 = vadd.xlane.f32.xlu0 %v1280
          %v1282 = vpop.xlane.xlu0 %1281
          %v1283 = vadd.f32 %v1241, %v1242
          %1284 = vadd.xlane.f32.xlu0 %v1283
          %v1285 = vpop.xlane.xlu0 %1284
          %v1286 = vadd.f32 %v1243, %v1244
          %1287 = vadd.xlane.f32.xlu0 %v1286
          %v1288 = vpop.xlane.xlu0 %1287
          %v1289 = vadd.f32 %v1245, %v1246
          %1290 = vadd.xlane.f32.xlu0 %v1289
          %v1291 = vpop.xlane.xlu0 %1290
          %v1292 = vadd.f32 %v1247, %v1248
          %1293 = vadd.xlane.f32.xlu0 %v1292
          %v1294 = vpop.xlane.xlu0 %1293
          %v1295 = vadd.f32 %v1249, %v1250
          %1296 = vadd.xlane.f32.xlu0 %v1295
          %v1297 = vpop.xlane.xlu0 %1296
          %v1298 = vadd.f32 %v1251, %v1252
          %1299 = vadd.xlane.f32.xlu0 %v1298
          %v1300 = vpop.xlane.xlu0 %1299
          %v1301 = vmul.f32 %v1255, 0.00390625
          %v1302 = vmul.f32 %v1258, 0.00390625
          %v1303 = vmul.f32 %v1261, 0.00390625
          %v1304 = vmul.f32 %v1264, 0.00390625
          %v1305 = vmul.f32 %v1267, 0.00390625
          %v1306 = vmul.f32 %v1270, 0.00390625
          %v1307 = vmul.f32 %v1273, 0.00390625
          %v1308 = vmul.f32 %v1276, 0.00390625
          %v1309 = vmul.f32 %v1279, 0.00390625
          %v1310 = vmul.f32 %v1282, 0.00390625
          %v1311 = vmul.f32 %v1285, 0.00390625
          %v1312 = vmul.f32 %v1288, 0.00390625
          %v1313 = vmul.f32 %v1291, 0.00390625
          %v1314 = vmul.f32 %v1294, 0.00390625
          %v1315 = vmul.f32 %v1297, 0.00390625
          %v1316 = vmul.f32 %v1300, 0.00390625
          %v1317 = vsub.f32 %v1221, %v1301
          %v1318 = vsub.f32 %v1222, %v1301
          %v1319 = vsub.f32 %v1223, %v1302
          %v1320 = vsub.f32 %v1224, %v1302
          %v1321 = vsub.f32 %v1225, %v1303
          %v1322 = vsub.f32 %v1226, %v1303
          %v1323 = vsub.f32 %v1227, %v1304
          %v1324 = vsub.f32 %v1228, %v1304
          %v1325 = vsub.f32 %v1229, %v1305
          %v1326 = vsub.f32 %v1230, %v1305
          %v1327 = vsub.f32 %v1231, %v1306
          %v1328 = vsub.f32 %v1232, %v1306
          %v1329 = vsub.f32 %v1233, %v1307
          %v1330 = vsub.f32 %v1234, %v1307
          %v1331 = vsub.f32 %v1235, %v1308
          %v1332 = vsub.f32 %v1236, %v1308
          %v1333 = vsub.f32 %v1237, %v1309
          %v1334 = vsub.f32 %v1238, %v1309
          %v1335 = vsub.f32 %v1239, %v1310
          %v1336 = vsub.f32 %v1240, %v1310
          %v1337 = vsub.f32 %v1241, %v1311
          %v1338 = vsub.f32 %v1242, %v1311
          %v1339 = vsub.f32 %v1243, %v1312
          %v1340 = vsub.f32 %v1244, %v1312
          %v1341 = vsub.f32 %v1245, %v1313
          %v1342 = vsub.f32 %v1246, %v1313
          %v1343 = vsub.f32 %v1247, %v1314
          %v1344 = vsub.f32 %v1248, %v1314
          %v1345 = vsub.f32 %v1249, %v1315
          %v1346 = vsub.f32 %v1250, %v1315
          %v1347 = vsub.f32 %v1251, %v1316
          %v1348 = vsub.f32 %v1252, %v1316
          %v1349 = vmul.f32 %v1317, %v1317
          %v1350 = vmul.f32 %v1318, %v1318
          %v1351 = vmul.f32 %v1319, %v1319
          %v1352 = vmul.f32 %v1320, %v1320
          %v1353 = vmul.f32 %v1321, %v1321
          %v1354 = vmul.f32 %v1322, %v1322
          %v1355 = vmul.f32 %v1323, %v1323
          %v1356 = vmul.f32 %v1324, %v1324
          %v1357 = vmul.f32 %v1325, %v1325
          %v1358 = vmul.f32 %v1326, %v1326
          %v1359 = vmul.f32 %v1327, %v1327
          %v1360 = vmul.f32 %v1328, %v1328
          %v1361 = vmul.f32 %v1329, %v1329
          %v1362 = vmul.f32 %v1330, %v1330
          %v1363 = vmul.f32 %v1331, %v1331
          %v1364 = vmul.f32 %v1332, %v1332
          %v1365 = vmul.f32 %v1333, %v1333
          %v1366 = vmul.f32 %v1334, %v1334
          %v1367 = vmul.f32 %v1335, %v1335
          %v1368 = vmul.f32 %v1336, %v1336
          %v1369 = vmul.f32 %v1337, %v1337
          %v1370 = vmul.f32 %v1338, %v1338
          %v1371 = vmul.f32 %v1339, %v1339
          %v1372 = vmul.f32 %v1340, %v1340
          %v1373 = vmul.f32 %v1341, %v1341
          %v1374 = vmul.f32 %v1342, %v1342
          %v1375 = vmul.f32 %v1343, %v1343
          %v1376 = vmul.f32 %v1344, %v1344
          %v1377 = vmul.f32 %v1345, %v1345
          %v1378 = vmul.f32 %v1346, %v1346
          %v1379 = vmul.f32 %v1347, %v1347
          %v1380 = vmul.f32 %v1348, %v1348
          %v1381 = vadd.f32 %v1349, %v1350
          %1382 = vadd.xlane.f32.xlu0 %v1381
          %v1383 = vpop.xlane.xlu0 %1382
          %v1384 = vadd.f32 %v1351, %v1352
          %1385 = vadd.xlane.f32.xlu0 %v1384
          %v1386 = vpop.xlane.xlu0 %1385
          %v1387 = vadd.f32 %v1353, %v1354
          %1388 = vadd.xlane.f32.xlu0 %v1387
          %v1389 = vpop.xlane.xlu0 %1388
          %v1390 = vadd.f32 %v1355, %v1356
          %1391 = vadd.xlane.f32.xlu0 %v1390
          %v1392 = vpop.xlane.xlu0 %1391
          %v1393 = vadd.f32 %v1357, %v1358
          %1394 = vadd.xlane.f32.xlu0 %v1393
          %v1395 = vpop.xlane.xlu0 %1394
          %v1396 = vadd.f32 %v1359, %v1360
          %1397 = vadd.xlane.f32.xlu0 %v1396
          %v1398 = vpop.xlane.xlu0 %1397
          %v1399 = vadd.f32 %v1361, %v1362
          %1400 = vadd.xlane.f32.xlu0 %v1399
          %v1401 = vpop.xlane.xlu0 %1400
          %v1402 = vadd.f32 %v1363, %v1364
          %1403 = vadd.xlane.f32.xlu0 %v1402
          %v1404 = vpop.xlane.xlu0 %1403
          %v1405 = vadd.f32 %v1365, %v1366
          %1406 = vadd.xlane.f32.xlu0 %v1405
          %v1407 = vpop.xlane.xlu0 %1406
          %v1408 = vadd.f32 %v1367, %v1368
          %1409 = vadd.xlane.f32.xlu0 %v1408
          %v1410 = vpop.xlane.xlu0 %1409
          %v1411 = vadd.f32 %v1369, %v1370
          %1412 = vadd.xlane.f32.xlu0 %v1411
          %v1413 = vpop.xlane.xlu0 %1412
          %v1414 = vadd.f32 %v1371, %v1372
          %1415 = vadd.xlane.f32.xlu0 %v1414
          %v1416 = vpop.xlane.xlu0 %1415
          %v1417 = vadd.f32 %v1373, %v1374
          %1418 = vadd.xlane.f32.xlu0 %v1417
          %v1419 = vpop.xlane.xlu0 %1418
          %v1420 = vadd.f32 %v1375, %v1376
          %1421 = vadd.xlane.f32.xlu0 %v1420
          %v1422 = vpop.xlane.xlu0 %1421
          %v1423 = vadd.f32 %v1377, %v1378
          %1424 = vadd.xlane.f32.xlu0 %v1423
          %v1425 = vpop.xlane.xlu0 %1424
          %v1426 = vadd.f32 %v1379, %v1380
          %1427 = vadd.xlane.f32.xlu0 %v1426
          %v1428 = vpop.xlane.xlu0 %1427
          %v1429 = vmul.f32 %v1301, %v1301
          %v1430 = vmul.f32 %v1302, %v1302
          %v1431 = vmul.f32 %v1303, %v1303
          %v1432 = vmul.f32 %v1304, %v1304
          %v1433 = vmul.f32 %v1305, %v1305
          %v1434 = vmul.f32 %v1306, %v1306
          %v1435 = vmul.f32 %v1307, %v1307
          %v1436 = vmul.f32 %v1308, %v1308
          %v1437 = vmul.f32 %v1309, %v1309
          %v1438 = vmul.f32 %v1310, %v1310
          %v1439 = vmul.f32 %v1311, %v1311
          %v1440 = vmul.f32 %v1312, %v1312
          %v1441 = vmul.f32 %v1313, %v1313
          %v1442 = vmul.f32 %v1314, %v1314
          %v1443 = vmul.f32 %v1315, %v1315
          %v1444 = vmul.f32 %v1316, %v1316
          %v1445 = vmul.f32 %v1429, 0.0
          %v1446 = vmul.f32 %v1430, 0.0
          %v1447 = vmul.f32 %v1431, 0.0
          %v1448 = vmul.f32 %v1432, 0.0
          %v1449 = vmul.f32 %v1433, 0.0
          %v1450 = vmul.f32 %v1434, 0.0
          %v1451 = vmul.f32 %v1435, 0.0
          %v1452 = vmul.f32 %v1436, 0.0
          %v1453 = vmul.f32 %v1437, 0.0
          %v1454 = vmul.f32 %v1438, 0.0
          %v1455 = vmul.f32 %v1439, 0.0
          %v1456 = vmul.f32 %v1440, 0.0
          %v1457 = vmul.f32 %v1441, 0.0
          %v1458 = vmul.f32 %v1442, 0.0
          %v1459 = vmul.f32 %v1443, 0.0
          %v1460 = vmul.f32 %v1444, 0.0
          %v1461 = vsub.f32 %v1383, %v1445
          %v1462 = vsub.f32 %v1386, %v1446
          %v1463 = vsub.f32 %v1389, %v1447
          %v1464 = vsub.f32 %v1392, %v1448
          %v1465 = vsub.f32 %v1395, %v1449
          %v1466 = vsub.f32 %v1398, %v1450
          %v1467 = vsub.f32 %v1401, %v1451
          %v1468 = vsub.f32 %v1404, %v1452
          %v1469 = vsub.f32 %v1407, %v1453
          %v1470 = vsub.f32 %v1410, %v1454
          %v1471 = vsub.f32 %v1413, %v1455
          %v1472 = vsub.f32 %v1416, %v1456
          %v1473 = vsub.f32 %v1419, %v1457
          %v1474 = vsub.f32 %v1422, %v1458
          %v1475 = vsub.f32 %v1425, %v1459
          %v1476 = vsub.f32 %v1428, %v1460
          %v1477 = vmul.f32 %v1461, 0.00390625
          %v1478 = vmul.f32 %v1462, 0.00390625
          %v1479 = vmul.f32 %v1463, 0.00390625
          %v1480 = vmul.f32 %v1464, 0.00390625
          %v1481 = vmul.f32 %v1465, 0.00390625
          %v1482 = vmul.f32 %v1466, 0.00390625
          %v1483 = vmul.f32 %v1467, 0.00390625
          %v1484 = vmul.f32 %v1468, 0.00390625
          %v1485 = vmul.f32 %v1469, 0.00390625
          %v1486 = vmul.f32 %v1470, 0.00390625
          %v1487 = vmul.f32 %v1471, 0.00390625
          %v1488 = vmul.f32 %v1472, 0.00390625
          %v1489 = vmul.f32 %v1473, 0.00390625
          %v1490 = vmul.f32 %v1474, 0.00390625
          %v1491 = vmul.f32 %v1475, 0.00390625
          %v1492 = vmul.f32 %v1476, 0.00390625
          %v1493 = vmax.f32 %v1477, 0.0
          %v1494 = vmax.f32 %v1478, 0.0
          %v1495 = vmax.f32 %v1479, 0.0
          %v1496 = vmax.f32 %v1480, 0.0
          %v1497 = vmax.f32 %v1481, 0.0
          %v1498 = vmax.f32 %v1482, 0.0
          %v1499 = vmax.f32 %v1483, 0.0
          %v1500 = vmax.f32 %v1484, 0.0
          %v1501 = vmax.f32 %v1485, 0.0
          %v1502 = vmax.f32 %v1486, 0.0
          %v1503 = vmax.f32 %v1487, 0.0
          %v1504 = vmax.f32 %v1488, 0.0
          %v1505 = vmax.f32 %v1489, 0.0
          %v1506 = vmax.f32 %v1490, 0.0
          %v1507 = vmax.f32 %v1491, 0.0
          %v1508 = vmax.f32 %v1492, 0.0
          %v1509 = vadd.f32 %v1493, 1e-05
          %v1510 = vadd.f32 %v1494, 1e-05
          %v1511 = vadd.f32 %v1495, 1e-05
          %v1512 = vadd.f32 %v1496, 1e-05
          %v1513 = vadd.f32 %v1497, 1e-05
          %v1514 = vadd.f32 %v1498, 1e-05
          %v1515 = vadd.f32 %v1499, 1e-05
          %v1516 = vadd.f32 %v1500, 1e-05
          %v1517 = vadd.f32 %v1501, 1e-05
          %v1518 = vadd.f32 %v1502, 1e-05
          %v1519 = vadd.f32 %v1503, 1e-05
          %v1520 = vadd.f32 %v1504, 1e-05
          %v1521 = vadd.f32 %v1505, 1e-05
          %v1522 = vadd.f32 %v1506, 1e-05
          %v1523 = vadd.f32 %v1507, 1e-05
          %v1524 = vadd.f32 %v1508, 1e-05
          %v1525 = vrsqrt.pop %v1509
          %v1526 = vrsqrt.pop %v1510
          %v1527 = vrsqrt.pop %v1511
          %v1528 = vrsqrt.pop %v1512
          %v1529 = vrsqrt.pop %v1513
          %v1530 = vrsqrt.pop %v1514
          %v1531 = vrsqrt.pop %v1515
          %v1532 = vrsqrt.pop %v1516
          %v1533 = vrsqrt.pop %v1517
          %v1534 = vrsqrt.pop %v1518
          %v1535 = vrsqrt.pop %v1519
          %v1536 = vrsqrt.pop %v1520
          %v1537 = vrsqrt.pop %v1521
          %v1538 = vrsqrt.pop %v1522
          %v1539 = vrsqrt.pop %v1523
          %v1540 = vrsqrt.pop %v1524
          %v1541 = vmul.f32 %v1317, %v1525
          %v1542 = vmul.f32 %v1318, %v1525
          %v1543 = vmul.f32 %v1319, %v1526
          %v1544 = vmul.f32 %v1320, %v1526
          %v1545 = vmul.f32 %v1321, %v1527
          %v1546 = vmul.f32 %v1322, %v1527
          %v1547 = vmul.f32 %v1323, %v1528
          %v1548 = vmul.f32 %v1324, %v1528
          %v1549 = vmul.f32 %v1325, %v1529
          %v1550 = vmul.f32 %v1326, %v1529
          %v1551 = vmul.f32 %v1327, %v1530
          %v1552 = vmul.f32 %v1328, %v1530
          %v1553 = vmul.f32 %v1329, %v1531
          %v1554 = vmul.f32 %v1330, %v1531
          %v1555 = vmul.f32 %v1331, %v1532
          %v1556 = vmul.f32 %v1332, %v1532
          %v1557 = vmul.f32 %v1333, %v1533
          %v1558 = vmul.f32 %v1334, %v1533
          %v1559 = vmul.f32 %v1335, %v1534
          %v1560 = vmul.f32 %v1336, %v1534
          %v1561 = vmul.f32 %v1337, %v1535
          %v1562 = vmul.f32 %v1338, %v1535
          %v1563 = vmul.f32 %v1339, %v1536
          %v1564 = vmul.f32 %v1340, %v1536
          %v1565 = vmul.f32 %v1341, %v1537
          %v1566 = vmul.f32 %v1342, %v1537
          %v1567 = vmul.f32 %v1343, %v1538
          %v1568 = vmul.f32 %v1344, %v1538
          %v1569 = vmul.f32 %v1345, %v1539
          %v1570 = vmul.f32 %v1346, %v1539
          %v1571 = vmul.f32 %v1347, %v1540
          %v1572 = vmul.f32 %v1348, %v1540
          %v1573 = vld [vmem:[%s3] sm:$0x3]
          %v1575 = vlaneseq
          %v1576 = vshrl.u32 %v1575, 7
          %v1577 = vsub.s32 0, %v1576
          %v1578 = vrot.slane %v1573, %v1577
          %v1579 = vlaneseq
          %v1580 = vshrl.u32 %v1579, 7
          %v1581 = vsub.s32 1, %v1580
          %v1582 = vrot.slane %v1573, %v1581
          %v1585 = vmul.f32 %v1541, %v1578
          %v1586 = vmul.f32 %v1542, %v1582
          %v1587 = vmul.f32 %v1543, %v1578
          %v1588 = vmul.f32 %v1544, %v1582
          %v1589 = vmul.f32 %v1545, %v1578
          %v1590 = vmul.f32 %v1546, %v1582
          %v1591 = vmul.f32 %v1547, %v1578
          %v1592 = vmul.f32 %v1548, %v1582
          %v1593 = vmul.f32 %v1549, %v1578
          %v1594 = vmul.f32 %v1550, %v1582
          %v1595 = vmul.f32 %v1551, %v1578
          %v1596 = vmul.f32 %v1552, %v1582
          %v1597 = vmul.f32 %v1553, %v1578
          %v1598 = vmul.f32 %v1554, %v1582
          %v1599 = vmul.f32 %v1555, %v1578
          %v1600 = vmul.f32 %v1556, %v1582
          %v1601 = vmul.f32 %v1557, %v1578
          %v1602 = vmul.f32 %v1558, %v1582
          %v1603 = vmul.f32 %v1559, %v1578
          %v1604 = vmul.f32 %v1560, %v1582
          %v1605 = vmul.f32 %v1561, %v1578
          %v1606 = vmul.f32 %v1562, %v1582
          %v1607 = vmul.f32 %v1563, %v1578
          %v1608 = vmul.f32 %v1564, %v1582
          %v1609 = vmul.f32 %v1565, %v1578
          %v1610 = vmul.f32 %v1566, %v1582
          %v1611 = vmul.f32 %v1567, %v1578
          %v1612 = vmul.f32 %v1568, %v1582
          %v1613 = vmul.f32 %v1569, %v1578
          %v1614 = vmul.f32 %v1570, %v1582
          %v1615 = vmul.f32 %v1571, %v1578
          %v1616 = vmul.f32 %v1572, %v1582
          %v1617 = vld [vmem:[%s4] sm:$0x3]
          %v1619 = vlaneseq
          %v1620 = vshrl.u32 %v1619, 7
          %v1621 = vsub.s32 0, %v1620
          %v1622 = vrot.slane %v1617, %v1621
          %v1623 = vlaneseq
          %v1624 = vshrl.u32 %v1623, 7
          %v1625 = vsub.s32 1, %v1624
          %v1626 = vrot.slane %v1617, %v1625
          %v1629 = vadd.f32 %v1585, %v1622
          %v1630 = vadd.f32 %v1586, %v1626
          %v1631 = vadd.f32 %v1587, %v1622
          %v1632 = vadd.f32 %v1588, %v1626
          %v1633 = vadd.f32 %v1589, %v1622
          %v1634 = vadd.f32 %v1590, %v1626
          %v1635 = vadd.f32 %v1591, %v1622
          %v1636 = vadd.f32 %v1592, %v1626
          %v1637 = vadd.f32 %v1593, %v1622
          %v1638 = vadd.f32 %v1594, %v1626
          %v1639 = vadd.f32 %v1595, %v1622
          %v1640 = vadd.f32 %v1596, %v1626
          %v1641 = vadd.f32 %v1597, %v1622
          %v1642 = vadd.f32 %v1598, %v1626
          %v1643 = vadd.f32 %v1599, %v1622
          %v1644 = vadd.f32 %v1600, %v1626
          %v1645 = vadd.f32 %v1601, %v1622
          %v1646 = vadd.f32 %v1602, %v1626
          %v1647 = vadd.f32 %v1603, %v1622
          %v1648 = vadd.f32 %v1604, %v1626
          %v1649 = vadd.f32 %v1605, %v1622
          %v1650 = vadd.f32 %v1606, %v1626
          %v1651 = vadd.f32 %v1607, %v1622
          %v1652 = vadd.f32 %v1608, %v1626
          %v1653 = vadd.f32 %v1609, %v1622
          %v1654 = vadd.f32 %v1610, %v1626
          %v1655 = vadd.f32 %v1611, %v1622
          %v1656 = vadd.f32 %v1612, %v1626
          %v1657 = vadd.f32 %v1613, %v1622
          %v1658 = vadd.f32 %v1614, %v1626
          %v1659 = vadd.f32 %v1615, %v1622
          %v1660 = vadd.f32 %v1616, %v1626
          %v1661 = vpack.c.bf16 %v1631, %v1629
          %v1662 = vpack.c.bf16 %v1632, %v1630
          %v1663 = vpack.c.bf16 %v1635, %v1633
          %v1664 = vpack.c.bf16 %v1636, %v1634
          %v1665 = vpack.c.bf16 %v1639, %v1637
          %v1666 = vpack.c.bf16 %v1640, %v1638
          %v1667 = vpack.c.bf16 %v1643, %v1641
          %v1668 = vpack.c.bf16 %v1644, %v1642
          %v1669 = vpack.c.bf16 %v1647, %v1645
          %v1670 = vpack.c.bf16 %v1648, %v1646
          %v1671 = vpack.c.bf16 %v1651, %v1649
          %v1672 = vpack.c.bf16 %v1652, %v1650
          %v1673 = vpack.c.bf16 %v1655, %v1653
          %v1674 = vpack.c.bf16 %v1656, %v1654
          %v1675 = vpack.c.bf16 %v1659, %v1657
          %v1676 = vpack.c.bf16 %v1660, %v1658
          %v1693 = vunpack.c.l.b16 %v1661
          %v1694 = vunpack.c.l.b16 %v1662
          %v1695 = vunpack.c.h.b16 %v1661
          %v1696 = vunpack.c.h.b16 %v1662
          %v1697 = vunpack.c.l.b16 %v1663
          %v1698 = vunpack.c.l.b16 %v1664
          %v1699 = vunpack.c.h.b16 %v1663
          %v1700 = vunpack.c.h.b16 %v1664
          %v1701 = vunpack.c.l.b16 %v1665
          %v1702 = vunpack.c.l.b16 %v1666
          %v1703 = vunpack.c.h.b16 %v1665
          %v1704 = vunpack.c.h.b16 %v1666
          %v1705 = vunpack.c.l.b16 %v1667
          %v1706 = vunpack.c.l.b16 %v1668
          %v1707 = vunpack.c.h.b16 %v1667
          %v1708 = vunpack.c.h.b16 %v1668
          %v1709 = vunpack.c.l.b16 %v1669
          %v1710 = vunpack.c.l.b16 %v1670
          %v1711 = vunpack.c.h.b16 %v1669
          %v1712 = vunpack.c.h.b16 %v1670
          %v1713 = vunpack.c.l.b16 %v1671
          %v1714 = vunpack.c.l.b16 %v1672
          %v1715 = vunpack.c.h.b16 %v1671
          %v1716 = vunpack.c.h.b16 %v1672
          %v1717 = vunpack.c.l.b16 %v1673
          %v1718 = vunpack.c.l.b16 %v1674
          %v1719 = vunpack.c.h.b16 %v1673
          %v1720 = vunpack.c.h.b16 %v1674
          %v1721 = vunpack.c.l.b16 %v1675
          %v1722 = vunpack.c.l.b16 %v1676
          %v1723 = vunpack.c.h.b16 %v1675
          %v1724 = vunpack.c.h.b16 %v1676
          %v1725 = vpack.c.b16 %v1694, %v1693
          %v1726 = vpack.c.b16 %v1696, %v1695
          %v1727 = vpack.c.b16 %v1698, %v1697
          %v1728 = vpack.c.b16 %v1700, %v1699
          %v1729 = vpack.c.b16 %v1702, %v1701
          %v1730 = vpack.c.b16 %v1704, %v1703
          %v1731 = vpack.c.b16 %v1706, %v1705
          %v1732 = vpack.c.b16 %v1708, %v1707
          %v1733 = vpack.c.b16 %v1710, %v1709
          %v1734 = vpack.c.b16 %v1712, %v1711
          %v1735 = vpack.c.b16 %v1714, %v1713
          %v1736 = vpack.c.b16 %v1716, %v1715
          %v1737 = vpack.c.b16 %v1718, %v1717
          %v1738 = vpack.c.b16 %v1720, %v1719
          %v1739 = vpack.c.b16 %v1722, %v1721
          %v1740 = vpack.c.b16 %v1724, %v1723
          %1757 = vst [vmem:[%s295] sm:$0xff] %v1725
          %1758 = vst [vmem:[%s295 + $0x8] sm:$0xff] %v1726
          %1759 = vst [vmem:[%s295 + $0x10] sm:$0xff] %v1727
          %1760 = vst [vmem:[%s295 + $0x18] sm:$0xff] %v1728
          %1761 = vst [vmem:[%s295 + $0x20] sm:$0xff] %v1729
          %1762 = vst [vmem:[%s295 + $0x28] sm:$0xff] %v1730
          %1763 = vst [vmem:[%s295 + $0x30] sm:$0xff] %v1731
          %1764 = vst [vmem:[%s295 + $0x38] sm:$0xff] %v1732
          %1765 = vst [vmem:[%s295 + $0x40] sm:$0xff] %v1733
          %1766 = vst [vmem:[%s295 + $0x48] sm:$0xff] %v1734
          %1767 = vst [vmem:[%s295 + $0x50] sm:$0xff] %v1735
          %1768 = vst [vmem:[%s295 + $0x58] sm:$0xff] %v1736
          %1769 = vst [vmem:[%s295 + $0x60] sm:$0xff] %v1737
          %1770 = vst [vmem:[%s295 + $0x68] sm:$0xff] %v1738
          %1771 = vst [vmem:[%s295 + $0x70] sm:$0xff] %v1739
          %1772 = vst [vmem:[%s295 + $0x78] sm:$0xff] %v1740
        $region60: #{tpu_custom_call.1} parent=39 // pred_fallthru
          _
        %s1773 = sand.u32 %s160, 1
        %s1774 = scalar_lea.sflag [#allocation5], %s1773
        %s1775 = sand.u32 %s160, 1
        %s1776 = smul.addr %s1775, 128
        %s1777 = scalar_lea.vmem [#allocation9], %s1776
        // Predicated region
        $region61: #{tpu_custom_call.1} parent=39 // pred_check
          %p1778 = pneg %p170
        $region62: #{tpu_custom_call.1} parent=39 // pred_check_branch
          %1780 = sbr.rel (%p1778) target = $region64
        $region63: #{tpu_custom_call.1} parent=39 // pred_region
          %s1781 = smul.u32 16, %s27
          %s1783 = ssub.s32 2048, 2048
          %1784 = vsyncadd %s1774, %s1783
          %s1785 = smul.addr %s1781, 2
          %s1786 = smul.addr %s1785, 64
          %s1787 = scalar_lea.hbm %s5, %s1786
          %s1788 = sshll.u32 %s1777, 4
          %s1789 = int_to_ptr.vmem [resolvable:$true] %s1788
          %1794 = dma.vmem_to_hbm [thread:$0]  %s1789, 2048, %s1787, %s1774, 128, 128, 8
        $region64: #{tpu_custom_call.1} parent=39 // pred_fallthru
          _
      $region40: #{tpu_custom_call.1} parent=5 // pred_fallthru
        _
      %p1795 = scmp.le.s32.totalorder 2, %s18
      // Predicated region
      $region65: #{tpu_custom_call.1} parent=5 // pred_check
        %p1796 = pneg %p1795
      $region66: #{tpu_custom_call.1} parent=5 // pred_check_branch
        %1798 = sbr.rel (%p1796) target = $region68
      $region67: #{tpu_custom_call.1} parent=5 // pred_region
        %s1799 = ssub.s32 %s18, 2
        // Predicated region
        $region69: #{tpu_custom_call.1} parent=67 // pred_check
          %p1800 = pneg %p176
        $region70: #{tpu_custom_call.1} parent=67 // pred_check_branch
          %1802 = sbr.rel (%p1800) target = $region72
        $region71: #{tpu_custom_call.1} parent=67 // pred_region
          %s1803 = sand.u32 %s161, 1
          %s1804 = scalar_lea.sflag [#allocation5], %s1803
          %s1805 = sand.u32 %s161, 1
          %s1806 = smul.addr %s1805, 128
          %s1807 = scalar_lea.vmem [#allocation9], %s1806
          %1808 = dma.done %s1804, 2048
        $region72: #{tpu_custom_call.1} parent=67 // pred_fallthru
          _
      $region68: #{tpu_custom_call.1} parent=5 // pred_fallthru
        _
    $region6: #{tpu_custom_call.1} parent=1 // loop_footer
      %s22 = sadd.s32 1, %s18
    $region7: #{tpu_custom_call.1} parent=1 // loop_footer_branch
      %17 = sbr.rel target = $region3
    $region8: #{tpu_custom_call.1} parent=1 // loop_exit
      _
    %1809 = vsyncpa [#allocation4], 1
    %s1810 = scalar_lea.sflag [#allocation4], 1
    %1811 = vsyncpa %s1810, 1
    %1812 = vsyncpa [#allocation7], 1
    %1813 = vsyncpa [#allocation5], 1
    %s1814 = scalar_lea.sflag [#allocation5], 1
    %1815 = vsyncpa %s1814, 1

</llo_original>
